<compile_context>
chip_gen: v5e
topology: v5e:2x2
jax: 0.10.0
libtpu: 0.0.40
codegen_flags: <defaults>
</compile_context>

<pallas_src>
import functools

import jax
import jax.numpy as jnp
from jax.experimental import pallas as pl
from jax.experimental.pallas import tpu as pltpu

_MATMUL_DTYPE = jnp.bfloat16   # MXU-native operand dtype; accumulate in f32.
_LN_EPS = 1e-5                 # torch.nn.LayerNorm default.

# Parameter leaves that feed the MXU -> persistently pre-cast to bf16.
_MATMUL_WEIGHT_KEYS = frozenset({
    "emb_w", "fc_w",
    "enc_wqkv", "enc_wo", "enc_w1", "enc_w2",
    "dec_wqkv", "dec_wo_sa", "dec_wq", "dec_wkv", "dec_wo_ca",
    "dec_w1", "dec_w2",
})


def cast_matmul_weights_bf16(params):
    """One-time persistent weight-format change (no-op if already cast)."""
    return {k: (v.astype(_MATMUL_DTYPE) if k in _MATMUL_WEIGHT_KEYS else v)
            for k, v in params.items()}


# ----------------------------------------------------------------------------
# The fused Pallas kernel: one grid step = full forward for ONE batch element.
# ----------------------------------------------------------------------------

def _fwd_kernel(*refs, treedef, n_params, num_heads):
    src_ref, tgt_ref = refs[0], refs[1]
    param_refs = refs[2:2 + n_params]
    out_ref = refs[2 + n_params]
    p = jax.tree_util.tree_unflatten(treedef, param_refs)

    cdt = _MATMUL_DTYPE
    hidden = p["emb_w"].shape[1]
    head_dim = hidden // num_heads
    scale = 1.0 / float(head_dim) ** 0.5
    n_layers = p["enc_wqkv"].shape[0]

    def matmul(x, w):
        # x: f32 activations, w: bf16 (pre-cast) weights; f32 accumulation.
        return jnp.dot(x.astype(cdt), w, preferred_element_type=jnp.float32)

    def layer_norm(x, g, b):
        # f32 VPU math; biased variance, like torch.nn.LayerNorm.
        mean = jnp.mean(x, axis=-1, keepdims=True)
        var = jnp.mean(jnp.square(x - mean), axis=-1, keepdims=True)
        return (x - mean) * jax.lax.rsqrt(var + _LN_EPS) * g + b

    def split_heads(z, base):
        # (T, width) -> (num_heads, T, head_dim); head h takes the contiguous
        # lane slice [base + h*hd, base + (h+1)*hd).  Static slices + concat
        # along a new major axis (no general reshape needed).
        return jnp.concatenate(
            [z[None, :, base + h * head_dim: base + (h + 1) * head_dim]
             for h in range(num_heads)], axis=0)

    def attention(q3, k3, v3):
        # q3: (H, Tq, hd); k3/v3: (H, Tk, hd).  Two head-batched MXU issues.
        s = jnp.einsum("hqd,hkd->hqk", q3.astype(cdt), k3.astype(cdt),
                       preferred_element_type=jnp.float32) * scale
        m = jnp.max(s, axis=-1, keepdims=True)
        e = jnp.exp(s - m)
        denom = jnp.sum(e, axis=-1, keepdims=True)
        pr = e * pl.reciprocal(denom, approx=True)          # EUP, off the VALU
        o3 = jnp.einsum("hqk,hkd->hqd", pr.astype(cdt), v3.astype(cdt),
                        preferred_element_type=jnp.float32)
        # Merge heads back to (Tq, hidden): one lane-concat relayout.
        return jnp.concatenate([o3[h] for h in range(num_heads)], axis=-1)

    def self_attention(x, wqkv, bqkv, wo, bo):
        qkv = matmul(x, wqkv) + bqkv                        # (T, 3*hidden)
        q3 = split_heads(qkv, 0)
        k3 = split_heads(qkv, hidden)
        v3 = split_heads(qkv, 2 * hidden)
        return matmul(attention(q3, k3, v3), wo) + bo

    def cross_attention(x, mem, wq, bq, wkv, bkv, wo, bo):
        q = matmul(x, wq) + bq                              # (T2, hidden)
        kv = matmul(mem, wkv) + bkv                         # (T1, 2*hidden)
        q3 = split_heads(q, 0)
        k3 = split_heads(kv, 0)
        v3 = split_heads(kv, hidden)
        return matmul(attention(q3, k3, v3), wo) + bo

    def ffn(x, w1, b1, w2, b2):
        h = jnp.maximum(matmul(x, w1) + b1, 0.0)            # ReLU
        return matmul(h, w2) + b2

    src = src_ref[...]                                      # (T1, D) f32
    tgt = tgt_ref[...]                                      # (T2, D) f32

    emb_w = p["emb_w"][...]                                 # bf16, loaded once
    emb_b = p["emb_b"][...]
    x = matmul(src, emb_w) + emb_b                          # (T1, hidden)
    y = matmul(tgt, emb_w) + emb_b                          # (T2, hidden)

    # ---- encoder stack (post-norm, no mask; dropout = identity) ----
    for l in range(n_layers):
        ln = p["enc_ln"][l]                                 # (4, hidden)
        x = layer_norm(
            x + self_attention(x, p["enc_wqkv"][l], p["enc_bqkv"][l],
                               p["enc_wo"][l], p["enc_bo"][l]),
            ln[0:1], ln[1:2])
        x = layer_norm(
            x + ffn(x, p["enc_w1"][l], p["enc_b1"][l],
                    p["enc_w2"][l], p["enc_b2"][l]),
            ln[2:3], ln[3:4])

    fln = p["final_ln"][...]                                # (4, hidden)
    memory = layer_norm(x, fln[0:1], fln[1:2])              # final encoder norm

    # ---- decoder stack (post-norm, no mask) ----
    for l in range(n_layers):
        ln = p["dec_ln"][l]                                 # (6, hidden)
        y = layer_norm(
            y + self_attention(y, p["dec_wqkv"][l], p["dec_bqkv"][l],
                               p["dec_wo_sa"][l], p["dec_bo_sa"][l]),
            ln[0:1], ln[1:2])
        y = layer_norm(
            y + cross_attention(y, memory, p["dec_wq"][l], p["dec_bq"][l],
                                p["dec_wkv"][l], p["dec_bkv"][l],
                                p["dec_wo_ca"][l], p["dec_bo_ca"][l]),
            ln[2:3], ln[3:4])
        y = layer_norm(
            y + ffn(y, p["dec_w1"][l], p["dec_b1"][l],
                    p["dec_w2"][l], p["dec_b2"][l]),
            ln[4:5], ln[5:6])
    y = layer_norm(y, fln[2:3], fln[3:4])                   # final decoder norm

    out = matmul(y, p["fc_w"][...]) + p["fc_b"][...]        # (T2, D) f32

    # Lane-dense store: flatten (T2, D) -> (1, T2*D) by lane-concatenating
    # rows (row-major order matches the wrapper's reshape back to (T2,C,H,W)).
    t2 = out.shape[0]
    flat = jnp.concatenate([out[t:t + 1, :] for t in range(t2)], axis=-1)
    out_ref[...] = flat.astype(out_ref.dtype)


# ----------------------------------------------------------------------------
# Wrapper: one pallas_call for the whole model.
# ----------------------------------------------------------------------------

def transformer_forecasting(params, src, tgt, *, num_heads):
    N, T1, C, H, W = src.shape
    _, T2, _, _, _ = tgt.shape
    D = C * H * W

    # No-op if weights were already pre-cast by the caller (persistent format).
    params = cast_matmul_weights_bf16(params)
    leaves, treedef = jax.tree_util.tree_flatten(params)

    src3 = src.reshape(N, T1, D)
    tgt3 = tgt.reshape(N, T2, D)

    kernel = functools.partial(_fwd_kernel, treedef=treedef,
                               n_params=len(leaves), num_heads=num_heads)

    def act_spec(T):
        return pl.BlockSpec((pl.Squeezed(), T, D), lambda n: (n, 0, 0))

    # Full-array weight blocks with constant index maps -> DMA'd once, VMEM
    # resident across all grid steps.
    # TODO(synk): at production sizes (hidden>=512, 6+6 layers) the resident
    # bf16 stacks exceed v7x's 64 MiB VMEM: keep the big stacks in HBM
    # (memory_space=pl.ANY) and stream per layer via pltpu.emit_pipeline /
    # manual double-buffering, use pipeline_mode=pl.Buffered(1) on any
    # still-resident constant-index specs, and set vmem_limit_bytes.
    w_specs = [
        pl.BlockSpec(leaf.shape, lambda n, _nd=leaf.ndim: (0,) * _nd)
        for leaf in leaves
    ]

    out3 = pl.pallas_call(
        kernel,
        out_shape=jax.ShapeDtypeStruct((N, 1, T2 * D), jnp.float32),
        grid_spec=pltpu.PrefetchScalarGridSpec(
            num_scalar_prefetch=0,
            grid=(N,),                              # batch axis only
            in_specs=[act_spec(T1), act_spec(T2)] + w_specs,
            out_specs=pl.BlockSpec((pl.Squeezed(), 1, T2 * D),
                                   lambda n: (n, 0, 0)),
        ),
        compiler_params=pltpu.CompilerParams(
            dimension_semantics=("parallel",)),     # megacore on v7x for N>=2
    )(src3, tgt3, *leaves)

    return out3.reshape(N, T2, C, H, W)


# ----------------------------------------------------------------------------
# Deterministic synthetic parameter init (packed / stacked layout).
# ----------------------------------------------------------------------------

def init_params(key, input_dim, hidden_dim, num_layers, num_heads, ffn_dim):
    del num_heads  # packing is head-agnostic; heads are split in-kernel
    keys = iter(jax.random.split(key, 64))
    h, f, L, D = hidden_dim, ffn_dim, num_layers, input_dim

    def w(shape):
        return jax.random.normal(next(keys), shape, jnp.float32) * 0.02

    def zeros(shape):
        return jnp.zeros(shape, jnp.float32)

    def ln_stack(rows):
        # Rows alternate [gamma, beta, gamma, beta, ...]: gammas=1, betas=0.
        return jnp.zeros((rows, h), jnp.float32).at[0::2].set(1.0)

    return {
        "emb_w": w((D, h)), "emb_b": zeros((1, h)),
        "fc_w": w((h, D)), "fc_b": zeros((1, D)),
        # encoder layer stacks (leading dim = layer index)
        "enc_wqkv": w((L, h, 3 * h)), "enc_bqkv": zeros((L, 1, 3 * h)),
        "enc_wo": w((L, h, h)), "enc_bo": zeros((L, 1, h)),
        "enc_w1": w((L, h, f)), "enc_b1": zeros((L, 1, f)),
        "enc_w2": w((L, f, h)), "enc_b2": zeros((L, 1, h)),
        "enc_ln": jnp.tile(ln_stack(4)[None], (L, 1, 1)),
        # decoder layer stacks
        "dec_wqkv": w((L, h, 3 * h)), "dec_bqkv": zeros((L, 1, 3 * h)),
        "dec_wo_sa": w((L, h, h)), "dec_bo_sa": zeros((L, 1, h)),
        "dec_wq": w((L, h, h)), "dec_bq": zeros((L, 1, h)),
        "dec_wkv": w((L, h, 2 * h)), "dec_bkv": zeros((L, 1, 2 * h)),
        "dec_wo_ca": w((L, h, h)), "dec_bo_ca": zeros((L, 1, h)),
        "dec_w1": w((L, h, f)), "dec_b1": zeros((L, 1, f)),
        "dec_w2": w((L, f, h)), "dec_b2": zeros((L, 1, h)),
        "dec_ln": jnp.tile(ln_stack(6)[None], (L, 1, 1)),
        # final encoder/decoder norms packed: rows [enc_g, enc_b, dec_g, dec_b]
        "final_ln": ln_stack(4),
    }


# ----------------------------------------------------------------------------
if __name__ == "__main__":
    # Small shapes consistent with the module:
    # input_dim = C*H*W, src: (N, T_in, C, H, W), tgt: (N, T_out, C, H, W)
    N, T_in, T_out, C, H, W = 2, 8, 8, 4, 4, 4
    hidden_dim, num_layers, num_heads, ffn_dim = 32, 2, 4, 64
    input_dim = C * H * W

    key = jax.random.PRNGKey(0)
    k_src, k_tgt, k_par = jax.random.split(key, 3)
    src = jax.random.normal(k_src, (N, T_in, C, H, W), jnp.float32)
    tgt = jax.random.normal(k_tgt, (N, T_out, C, H, W), jnp.float32)

    params = init_params(k_par, input_dim, hidden_dim, num_layers, num_heads,
                         ffn_dim)
    # Persistent one-time weight format change (bf16 MXU operands).
    params = cast_matmul_weights_bf16(params)

    fwd = jax.jit(functools.partial(transformer_forecasting,
                                    num_heads=num_heads))
    out = jax.block_until_ready(fwd(params, src, tgt))

    assert out.shape == (N, T_out, C, H, W), out.shape
    assert bool(jnp.all(jnp.isfinite(out)))
    print("KERNEL_OK")
</pallas_src>

<mosaic_0001>
module attributes {stable_mosaic.version = 11 : i64} {
  func.func @_fwd_kernel(%arg0: i32, %arg1: memref<1x8x64xf32, #tpu.memory_space<vmem>>, %arg2: memref<1x8x64xf32, #tpu.memory_space<vmem>>, %arg3: memref<2x1x64xf32, #tpu.memory_space<vmem>>, %arg4: memref<2x1x32xf32, #tpu.memory_space<vmem>>, %arg5: memref<2x1x64xf32, #tpu.memory_space<vmem>>, %arg6: memref<2x1x32xf32, #tpu.memory_space<vmem>>, %arg7: memref<2x1x32xf32, #tpu.memory_space<vmem>>, %arg8: memref<2x1x32xf32, #tpu.memory_space<vmem>>, %arg9: memref<2x1x96xf32, #tpu.memory_space<vmem>>, %arg10: memref<2x6x32xf32, #tpu.memory_space<vmem>>, %arg11: memref<2x32x64xbf16, #tpu.memory_space<vmem>>, %arg12: memref<2x64x32xbf16, #tpu.memory_space<vmem>>, %arg13: memref<2x32x64xbf16, #tpu.memory_space<vmem>>, %arg14: memref<2x32x32xbf16, #tpu.memory_space<vmem>>, %arg15: memref<2x32x32xbf16, #tpu.memory_space<vmem>>, %arg16: memref<2x32x32xbf16, #tpu.memory_space<vmem>>, %arg17: memref<2x32x96xbf16, #tpu.memory_space<vmem>>, %arg18: memref<1x32xf32, #tpu.memory_space<vmem>>, %arg19: memref<64x32xbf16, #tpu.memory_space<vmem>>, %arg20: memref<2x1x64xf32, #tpu.memory_space<vmem>>, %arg21: memref<2x1x32xf32, #tpu.memory_space<vmem>>, %arg22: memref<2x1x32xf32, #tpu.memory_space<vmem>>, %arg23: memref<2x1x96xf32, #tpu.memory_space<vmem>>, %arg24: memref<2x4x32xf32, #tpu.memory_space<vmem>>, %arg25: memref<2x32x64xbf16, #tpu.memory_space<vmem>>, %arg26: memref<2x64x32xbf16, #tpu.memory_space<vmem>>, %arg27: memref<2x32x32xbf16, #tpu.memory_space<vmem>>, %arg28: memref<2x32x96xbf16, #tpu.memory_space<vmem>>, %arg29: memref<1x64xf32, #tpu.memory_space<vmem>>, %arg30: memref<32x64xbf16, #tpu.memory_space<vmem>>, %arg31: memref<4x32xf32, #tpu.memory_space<vmem>>, %arg32: memref<1x1x512xf32, #tpu.memory_space<vmem>>) attributes {dimension_semantics = [#tpu.dimension_semantics<parallel>], iteration_bounds = array<i64: 2>, scalar_prefetch = 0 : i64, scratch_operands = 0 : i64, tpu.core_type = #tpu.core_type<tc>, window_params = [{transform_indices = @transform_0, window_bounds = array<i64: 1, 8, 64>}, {transform_indices = @transform_1, window_bounds = array<i64: 1, 8, 64>}, {pipeline_mode = #tpu.pipeline_mode<synchronous>, transform_indices = @transform_2, window_bounds = array<i64: 2, 1, 64>}, {pipeline_mode = #tpu.pipeline_mode<synchronous>, transform_indices = @transform_3, window_bounds = array<i64: 2, 1, 32>}, {pipeline_mode = #tpu.pipeline_mode<synchronous>, transform_indices = @transform_4, window_bounds = array<i64: 2, 1, 64>}, {pipeline_mode = #tpu.pipeline_mode<synchronous>, transform_indices = @transform_5, window_bounds = array<i64: 2, 1, 32>}, {pipeline_mode = #tpu.pipeline_mode<synchronous>, transform_indices = @transform_6, window_bounds = array<i64: 2, 1, 32>}, {pipeline_mode = #tpu.pipeline_mode<synchronous>, transform_indices = @transform_7, window_bounds = array<i64: 2, 1, 32>}, {pipeline_mode = #tpu.pipeline_mode<synchronous>, transform_indices = @transform_8, window_bounds = array<i64: 2, 1, 96>}, {pipeline_mode = #tpu.pipeline_mode<synchronous>, transform_indices = @transform_9, window_bounds = array<i64: 2, 6, 32>}, {pipeline_mode = #tpu.pipeline_mode<synchronous>, transform_indices = @transform_10, window_bounds = array<i64: 2, 32, 64>}, {pipeline_mode = #tpu.pipeline_mode<synchronous>, transform_indices = @transform_11, window_bounds = array<i64: 2, 64, 32>}, {pipeline_mode = #tpu.pipeline_mode<synchronous>, transform_indices = @transform_12, window_bounds = array<i64: 2, 32, 64>}, {pipeline_mode = #tpu.pipeline_mode<synchronous>, transform_indices = @transform_13, window_bounds = array<i64: 2, 32, 32>}, {pipeline_mode = #tpu.pipeline_mode<synchronous>, transform_indices = @transform_14, window_bounds = array<i64: 2, 32, 32>}, {pipeline_mode = #tpu.pipeline_mode<synchronous>, transform_indices = @transform_15, window_bounds = array<i64: 2, 32, 32>}, {pipeline_mode = #tpu.pipeline_mode<synchronous>, transform_indices = @transform_16, window_bounds = array<i64: 2, 32, 96>}, {pipeline_mode = #tpu.pipeline_mode<synchronous>, transform_indices = @transform_17, window_bounds = array<i64: 1, 32>}, {pipeline_mode = #tpu.pipeline_mode<synchronous>, transform_indices = @transform_18, window_bounds = array<i64: 64, 32>}, {pipeline_mode = #tpu.pipeline_mode<synchronous>, transform_indices = @transform_19, window_bounds = array<i64: 2, 1, 64>}, {pipeline_mode = #tpu.pipeline_mode<synchronous>, transform_indices = @transform_20, window_bounds = array<i64: 2, 1, 32>}, {pipeline_mode = #tpu.pipeline_mode<synchronous>, transform_indices = @transform_21, window_bounds = array<i64: 2, 1, 32>}, {pipeline_mode = #tpu.pipeline_mode<synchronous>, transform_indices = @transform_22, window_bounds = array<i64: 2, 1, 96>}, {pipeline_mode = #tpu.pipeline_mode<synchronous>, transform_indices = @transform_23, window_bounds = array<i64: 2, 4, 32>}, {pipeline_mode = #tpu.pipeline_mode<synchronous>, transform_indices = @transform_24, window_bounds = array<i64: 2, 32, 64>}, {pipeline_mode = #tpu.pipeline_mode<synchronous>, transform_indices = @transform_25, window_bounds = array<i64: 2, 64, 32>}, {pipeline_mode = #tpu.pipeline_mode<synchronous>, transform_indices = @transform_26, window_bounds = array<i64: 2, 32, 32>}, {pipeline_mode = #tpu.pipeline_mode<synchronous>, transform_indices = @transform_27, window_bounds = array<i64: 2, 32, 96>}, {pipeline_mode = #tpu.pipeline_mode<synchronous>, transform_indices = @transform_28, window_bounds = array<i64: 1, 64>}, {pipeline_mode = #tpu.pipeline_mode<synchronous>, transform_indices = @transform_29, window_bounds = array<i64: 32, 64>}, {pipeline_mode = #tpu.pipeline_mode<synchronous>, transform_indices = @transform_30, window_bounds = array<i64: 4, 32>}, {transform_indices = @transform_31, window_bounds = array<i64: 1, 1, 512>}]} {
    %c0 = arith.constant 0 : index
    %c0_0 = arith.constant 0 : index
    %c0_1 = arith.constant 0 : index
    %0 = vector.load %arg1[%c0, %c0_0, %c0_1] : memref<1x8x64xf32, #tpu.memory_space<vmem>>, vector<1x8x64xf32>
    %1 = vector.shape_cast %0 : vector<1x8x64xf32> to vector<8x64xf32>
    %c0_2 = arith.constant 0 : index
    %c0_3 = arith.constant 0 : index
    %c0_4 = arith.constant 0 : index
    %2 = vector.load %arg2[%c0_2, %c0_3, %c0_4] : memref<1x8x64xf32, #tpu.memory_space<vmem>>, vector<1x8x64xf32>
    %3 = vector.shape_cast %2 : vector<1x8x64xf32> to vector<8x64xf32>
    %c0_5 = arith.constant 0 : index
    %c0_6 = arith.constant 0 : index
    %4 = vector.load %arg19[%c0_5, %c0_6] : memref<64x32xbf16, #tpu.memory_space<vmem>>, vector<64x32xbf16>
    %c0_7 = arith.constant 0 : index
    %c0_8 = arith.constant 0 : index
    %5 = vector.load %arg18[%c0_7, %c0_8] : memref<1x32xf32, #tpu.memory_space<vmem>>, vector<1x32xf32>
    %6 = arith.truncf %1 : vector<8x64xf32> to vector<8x64xbf16>
    %cst = arith.constant dense<0.000000e+00> : vector<8x32xf32>
    %7 = tpu.matmul %6, %4, %cst {dimension_numbers = #tpu.dot_dimension_numbers<[1], [0], [0], [1], [0, 0, 1, 1], [], []>} : vector<8x64xbf16>, vector<64x32xbf16>, vector<8x32xf32> -> vector<8x32xf32>
    %8 = vector.broadcast %5 : vector<1x32xf32> to vector<8x32xf32>
    %9 = arith.addf %7, %8 : vector<8x32xf32>
    %10 = arith.truncf %3 : vector<8x64xf32> to vector<8x64xbf16>
    %cst_9 = arith.constant dense<0.000000e+00> : vector<8x32xf32>
    %11 = tpu.matmul %10, %4, %cst_9 {dimension_numbers = #tpu.dot_dimension_numbers<[1], [0], [0], [1], [0, 0, 1, 1], [], []>} : vector<8x64xbf16>, vector<64x32xbf16>, vector<8x32xf32> -> vector<8x32xf32>
    %12 = vector.broadcast %5 : vector<1x32xf32> to vector<8x32xf32>
    %13 = arith.addf %11, %12 : vector<8x32xf32>
    %c0_10 = arith.constant 0 : index
    %c0_11 = arith.constant 0 : index
    %c0_12 = arith.constant 0 : index
    %14 = vector.load %arg24[%c0_10, %c0_11, %c0_12] : memref<2x4x32xf32, #tpu.memory_space<vmem>>, vector<1x4x32xf32>
    %15 = vector.shape_cast %14 : vector<1x4x32xf32> to vector<4x32xf32>
    %c0_13 = arith.constant 0 : index
    %c0_14 = arith.constant 0 : index
    %c0_15 = arith.constant 0 : index
    %16 = vector.load %arg28[%c0_13, %c0_14, %c0_15] : memref<2x32x96xbf16, #tpu.memory_space<vmem>>, vector<1x32x96xbf16>
    %17 = vector.shape_cast %16 : vector<1x32x96xbf16> to vector<32x96xbf16>
    %c0_16 = arith.constant 0 : index
    %c0_17 = arith.constant 0 : index
    %c0_18 = arith.constant 0 : index
    %18 = vector.load %arg23[%c0_16, %c0_17, %c0_18] : memref<2x1x96xf32, #tpu.memory_space<vmem>>, vector<1x1x96xf32>
    %19 = vector.shape_cast %18 : vector<1x1x96xf32> to vector<1x96xf32>
    %c0_19 = arith.constant 0 : index
    %c0_20 = arith.constant 0 : index
    %c0_21 = arith.constant 0 : index
    %20 = vector.load %arg27[%c0_19, %c0_20, %c0_21] : memref<2x32x32xbf16, #tpu.memory_space<vmem>>, vector<1x32x32xbf16>
    %21 = vector.shape_cast %20 : vector<1x32x32xbf16> to vector<32x32xbf16>
    %c0_22 = arith.constant 0 : index
    %c0_23 = arith.constant 0 : index
    %c0_24 = arith.constant 0 : index
    %22 = vector.load %arg22[%c0_22, %c0_23, %c0_24] : memref<2x1x32xf32, #tpu.memory_space<vmem>>, vector<1x1x32xf32>
    %23 = vector.shape_cast %22 : vector<1x1x32xf32> to vector<1x32xf32>
    %24 = arith.truncf %9 : vector<8x32xf32> to vector<8x32xbf16>
    %cst_25 = arith.constant dense<0.000000e+00> : vector<8x96xf32>
    %25 = tpu.matmul %24, %17, %cst_25 {dimension_numbers = #tpu.dot_dimension_numbers<[1], [0], [0], [1], [0, 0, 1, 1], [], []>} : vector<8x32xbf16>, vector<32x96xbf16>, vector<8x96xf32> -> vector<8x96xf32>
    %26 = vector.broadcast %19 : vector<1x96xf32> to vector<8x96xf32>
    %27 = arith.addf %25, %26 : vector<8x96xf32>
    %28 = vector.extract_strided_slice %27 {offsets = [0, 0], sizes = [8, 8], strides = [1, 1]} : vector<8x96xf32> to vector<8x8xf32>
    %29 = vector.shape_cast %28 : vector<8x8xf32> to vector<1x8x8xf32>
    %30 = vector.extract_strided_slice %27 {offsets = [0, 8], sizes = [8, 8], strides = [1, 1]} : vector<8x96xf32> to vector<8x8xf32>
    %31 = vector.shape_cast %30 : vector<8x8xf32> to vector<1x8x8xf32>
    %32 = vector.extract_strided_slice %27 {offsets = [0, 16], sizes = [8, 8], strides = [1, 1]} : vector<8x96xf32> to vector<8x8xf32>
    %33 = vector.shape_cast %32 : vector<8x8xf32> to vector<1x8x8xf32>
    %34 = vector.extract_strided_slice %27 {offsets = [0, 24], sizes = [8, 8], strides = [1, 1]} : vector<8x96xf32> to vector<8x8xf32>
    %35 = vector.shape_cast %34 : vector<8x8xf32> to vector<1x8x8xf32>
    %36 = tpu.concatenate %29, %31, %33, %35 in 0 : vector<1x8x8xf32>, vector<1x8x8xf32>, vector<1x8x8xf32>, vector<1x8x8xf32> -> vector<4x8x8xf32>
    %37 = vector.extract_strided_slice %27 {offsets = [0, 32], sizes = [8, 8], strides = [1, 1]} : vector<8x96xf32> to vector<8x8xf32>
    %38 = vector.shape_cast %37 : vector<8x8xf32> to vector<1x8x8xf32>
    %39 = vector.extract_strided_slice %27 {offsets = [0, 40], sizes = [8, 8], strides = [1, 1]} : vector<8x96xf32> to vector<8x8xf32>
    %40 = vector.shape_cast %39 : vector<8x8xf32> to vector<1x8x8xf32>
    %41 = vector.extract_strided_slice %27 {offsets = [0, 48], sizes = [8, 8], strides = [1, 1]} : vector<8x96xf32> to vector<8x8xf32>
    %42 = vector.shape_cast %41 : vector<8x8xf32> to vector<1x8x8xf32>
    %43 = vector.extract_strided_slice %27 {offsets = [0, 56], sizes = [8, 8], strides = [1, 1]} : vector<8x96xf32> to vector<8x8xf32>
    %44 = vector.shape_cast %43 : vector<8x8xf32> to vector<1x8x8xf32>
    %45 = tpu.concatenate %38, %40, %42, %44 in 0 : vector<1x8x8xf32>, vector<1x8x8xf32>, vector<1x8x8xf32>, vector<1x8x8xf32> -> vector<4x8x8xf32>
    %46 = vector.extract_strided_slice %27 {offsets = [0, 64], sizes = [8, 8], strides = [1, 1]} : vector<8x96xf32> to vector<8x8xf32>
    %47 = vector.shape_cast %46 : vector<8x8xf32> to vector<1x8x8xf32>
    %48 = vector.extract_strided_slice %27 {offsets = [0, 72], sizes = [8, 8], strides = [1, 1]} : vector<8x96xf32> to vector<8x8xf32>
    %49 = vector.shape_cast %48 : vector<8x8xf32> to vector<1x8x8xf32>
    %50 = vector.extract_strided_slice %27 {offsets = [0, 80], sizes = [8, 8], strides = [1, 1]} : vector<8x96xf32> to vector<8x8xf32>
    %51 = vector.shape_cast %50 : vector<8x8xf32> to vector<1x8x8xf32>
    %52 = vector.extract_strided_slice %27 {offsets = [0, 88], sizes = [8, 8], strides = [1, 1]} : vector<8x96xf32> to vector<8x8xf32>
    %53 = vector.shape_cast %52 : vector<8x8xf32> to vector<1x8x8xf32>
    %54 = tpu.concatenate %47, %49, %51, %53 in 0 : vector<1x8x8xf32>, vector<1x8x8xf32>, vector<1x8x8xf32>, vector<1x8x8xf32> -> vector<4x8x8xf32>
    %55 = arith.truncf %36 : vector<4x8x8xf32> to vector<4x8x8xbf16>
    %56 = arith.truncf %45 : vector<4x8x8xf32> to vector<4x8x8xbf16>
    "tpu.trace_start"() <{level = 10 : i32, message = "hqd,hkd->hqk"}> : () -> ()
    %cst_26 = arith.constant dense<0.000000e+00> : vector<4x8x8xf32>
    %57 = tpu.matmul %55, %56, %cst_26 {dimension_numbers = #tpu.dot_dimension_numbers<[2], [2], [1], [1], [0, 0, 0, 1, 1, 1], [0], [0]>} : vector<4x8x8xbf16>, vector<4x8x8xbf16>, vector<4x8x8xf32> -> vector<4x8x8xf32>
    "tpu.trace_stop"() : () -> ()
    %cst_27 = arith.constant 0.353553385 : f32
    %58 = vector.broadcast %cst_27 : f32 to vector<4x8x8xf32>
    %59 = arith.mulf %57, %58 : vector<4x8x8xf32>
    %cst_28 = arith.constant dense<0xFF800000> : vector<4x8xf32>
    %60 = vector.multi_reduction <maximumf>, %59, %cst_28 [2] : vector<4x8x8xf32> to vector<4x8xf32>
    %61 = vector.shape_cast %60 : vector<4x8xf32> to vector<4x8x1xf32>
    %62 = vector.broadcast %61 : vector<4x8x1xf32> to vector<4x8x8xf32>
    %63 = arith.subf %59, %62 : vector<4x8x8xf32>
    %64 = math.exp %63 : vector<4x8x8xf32>
    %cst_29 = arith.constant dense<0.000000e+00> : vector<4x8xf32>
    %65 = vector.multi_reduction <add>, %64, %cst_29 [2] : vector<4x8x8xf32> to vector<4x8xf32>
    %66 = vector.shape_cast %65 : vector<4x8xf32> to vector<4x8x1xf32>
    %67 = tpu.reciprocal %66 {approx = true} : vector<4x8x1xf32> -> vector<4x8x1xf32>
    %68 = vector.broadcast %67 : vector<4x8x1xf32> to vector<4x8x8xf32>
    %69 = arith.mulf %64, %68 : vector<4x8x8xf32>
    %70 = arith.truncf %69 : vector<4x8x8xf32> to vector<4x8x8xbf16>
    %71 = arith.truncf %54 : vector<4x8x8xf32> to vector<4x8x8xbf16>
    "tpu.trace_start"() <{level = 10 : i32, message = "hqk,hkd->hqd"}> : () -> ()
    %cst_30 = arith.constant dense<0.000000e+00> : vector<4x8x8xf32>
    %72 = tpu.matmul %70, %71, %cst_30 {dimension_numbers = #tpu.dot_dimension_numbers<[2], [1], [1], [2], [0, 0, 0, 1, 1, 2], [0], [0]>} : vector<4x8x8xbf16>, vector<4x8x8xbf16>, vector<4x8x8xf32> -> vector<4x8x8xf32>
    "tpu.trace_stop"() : () -> ()
    %73 = vector.extract_strided_slice %72 {offsets = [0, 0, 0], sizes = [1, 8, 8], strides = [1, 1, 1]} : vector<4x8x8xf32> to vector<1x8x8xf32>
    %74 = vector.shape_cast %73 : vector<1x8x8xf32> to vector<8x8xf32>
    %75 = vector.extract_strided_slice %72 {offsets = [1, 0, 0], sizes = [1, 8, 8], strides = [1, 1, 1]} : vector<4x8x8xf32> to vector<1x8x8xf32>
    %76 = vector.shape_cast %75 : vector<1x8x8xf32> to vector<8x8xf32>
    %77 = vector.extract_strided_slice %72 {offsets = [2, 0, 0], sizes = [1, 8, 8], strides = [1, 1, 1]} : vector<4x8x8xf32> to vector<1x8x8xf32>
    %78 = vector.shape_cast %77 : vector<1x8x8xf32> to vector<8x8xf32>
    %79 = vector.extract_strided_slice %72 {offsets = [3, 0, 0], sizes = [1, 8, 8], strides = [1, 1, 1]} : vector<4x8x8xf32> to vector<1x8x8xf32>
    %80 = vector.shape_cast %79 : vector<1x8x8xf32> to vector<8x8xf32>
    %81 = tpu.concatenate %74, %76, %78, %80 in 1 : vector<8x8xf32>, vector<8x8xf32>, vector<8x8xf32>, vector<8x8xf32> -> vector<8x32xf32>
    %82 = arith.truncf %81 : vector<8x32xf32> to vector<8x32xbf16>
    %cst_31 = arith.constant dense<0.000000e+00> : vector<8x32xf32>
    %83 = tpu.matmul %82, %21, %cst_31 {dimension_numbers = #tpu.dot_dimension_numbers<[1], [0], [0], [1], [0, 0, 1, 1], [], []>} : vector<8x32xbf16>, vector<32x32xbf16>, vector<8x32xf32> -> vector<8x32xf32>
    %84 = vector.broadcast %23 : vector<1x32xf32> to vector<8x32xf32>
    %85 = arith.addf %83, %84 : vector<8x32xf32>
    %86 = arith.addf %9, %85 : vector<8x32xf32>
    %87 = vector.extract_strided_slice %15 {offsets = [0, 0], sizes = [1, 32], strides = [1, 1]} : vector<4x32xf32> to vector<1x32xf32>
    %88 = vector.extract_strided_slice %15 {offsets = [1, 0], sizes = [1, 32], strides = [1, 1]} : vector<4x32xf32> to vector<1x32xf32>
    %cst_32 = arith.constant dense<0.000000e+00> : vector<8xf32>
    %89 = vector.multi_reduction <add>, %86, %cst_32 [1] : vector<8x32xf32> to vector<8xf32>
    %90 = vector.shape_cast %89 : vector<8xf32> to vector<8x1xf32>
    %cst_33 = arith.constant 3.200000e+01 : f32
    %91 = vector.broadcast %cst_33 : f32 to vector<8x1xf32>
    %92 = arith.divf %90, %91 : vector<8x1xf32>
    %93 = vector.broadcast %92 : vector<8x1xf32> to vector<8x32xf32>
    %94 = arith.subf %86, %93 : vector<8x32xf32>
    %95 = arith.mulf %94, %94 : vector<8x32xf32>
    %cst_34 = arith.constant dense<0.000000e+00> : vector<8xf32>
    %96 = vector.multi_reduction <add>, %95, %cst_34 [1] : vector<8x32xf32> to vector<8xf32>
    %97 = vector.shape_cast %96 : vector<8xf32> to vector<8x1xf32>
    %cst_35 = arith.constant 3.200000e+01 : f32
    %98 = vector.broadcast %cst_35 : f32 to vector<8x1xf32>
    %99 = arith.divf %97, %98 : vector<8x1xf32>
    %100 = vector.broadcast %92 : vector<8x1xf32> to vector<8x32xf32>
    %101 = arith.subf %86, %100 : vector<8x32xf32>
    %cst_36 = arith.constant 9.99999974E-6 : f32
    %102 = vector.broadcast %cst_36 : f32 to vector<8x1xf32>
    %103 = arith.addf %99, %102 : vector<8x1xf32>
    %104 = math.rsqrt %103 : vector<8x1xf32>
    %105 = vector.broadcast %104 : vector<8x1xf32> to vector<8x32xf32>
    %106 = arith.mulf %101, %105 : vector<8x32xf32>
    %107 = vector.broadcast %87 : vector<1x32xf32> to vector<8x32xf32>
    %108 = arith.mulf %106, %107 : vector<8x32xf32>
    %109 = vector.broadcast %88 : vector<1x32xf32> to vector<8x32xf32>
    %110 = arith.addf %108, %109 : vector<8x32xf32>
    %c0_37 = arith.constant 0 : index
    %c0_38 = arith.constant 0 : index
    %c0_39 = arith.constant 0 : index
    %111 = vector.load %arg25[%c0_37, %c0_38, %c0_39] : memref<2x32x64xbf16, #tpu.memory_space<vmem>>, vector<1x32x64xbf16>
    %112 = vector.shape_cast %111 : vector<1x32x64xbf16> to vector<32x64xbf16>
    %c0_40 = arith.constant 0 : index
    %c0_41 = arith.constant 0 : index
    %c0_42 = arith.constant 0 : index
    %113 = vector.load %arg20[%c0_40, %c0_41, %c0_42] : memref<2x1x64xf32, #tpu.memory_space<vmem>>, vector<1x1x64xf32>
    %114 = vector.shape_cast %113 : vector<1x1x64xf32> to vector<1x64xf32>
    %c0_43 = arith.constant 0 : index
    %c0_44 = arith.constant 0 : index
    %c0_45 = arith.constant 0 : index
    %115 = vector.load %arg26[%c0_43, %c0_44, %c0_45] : memref<2x64x32xbf16, #tpu.memory_space<vmem>>, vector<1x64x32xbf16>
    %116 = vector.shape_cast %115 : vector<1x64x32xbf16> to vector<64x32xbf16>
    %c0_46 = arith.constant 0 : index
    %c0_47 = arith.constant 0 : index
    %c0_48 = arith.constant 0 : index
    %117 = vector.load %arg21[%c0_46, %c0_47, %c0_48] : memref<2x1x32xf32, #tpu.memory_space<vmem>>, vector<1x1x32xf32>
    %118 = vector.shape_cast %117 : vector<1x1x32xf32> to vector<1x32xf32>
    %119 = arith.truncf %110 : vector<8x32xf32> to vector<8x32xbf16>
    %cst_49 = arith.constant dense<0.000000e+00> : vector<8x64xf32>
    %120 = tpu.matmul %119, %112, %cst_49 {dimension_numbers = #tpu.dot_dimension_numbers<[1], [0], [0], [1], [0, 0, 1, 1], [], []>} : vector<8x32xbf16>, vector<32x64xbf16>, vector<8x64xf32> -> vector<8x64xf32>
    %121 = vector.broadcast %114 : vector<1x64xf32> to vector<8x64xf32>
    %122 = arith.addf %120, %121 : vector<8x64xf32>
    %cst_50 = arith.constant 0.000000e+00 : f32
    %123 = vector.broadcast %cst_50 : f32 to vector<8x64xf32>
    %124 = arith.maximumf %122, %123 : vector<8x64xf32>
    %125 = arith.truncf %124 : vector<8x64xf32> to vector<8x64xbf16>
    %cst_51 = arith.constant dense<0.000000e+00> : vector<8x32xf32>
    %126 = tpu.matmul %125, %116, %cst_51 {dimension_numbers = #tpu.dot_dimension_numbers<[1], [0], [0], [1], [0, 0, 1, 1], [], []>} : vector<8x64xbf16>, vector<64x32xbf16>, vector<8x32xf32> -> vector<8x32xf32>
    %127 = vector.broadcast %118 : vector<1x32xf32> to vector<8x32xf32>
    %128 = arith.addf %126, %127 : vector<8x32xf32>
    %129 = arith.addf %110, %128 : vector<8x32xf32>
    %130 = vector.extract_strided_slice %15 {offsets = [2, 0], sizes = [1, 32], strides = [1, 1]} : vector<4x32xf32> to vector<1x32xf32>
    %131 = vector.extract_strided_slice %15 {offsets = [3, 0], sizes = [1, 32], strides = [1, 1]} : vector<4x32xf32> to vector<1x32xf32>
    %cst_52 = arith.constant dense<0.000000e+00> : vector<8xf32>
    %132 = vector.multi_reduction <add>, %129, %cst_52 [1] : vector<8x32xf32> to vector<8xf32>
    %133 = vector.shape_cast %132 : vector<8xf32> to vector<8x1xf32>
    %cst_53 = arith.constant 3.200000e+01 : f32
    %134 = vector.broadcast %cst_53 : f32 to vector<8x1xf32>
    %135 = arith.divf %133, %134 : vector<8x1xf32>
    %136 = vector.broadcast %135 : vector<8x1xf32> to vector<8x32xf32>
    %137 = arith.subf %129, %136 : vector<8x32xf32>
    %138 = arith.mulf %137, %137 : vector<8x32xf32>
    %cst_54 = arith.constant dense<0.000000e+00> : vector<8xf32>
    %139 = vector.multi_reduction <add>, %138, %cst_54 [1] : vector<8x32xf32> to vector<8xf32>
    %140 = vector.shape_cast %139 : vector<8xf32> to vector<8x1xf32>
    %cst_55 = arith.constant 3.200000e+01 : f32
    %141 = vector.broadcast %cst_55 : f32 to vector<8x1xf32>
    %142 = arith.divf %140, %141 : vector<8x1xf32>
    %143 = vector.broadcast %135 : vector<8x1xf32> to vector<8x32xf32>
    %144 = arith.subf %129, %143 : vector<8x32xf32>
    %cst_56 = arith.constant 9.99999974E-6 : f32
    %145 = vector.broadcast %cst_56 : f32 to vector<8x1xf32>
    %146 = arith.addf %142, %145 : vector<8x1xf32>
    %147 = math.rsqrt %146 : vector<8x1xf32>
    %148 = vector.broadcast %147 : vector<8x1xf32> to vector<8x32xf32>
    %149 = arith.mulf %144, %148 : vector<8x32xf32>
    %150 = vector.broadcast %130 : vector<1x32xf32> to vector<8x32xf32>
    %151 = arith.mulf %149, %150 : vector<8x32xf32>
    %152 = vector.broadcast %131 : vector<1x32xf32> to vector<8x32xf32>
    %153 = arith.addf %151, %152 : vector<8x32xf32>
    %c1 = arith.constant 1 : index
    %c0_57 = arith.constant 0 : index
    %c0_58 = arith.constant 0 : index
    %154 = vector.load %arg24[%c1, %c0_57, %c0_58] : memref<2x4x32xf32, #tpu.memory_space<vmem>>, vector<1x4x32xf32>
    %155 = vector.shape_cast %154 : vector<1x4x32xf32> to vector<4x32xf32>
    %c1_59 = arith.constant 1 : index
    %c0_60 = arith.constant 0 : index
    %c0_61 = arith.constant 0 : index
    %156 = vector.load %arg28[%c1_59, %c0_60, %c0_61] : memref<2x32x96xbf16, #tpu.memory_space<vmem>>, vector<1x32x96xbf16>
    %157 = vector.shape_cast %156 : vector<1x32x96xbf16> to vector<32x96xbf16>
    %c1_62 = arith.constant 1 : index
    %c0_63 = arith.constant 0 : index
    %c0_64 = arith.constant 0 : index
    %158 = vector.load %arg23[%c1_62, %c0_63, %c0_64] : memref<2x1x96xf32, #tpu.memory_space<vmem>>, vector<1x1x96xf32>
    %159 = vector.shape_cast %158 : vector<1x1x96xf32> to vector<1x96xf32>
    %c1_65 = arith.constant 1 : index
    %c0_66 = arith.constant 0 : index
    %c0_67 = arith.constant 0 : index
    %160 = vector.load %arg27[%c1_65, %c0_66, %c0_67] : memref<2x32x32xbf16, #tpu.memory_space<vmem>>, vector<1x32x32xbf16>
    %161 = vector.shape_cast %160 : vector<1x32x32xbf16> to vector<32x32xbf16>
    %c1_68 = arith.constant 1 : index
    %c0_69 = arith.constant 0 : index
    %c0_70 = arith.constant 0 : index
    %162 = vector.load %arg22[%c1_68, %c0_69, %c0_70] : memref<2x1x32xf32, #tpu.memory_space<vmem>>, vector<1x1x32xf32>
    %163 = vector.shape_cast %162 : vector<1x1x32xf32> to vector<1x32xf32>
    %164 = arith.truncf %153 : vector<8x32xf32> to vector<8x32xbf16>
    %cst_71 = arith.constant dense<0.000000e+00> : vector<8x96xf32>
    %165 = tpu.matmul %164, %157, %cst_71 {dimension_numbers = #tpu.dot_dimension_numbers<[1], [0], [0], [1], [0, 0, 1, 1], [], []>} : vector<8x32xbf16>, vector<32x96xbf16>, vector<8x96xf32> -> vector<8x96xf32>
    %166 = vector.broadcast %159 : vector<1x96xf32> to vector<8x96xf32>
    %167 = arith.addf %165, %166 : vector<8x96xf32>
    %168 = vector.extract_strided_slice %167 {offsets = [0, 0], sizes = [8, 8], strides = [1, 1]} : vector<8x96xf32> to vector<8x8xf32>
    %169 = vector.shape_cast %168 : vector<8x8xf32> to vector<1x8x8xf32>
    %170 = vector.extract_strided_slice %167 {offsets = [0, 8], sizes = [8, 8], strides = [1, 1]} : vector<8x96xf32> to vector<8x8xf32>
    %171 = vector.shape_cast %170 : vector<8x8xf32> to vector<1x8x8xf32>
    %172 = vector.extract_strided_slice %167 {offsets = [0, 16], sizes = [8, 8], strides = [1, 1]} : vector<8x96xf32> to vector<8x8xf32>
    %173 = vector.shape_cast %172 : vector<8x8xf32> to vector<1x8x8xf32>
    %174 = vector.extract_strided_slice %167 {offsets = [0, 24], sizes = [8, 8], strides = [1, 1]} : vector<8x96xf32> to vector<8x8xf32>
    %175 = vector.shape_cast %174 : vector<8x8xf32> to vector<1x8x8xf32>
    %176 = tpu.concatenate %169, %171, %173, %175 in 0 : vector<1x8x8xf32>, vector<1x8x8xf32>, vector<1x8x8xf32>, vector<1x8x8xf32> -> vector<4x8x8xf32>
    %177 = vector.extract_strided_slice %167 {offsets = [0, 32], sizes = [8, 8], strides = [1, 1]} : vector<8x96xf32> to vector<8x8xf32>
    %178 = vector.shape_cast %177 : vector<8x8xf32> to vector<1x8x8xf32>
    %179 = vector.extract_strided_slice %167 {offsets = [0, 40], sizes = [8, 8], strides = [1, 1]} : vector<8x96xf32> to vector<8x8xf32>
    %180 = vector.shape_cast %179 : vector<8x8xf32> to vector<1x8x8xf32>
    %181 = vector.extract_strided_slice %167 {offsets = [0, 48], sizes = [8, 8], strides = [1, 1]} : vector<8x96xf32> to vector<8x8xf32>
    %182 = vector.shape_cast %181 : vector<8x8xf32> to vector<1x8x8xf32>
    %183 = vector.extract_strided_slice %167 {offsets = [0, 56], sizes = [8, 8], strides = [1, 1]} : vector<8x96xf32> to vector<8x8xf32>
    %184 = vector.shape_cast %183 : vector<8x8xf32> to vector<1x8x8xf32>
    %185 = tpu.concatenate %178, %180, %182, %184 in 0 : vector<1x8x8xf32>, vector<1x8x8xf32>, vector<1x8x8xf32>, vector<1x8x8xf32> -> vector<4x8x8xf32>
    %186 = vector.extract_strided_slice %167 {offsets = [0, 64], sizes = [8, 8], strides = [1, 1]} : vector<8x96xf32> to vector<8x8xf32>
    %187 = vector.shape_cast %186 : vector<8x8xf32> to vector<1x8x8xf32>
    %188 = vector.extract_strided_slice %167 {offsets = [0, 72], sizes = [8, 8], strides = [1, 1]} : vector<8x96xf32> to vector<8x8xf32>
    %189 = vector.shape_cast %188 : vector<8x8xf32> to vector<1x8x8xf32>
    %190 = vector.extract_strided_slice %167 {offsets = [0, 80], sizes = [8, 8], strides = [1, 1]} : vector<8x96xf32> to vector<8x8xf32>
    %191 = vector.shape_cast %190 : vector<8x8xf32> to vector<1x8x8xf32>
    %192 = vector.extract_strided_slice %167 {offsets = [0, 88], sizes = [8, 8], strides = [1, 1]} : vector<8x96xf32> to vector<8x8xf32>
    %193 = vector.shape_cast %192 : vector<8x8xf32> to vector<1x8x8xf32>
    %194 = tpu.concatenate %187, %189, %191, %193 in 0 : vector<1x8x8xf32>, vector<1x8x8xf32>, vector<1x8x8xf32>, vector<1x8x8xf32> -> vector<4x8x8xf32>
    %195 = arith.truncf %176 : vector<4x8x8xf32> to vector<4x8x8xbf16>
    %196 = arith.truncf %185 : vector<4x8x8xf32> to vector<4x8x8xbf16>
    "tpu.trace_start"() <{level = 10 : i32, message = "hqd,hkd->hqk"}> : () -> ()
    %cst_72 = arith.constant dense<0.000000e+00> : vector<4x8x8xf32>
    %197 = tpu.matmul %195, %196, %cst_72 {dimension_numbers = #tpu.dot_dimension_numbers<[2], [2], [1], [1], [0, 0, 0, 1, 1, 1], [0], [0]>} : vector<4x8x8xbf16>, vector<4x8x8xbf16>, vector<4x8x8xf32> -> vector<4x8x8xf32>
    "tpu.trace_stop"() : () -> ()
    %cst_73 = arith.constant 0.353553385 : f32
    %198 = vector.broadcast %cst_73 : f32 to vector<4x8x8xf32>
    %199 = arith.mulf %197, %198 : vector<4x8x8xf32>
    %cst_74 = arith.constant dense<0xFF800000> : vector<4x8xf32>
    %200 = vector.multi_reduction <maximumf>, %199, %cst_74 [2] : vector<4x8x8xf32> to vector<4x8xf32>
    %201 = vector.shape_cast %200 : vector<4x8xf32> to vector<4x8x1xf32>
    %202 = vector.broadcast %201 : vector<4x8x1xf32> to vector<4x8x8xf32>
    %203 = arith.subf %199, %202 : vector<4x8x8xf32>
    %204 = math.exp %203 : vector<4x8x8xf32>
    %cst_75 = arith.constant dense<0.000000e+00> : vector<4x8xf32>
    %205 = vector.multi_reduction <add>, %204, %cst_75 [2] : vector<4x8x8xf32> to vector<4x8xf32>
    %206 = vector.shape_cast %205 : vector<4x8xf32> to vector<4x8x1xf32>
    %207 = tpu.reciprocal %206 {approx = true} : vector<4x8x1xf32> -> vector<4x8x1xf32>
    %208 = vector.broadcast %207 : vector<4x8x1xf32> to vector<4x8x8xf32>
    %209 = arith.mulf %204, %208 : vector<4x8x8xf32>
    %210 = arith.truncf %209 : vector<4x8x8xf32> to vector<4x8x8xbf16>
    %211 = arith.truncf %194 : vector<4x8x8xf32> to vector<4x8x8xbf16>
    "tpu.trace_start"() <{level = 10 : i32, message = "hqk,hkd->hqd"}> : () -> ()
    %cst_76 = arith.constant dense<0.000000e+00> : vector<4x8x8xf32>
    %212 = tpu.matmul %210, %211, %cst_76 {dimension_numbers = #tpu.dot_dimension_numbers<[2], [1], [1], [2], [0, 0, 0, 1, 1, 2], [0], [0]>} : vector<4x8x8xbf16>, vector<4x8x8xbf16>, vector<4x8x8xf32> -> vector<4x8x8xf32>
    "tpu.trace_stop"() : () -> ()
    %213 = vector.extract_strided_slice %212 {offsets = [0, 0, 0], sizes = [1, 8, 8], strides = [1, 1, 1]} : vector<4x8x8xf32> to vector<1x8x8xf32>
    %214 = vector.shape_cast %213 : vector<1x8x8xf32> to vector<8x8xf32>
    %215 = vector.extract_strided_slice %212 {offsets = [1, 0, 0], sizes = [1, 8, 8], strides = [1, 1, 1]} : vector<4x8x8xf32> to vector<1x8x8xf32>
    %216 = vector.shape_cast %215 : vector<1x8x8xf32> to vector<8x8xf32>
    %217 = vector.extract_strided_slice %212 {offsets = [2, 0, 0], sizes = [1, 8, 8], strides = [1, 1, 1]} : vector<4x8x8xf32> to vector<1x8x8xf32>
    %218 = vector.shape_cast %217 : vector<1x8x8xf32> to vector<8x8xf32>
    %219 = vector.extract_strided_slice %212 {offsets = [3, 0, 0], sizes = [1, 8, 8], strides = [1, 1, 1]} : vector<4x8x8xf32> to vector<1x8x8xf32>
    %220 = vector.shape_cast %219 : vector<1x8x8xf32> to vector<8x8xf32>
    %221 = tpu.concatenate %214, %216, %218, %220 in 1 : vector<8x8xf32>, vector<8x8xf32>, vector<8x8xf32>, vector<8x8xf32> -> vector<8x32xf32>
    %222 = arith.truncf %221 : vector<8x32xf32> to vector<8x32xbf16>
    %cst_77 = arith.constant dense<0.000000e+00> : vector<8x32xf32>
    %223 = tpu.matmul %222, %161, %cst_77 {dimension_numbers = #tpu.dot_dimension_numbers<[1], [0], [0], [1], [0, 0, 1, 1], [], []>} : vector<8x32xbf16>, vector<32x32xbf16>, vector<8x32xf32> -> vector<8x32xf32>
    %224 = vector.broadcast %163 : vector<1x32xf32> to vector<8x32xf32>
    %225 = arith.addf %223, %224 : vector<8x32xf32>
    %226 = arith.addf %153, %225 : vector<8x32xf32>
    %227 = vector.extract_strided_slice %155 {offsets = [0, 0], sizes = [1, 32], strides = [1, 1]} : vector<4x32xf32> to vector<1x32xf32>
    %228 = vector.extract_strided_slice %155 {offsets = [1, 0], sizes = [1, 32], strides = [1, 1]} : vector<4x32xf32> to vector<1x32xf32>
    %cst_78 = arith.constant dense<0.000000e+00> : vector<8xf32>
    %229 = vector.multi_reduction <add>, %226, %cst_78 [1] : vector<8x32xf32> to vector<8xf32>
    %230 = vector.shape_cast %229 : vector<8xf32> to vector<8x1xf32>
    %cst_79 = arith.constant 3.200000e+01 : f32
    %231 = vector.broadcast %cst_79 : f32 to vector<8x1xf32>
    %232 = arith.divf %230, %231 : vector<8x1xf32>
    %233 = vector.broadcast %232 : vector<8x1xf32> to vector<8x32xf32>
    %234 = arith.subf %226, %233 : vector<8x32xf32>
    %235 = arith.mulf %234, %234 : vector<8x32xf32>
    %cst_80 = arith.constant dense<0.000000e+00> : vector<8xf32>
    %236 = vector.multi_reduction <add>, %235, %cst_80 [1] : vector<8x32xf32> to vector<8xf32>
    %237 = vector.shape_cast %236 : vector<8xf32> to vector<8x1xf32>
    %cst_81 = arith.constant 3.200000e+01 : f32
    %238 = vector.broadcast %cst_81 : f32 to vector<8x1xf32>
    %239 = arith.divf %237, %238 : vector<8x1xf32>
    %240 = vector.broadcast %232 : vector<8x1xf32> to vector<8x32xf32>
    %241 = arith.subf %226, %240 : vector<8x32xf32>
    %cst_82 = arith.constant 9.99999974E-6 : f32
    %242 = vector.broadcast %cst_82 : f32 to vector<8x1xf32>
    %243 = arith.addf %239, %242 : vector<8x1xf32>
    %244 = math.rsqrt %243 : vector<8x1xf32>
    %245 = vector.broadcast %244 : vector<8x1xf32> to vector<8x32xf32>
    %246 = arith.mulf %241, %245 : vector<8x32xf32>
    %247 = vector.broadcast %227 : vector<1x32xf32> to vector<8x32xf32>
    %248 = arith.mulf %246, %247 : vector<8x32xf32>
    %249 = vector.broadcast %228 : vector<1x32xf32> to vector<8x32xf32>
    %250 = arith.addf %248, %249 : vector<8x32xf32>
    %c1_83 = arith.constant 1 : index
    %c0_84 = arith.constant 0 : index
    %c0_85 = arith.constant 0 : index
    %251 = vector.load %arg25[%c1_83, %c0_84, %c0_85] : memref<2x32x64xbf16, #tpu.memory_space<vmem>>, vector<1x32x64xbf16>
    %252 = vector.shape_cast %251 : vector<1x32x64xbf16> to vector<32x64xbf16>
    %c1_86 = arith.constant 1 : index
    %c0_87 = arith.constant 0 : index
    %c0_88 = arith.constant 0 : index
    %253 = vector.load %arg20[%c1_86, %c0_87, %c0_88] : memref<2x1x64xf32, #tpu.memory_space<vmem>>, vector<1x1x64xf32>
    %254 = vector.shape_cast %253 : vector<1x1x64xf32> to vector<1x64xf32>
    %c1_89 = arith.constant 1 : index
    %c0_90 = arith.constant 0 : index
    %c0_91 = arith.constant 0 : index
    %255 = vector.load %arg26[%c1_89, %c0_90, %c0_91] : memref<2x64x32xbf16, #tpu.memory_space<vmem>>, vector<1x64x32xbf16>
    %256 = vector.shape_cast %255 : vector<1x64x32xbf16> to vector<64x32xbf16>
    %c1_92 = arith.constant 1 : index
    %c0_93 = arith.constant 0 : index
    %c0_94 = arith.constant 0 : index
    %257 = vector.load %arg21[%c1_92, %c0_93, %c0_94] : memref<2x1x32xf32, #tpu.memory_space<vmem>>, vector<1x1x32xf32>
    %258 = vector.shape_cast %257 : vector<1x1x32xf32> to vector<1x32xf32>
    %259 = arith.truncf %250 : vector<8x32xf32> to vector<8x32xbf16>
    %cst_95 = arith.constant dense<0.000000e+00> : vector<8x64xf32>
    %260 = tpu.matmul %259, %252, %cst_95 {dimension_numbers = #tpu.dot_dimension_numbers<[1], [0], [0], [1], [0, 0, 1, 1], [], []>} : vector<8x32xbf16>, vector<32x64xbf16>, vector<8x64xf32> -> vector<8x64xf32>
    %261 = vector.broadcast %254 : vector<1x64xf32> to vector<8x64xf32>
    %262 = arith.addf %260, %261 : vector<8x64xf32>
    %cst_96 = arith.constant 0.000000e+00 : f32
    %263 = vector.broadcast %cst_96 : f32 to vector<8x64xf32>
    %264 = arith.maximumf %262, %263 : vector<8x64xf32>
    %265 = arith.truncf %264 : vector<8x64xf32> to vector<8x64xbf16>
    %cst_97 = arith.constant dense<0.000000e+00> : vector<8x32xf32>
    %266 = tpu.matmul %265, %256, %cst_97 {dimension_numbers = #tpu.dot_dimension_numbers<[1], [0], [0], [1], [0, 0, 1, 1], [], []>} : vector<8x64xbf16>, vector<64x32xbf16>, vector<8x32xf32> -> vector<8x32xf32>
    %267 = vector.broadcast %258 : vector<1x32xf32> to vector<8x32xf32>
    %268 = arith.addf %266, %267 : vector<8x32xf32>
    %269 = arith.addf %250, %268 : vector<8x32xf32>
    %270 = vector.extract_strided_slice %155 {offsets = [2, 0], sizes = [1, 32], strides = [1, 1]} : vector<4x32xf32> to vector<1x32xf32>
    %271 = vector.extract_strided_slice %155 {offsets = [3, 0], sizes = [1, 32], strides = [1, 1]} : vector<4x32xf32> to vector<1x32xf32>
    %cst_98 = arith.constant dense<0.000000e+00> : vector<8xf32>
    %272 = vector.multi_reduction <add>, %269, %cst_98 [1] : vector<8x32xf32> to vector<8xf32>
    %273 = vector.shape_cast %272 : vector<8xf32> to vector<8x1xf32>
    %cst_99 = arith.constant 3.200000e+01 : f32
    %274 = vector.broadcast %cst_99 : f32 to vector<8x1xf32>
    %275 = arith.divf %273, %274 : vector<8x1xf32>
    %276 = vector.broadcast %275 : vector<8x1xf32> to vector<8x32xf32>
    %277 = arith.subf %269, %276 : vector<8x32xf32>
    %278 = arith.mulf %277, %277 : vector<8x32xf32>
    %cst_100 = arith.constant dense<0.000000e+00> : vector<8xf32>
    %279 = vector.multi_reduction <add>, %278, %cst_100 [1] : vector<8x32xf32> to vector<8xf32>
    %280 = vector.shape_cast %279 : vector<8xf32> to vector<8x1xf32>
    %cst_101 = arith.constant 3.200000e+01 : f32
    %281 = vector.broadcast %cst_101 : f32 to vector<8x1xf32>
    %282 = arith.divf %280, %281 : vector<8x1xf32>
    %283 = vector.broadcast %275 : vector<8x1xf32> to vector<8x32xf32>
    %284 = arith.subf %269, %283 : vector<8x32xf32>
    %cst_102 = arith.constant 9.99999974E-6 : f32
    %285 = vector.broadcast %cst_102 : f32 to vector<8x1xf32>
    %286 = arith.addf %282, %285 : vector<8x1xf32>
    %287 = math.rsqrt %286 : vector<8x1xf32>
    %288 = vector.broadcast %287 : vector<8x1xf32> to vector<8x32xf32>
    %289 = arith.mulf %284, %288 : vector<8x32xf32>
    %290 = vector.broadcast %270 : vector<1x32xf32> to vector<8x32xf32>
    %291 = arith.mulf %289, %290 : vector<8x32xf32>
    %292 = vector.broadcast %271 : vector<1x32xf32> to vector<8x32xf32>
    %293 = arith.addf %291, %292 : vector<8x32xf32>
    %c0_103 = arith.constant 0 : index
    %c0_104 = arith.constant 0 : index
    %294 = vector.load %arg31[%c0_103, %c0_104] : memref<4x32xf32, #tpu.memory_space<vmem>>, vector<4x32xf32>
    %295 = vector.extract_strided_slice %294 {offsets = [0, 0], sizes = [1, 32], strides = [1, 1]} : vector<4x32xf32> to vector<1x32xf32>
    %296 = vector.extract_strided_slice %294 {offsets = [1, 0], sizes = [1, 32], strides = [1, 1]} : vector<4x32xf32> to vector<1x32xf32>
    %cst_105 = arith.constant dense<0.000000e+00> : vector<8xf32>
    %297 = vector.multi_reduction <add>, %293, %cst_105 [1] : vector<8x32xf32> to vector<8xf32>
    %298 = vector.shape_cast %297 : vector<8xf32> to vector<8x1xf32>
    %cst_106 = arith.constant 3.200000e+01 : f32
    %299 = vector.broadcast %cst_106 : f32 to vector<8x1xf32>
    %300 = arith.divf %298, %299 : vector<8x1xf32>
    %301 = vector.broadcast %300 : vector<8x1xf32> to vector<8x32xf32>
    %302 = arith.subf %293, %301 : vector<8x32xf32>
    %303 = arith.mulf %302, %302 : vector<8x32xf32>
    %cst_107 = arith.constant dense<0.000000e+00> : vector<8xf32>
    %304 = vector.multi_reduction <add>, %303, %cst_107 [1] : vector<8x32xf32> to vector<8xf32>
    %305 = vector.shape_cast %304 : vector<8xf32> to vector<8x1xf32>
    %cst_108 = arith.constant 3.200000e+01 : f32
    %306 = vector.broadcast %cst_108 : f32 to vector<8x1xf32>
    %307 = arith.divf %305, %306 : vector<8x1xf32>
    %308 = vector.broadcast %300 : vector<8x1xf32> to vector<8x32xf32>
    %309 = arith.subf %293, %308 : vector<8x32xf32>
    %cst_109 = arith.constant 9.99999974E-6 : f32
    %310 = vector.broadcast %cst_109 : f32 to vector<8x1xf32>
    %311 = arith.addf %307, %310 : vector<8x1xf32>
    %312 = math.rsqrt %311 : vector<8x1xf32>
    %313 = vector.broadcast %312 : vector<8x1xf32> to vector<8x32xf32>
    %314 = arith.mulf %309, %313 : vector<8x32xf32>
    %315 = vector.broadcast %295 : vector<1x32xf32> to vector<8x32xf32>
    %316 = arith.mulf %314, %315 : vector<8x32xf32>
    %317 = vector.broadcast %296 : vector<1x32xf32> to vector<8x32xf32>
    %318 = arith.addf %316, %317 : vector<8x32xf32>
    %c0_110 = arith.constant 0 : index
    %c0_111 = arith.constant 0 : index
    %c0_112 = arith.constant 0 : index
    %319 = vector.load %arg10[%c0_110, %c0_111, %c0_112] : memref<2x6x32xf32, #tpu.memory_space<vmem>>, vector<1x6x32xf32>
    %320 = vector.shape_cast %319 : vector<1x6x32xf32> to vector<6x32xf32>
    %c0_113 = arith.constant 0 : index
    %c0_114 = arith.constant 0 : index
    %c0_115 = arith.constant 0 : index
    %321 = vector.load %arg17[%c0_113, %c0_114, %c0_115] : memref<2x32x96xbf16, #tpu.memory_space<vmem>>, vector<1x32x96xbf16>
    %322 = vector.shape_cast %321 : vector<1x32x96xbf16> to vector<32x96xbf16>
    %c0_116 = arith.constant 0 : index
    %c0_117 = arith.constant 0 : index
    %c0_118 = arith.constant 0 : index
    %323 = vector.load %arg9[%c0_116, %c0_117, %c0_118] : memref<2x1x96xf32, #tpu.memory_space<vmem>>, vector<1x1x96xf32>
    %324 = vector.shape_cast %323 : vector<1x1x96xf32> to vector<1x96xf32>
    %c0_119 = arith.constant 0 : index
    %c0_120 = arith.constant 0 : index
    %c0_121 = arith.constant 0 : index
    %325 = vector.load %arg15[%c0_119, %c0_120, %c0_121] : memref<2x32x32xbf16, #tpu.memory_space<vmem>>, vector<1x32x32xbf16>
    %326 = vector.shape_cast %325 : vector<1x32x32xbf16> to vector<32x32xbf16>
    %c0_122 = arith.constant 0 : index
    %c0_123 = arith.constant 0 : index
    %c0_124 = arith.constant 0 : index
    %327 = vector.load %arg7[%c0_122, %c0_123, %c0_124] : memref<2x1x32xf32, #tpu.memory_space<vmem>>, vector<1x1x32xf32>
    %328 = vector.shape_cast %327 : vector<1x1x32xf32> to vector<1x32xf32>
    %329 = arith.truncf %13 : vector<8x32xf32> to vector<8x32xbf16>
    %cst_125 = arith.constant dense<0.000000e+00> : vector<8x96xf32>
    %330 = tpu.matmul %329, %322, %cst_125 {dimension_numbers = #tpu.dot_dimension_numbers<[1], [0], [0], [1], [0, 0, 1, 1], [], []>} : vector<8x32xbf16>, vector<32x96xbf16>, vector<8x96xf32> -> vector<8x96xf32>
    %331 = vector.broadcast %324 : vector<1x96xf32> to vector<8x96xf32>
    %332 = arith.addf %330, %331 : vector<8x96xf32>
    %333 = vector.extract_strided_slice %332 {offsets = [0, 0], sizes = [8, 8], strides = [1, 1]} : vector<8x96xf32> to vector<8x8xf32>
    %334 = vector.shape_cast %333 : vector<8x8xf32> to vector<1x8x8xf32>
    %335 = vector.extract_strided_slice %332 {offsets = [0, 8], sizes = [8, 8], strides = [1, 1]} : vector<8x96xf32> to vector<8x8xf32>
    %336 = vector.shape_cast %335 : vector<8x8xf32> to vector<1x8x8xf32>
    %337 = vector.extract_strided_slice %332 {offsets = [0, 16], sizes = [8, 8], strides = [1, 1]} : vector<8x96xf32> to vector<8x8xf32>
    %338 = vector.shape_cast %337 : vector<8x8xf32> to vector<1x8x8xf32>
    %339 = vector.extract_strided_slice %332 {offsets = [0, 24], sizes = [8, 8], strides = [1, 1]} : vector<8x96xf32> to vector<8x8xf32>
    %340 = vector.shape_cast %339 : vector<8x8xf32> to vector<1x8x8xf32>
    %341 = tpu.concatenate %334, %336, %338, %340 in 0 : vector<1x8x8xf32>, vector<1x8x8xf32>, vector<1x8x8xf32>, vector<1x8x8xf32> -> vector<4x8x8xf32>
    %342 = vector.extract_strided_slice %332 {offsets = [0, 32], sizes = [8, 8], strides = [1, 1]} : vector<8x96xf32> to vector<8x8xf32>
    %343 = vector.shape_cast %342 : vector<8x8xf32> to vector<1x8x8xf32>
    %344 = vector.extract_strided_slice %332 {offsets = [0, 40], sizes = [8, 8], strides = [1, 1]} : vector<8x96xf32> to vector<8x8xf32>
    %345 = vector.shape_cast %344 : vector<8x8xf32> to vector<1x8x8xf32>
    %346 = vector.extract_strided_slice %332 {offsets = [0, 48], sizes = [8, 8], strides = [1, 1]} : vector<8x96xf32> to vector<8x8xf32>
    %347 = vector.shape_cast %346 : vector<8x8xf32> to vector<1x8x8xf32>
    %348 = vector.extract_strided_slice %332 {offsets = [0, 56], sizes = [8, 8], strides = [1, 1]} : vector<8x96xf32> to vector<8x8xf32>
    %349 = vector.shape_cast %348 : vector<8x8xf32> to vector<1x8x8xf32>
    %350 = tpu.concatenate %343, %345, %347, %349 in 0 : vector<1x8x8xf32>, vector<1x8x8xf32>, vector<1x8x8xf32>, vector<1x8x8xf32> -> vector<4x8x8xf32>
    %351 = vector.extract_strided_slice %332 {offsets = [0, 64], sizes = [8, 8], strides = [1, 1]} : vector<8x96xf32> to vector<8x8xf32>
    %352 = vector.shape_cast %351 : vector<8x8xf32> to vector<1x8x8xf32>
    %353 = vector.extract_strided_slice %332 {offsets = [0, 72], sizes = [8, 8], strides = [1, 1]} : vector<8x96xf32> to vector<8x8xf32>
    %354 = vector.shape_cast %353 : vector<8x8xf32> to vector<1x8x8xf32>
    %355 = vector.extract_strided_slice %332 {offsets = [0, 80], sizes = [8, 8], strides = [1, 1]} : vector<8x96xf32> to vector<8x8xf32>
    %356 = vector.shape_cast %355 : vector<8x8xf32> to vector<1x8x8xf32>
    %357 = vector.extract_strided_slice %332 {offsets = [0, 88], sizes = [8, 8], strides = [1, 1]} : vector<8x96xf32> to vector<8x8xf32>
    %358 = vector.shape_cast %357 : vector<8x8xf32> to vector<1x8x8xf32>
    %359 = tpu.concatenate %352, %354, %356, %358 in 0 : vector<1x8x8xf32>, vector<1x8x8xf32>, vector<1x8x8xf32>, vector<1x8x8xf32> -> vector<4x8x8xf32>
    %360 = arith.truncf %341 : vector<4x8x8xf32> to vector<4x8x8xbf16>
    %361 = arith.truncf %350 : vector<4x8x8xf32> to vector<4x8x8xbf16>
    "tpu.trace_start"() <{level = 10 : i32, message = "hqd,hkd->hqk"}> : () -> ()
    %cst_126 = arith.constant dense<0.000000e+00> : vector<4x8x8xf32>
    %362 = tpu.matmul %360, %361, %cst_126 {dimension_numbers = #tpu.dot_dimension_numbers<[2], [2], [1], [1], [0, 0, 0, 1, 1, 1], [0], [0]>} : vector<4x8x8xbf16>, vector<4x8x8xbf16>, vector<4x8x8xf32> -> vector<4x8x8xf32>
    "tpu.trace_stop"() : () -> ()
    %cst_127 = arith.constant 0.353553385 : f32
    %363 = vector.broadcast %cst_127 : f32 to vector<4x8x8xf32>
    %364 = arith.mulf %362, %363 : vector<4x8x8xf32>
    %cst_128 = arith.constant dense<0xFF800000> : vector<4x8xf32>
    %365 = vector.multi_reduction <maximumf>, %364, %cst_128 [2] : vector<4x8x8xf32> to vector<4x8xf32>
    %366 = vector.shape_cast %365 : vector<4x8xf32> to vector<4x8x1xf32>
    %367 = vector.broadcast %366 : vector<4x8x1xf32> to vector<4x8x8xf32>
    %368 = arith.subf %364, %367 : vector<4x8x8xf32>
    %369 = math.exp %368 : vector<4x8x8xf32>
    %cst_129 = arith.constant dense<0.000000e+00> : vector<4x8xf32>
    %370 = vector.multi_reduction <add>, %369, %cst_129 [2] : vector<4x8x8xf32> to vector<4x8xf32>
    %371 = vector.shape_cast %370 : vector<4x8xf32> to vector<4x8x1xf32>
    %372 = tpu.reciprocal %371 {approx = true} : vector<4x8x1xf32> -> vector<4x8x1xf32>
    %373 = vector.broadcast %372 : vector<4x8x1xf32> to vector<4x8x8xf32>
    %374 = arith.mulf %369, %373 : vector<4x8x8xf32>
    %375 = arith.truncf %374 : vector<4x8x8xf32> to vector<4x8x8xbf16>
    %376 = arith.truncf %359 : vector<4x8x8xf32> to vector<4x8x8xbf16>
    "tpu.trace_start"() <{level = 10 : i32, message = "hqk,hkd->hqd"}> : () -> ()
    %cst_130 = arith.constant dense<0.000000e+00> : vector<4x8x8xf32>
    %377 = tpu.matmul %375, %376, %cst_130 {dimension_numbers = #tpu.dot_dimension_numbers<[2], [1], [1], [2], [0, 0, 0, 1, 1, 2], [0], [0]>} : vector<4x8x8xbf16>, vector<4x8x8xbf16>, vector<4x8x8xf32> -> vector<4x8x8xf32>
    "tpu.trace_stop"() : () -> ()
    %378 = vector.extract_strided_slice %377 {offsets = [0, 0, 0], sizes = [1, 8, 8], strides = [1, 1, 1]} : vector<4x8x8xf32> to vector<1x8x8xf32>
    %379 = vector.shape_cast %378 : vector<1x8x8xf32> to vector<8x8xf32>
    %380 = vector.extract_strided_slice %377 {offsets = [1, 0, 0], sizes = [1, 8, 8], strides = [1, 1, 1]} : vector<4x8x8xf32> to vector<1x8x8xf32>
    %381 = vector.shape_cast %380 : vector<1x8x8xf32> to vector<8x8xf32>
    %382 = vector.extract_strided_slice %377 {offsets = [2, 0, 0], sizes = [1, 8, 8], strides = [1, 1, 1]} : vector<4x8x8xf32> to vector<1x8x8xf32>
    %383 = vector.shape_cast %382 : vector<1x8x8xf32> to vector<8x8xf32>
    %384 = vector.extract_strided_slice %377 {offsets = [3, 0, 0], sizes = [1, 8, 8], strides = [1, 1, 1]} : vector<4x8x8xf32> to vector<1x8x8xf32>
    %385 = vector.shape_cast %384 : vector<1x8x8xf32> to vector<8x8xf32>
    %386 = tpu.concatenate %379, %381, %383, %385 in 1 : vector<8x8xf32>, vector<8x8xf32>, vector<8x8xf32>, vector<8x8xf32> -> vector<8x32xf32>
    %387 = arith.truncf %386 : vector<8x32xf32> to vector<8x32xbf16>
    %cst_131 = arith.constant dense<0.000000e+00> : vector<8x32xf32>
    %388 = tpu.matmul %387, %326, %cst_131 {dimension_numbers = #tpu.dot_dimension_numbers<[1], [0], [0], [1], [0, 0, 1, 1], [], []>} : vector<8x32xbf16>, vector<32x32xbf16>, vector<8x32xf32> -> vector<8x32xf32>
    %389 = vector.broadcast %328 : vector<1x32xf32> to vector<8x32xf32>
    %390 = arith.addf %388, %389 : vector<8x32xf32>
    %391 = arith.addf %13, %390 : vector<8x32xf32>
    %392 = vector.extract_strided_slice %320 {offsets = [0, 0], sizes = [1, 32], strides = [1, 1]} : vector<6x32xf32> to vector<1x32xf32>
    %393 = vector.extract_strided_slice %320 {offsets = [1, 0], sizes = [1, 32], strides = [1, 1]} : vector<6x32xf32> to vector<1x32xf32>
    %cst_132 = arith.constant dense<0.000000e+00> : vector<8xf32>
    %394 = vector.multi_reduction <add>, %391, %cst_132 [1] : vector<8x32xf32> to vector<8xf32>
    %395 = vector.shape_cast %394 : vector<8xf32> to vector<8x1xf32>
    %cst_133 = arith.constant 3.200000e+01 : f32
    %396 = vector.broadcast %cst_133 : f32 to vector<8x1xf32>
    %397 = arith.divf %395, %396 : vector<8x1xf32>
    %398 = vector.broadcast %397 : vector<8x1xf32> to vector<8x32xf32>
    %399 = arith.subf %391, %398 : vector<8x32xf32>
    %400 = arith.mulf %399, %399 : vector<8x32xf32>
    %cst_134 = arith.constant dense<0.000000e+00> : vector<8xf32>
    %401 = vector.multi_reduction <add>, %400, %cst_134 [1] : vector<8x32xf32> to vector<8xf32>
    %402 = vector.shape_cast %401 : vector<8xf32> to vector<8x1xf32>
    %cst_135 = arith.constant 3.200000e+01 : f32
    %403 = vector.broadcast %cst_135 : f32 to vector<8x1xf32>
    %404 = arith.divf %402, %403 : vector<8x1xf32>
    %405 = vector.broadcast %397 : vector<8x1xf32> to vector<8x32xf32>
    %406 = arith.subf %391, %405 : vector<8x32xf32>
    %cst_136 = arith.constant 9.99999974E-6 : f32
    %407 = vector.broadcast %cst_136 : f32 to vector<8x1xf32>
    %408 = arith.addf %404, %407 : vector<8x1xf32>
    %409 = math.rsqrt %408 : vector<8x1xf32>
    %410 = vector.broadcast %409 : vector<8x1xf32> to vector<8x32xf32>
    %411 = arith.mulf %406, %410 : vector<8x32xf32>
    %412 = vector.broadcast %392 : vector<1x32xf32> to vector<8x32xf32>
    %413 = arith.mulf %411, %412 : vector<8x32xf32>
    %414 = vector.broadcast %393 : vector<1x32xf32> to vector<8x32xf32>
    %415 = arith.addf %413, %414 : vector<8x32xf32>
    %c0_137 = arith.constant 0 : index
    %c0_138 = arith.constant 0 : index
    %c0_139 = arith.constant 0 : index
    %416 = vector.load %arg16[%c0_137, %c0_138, %c0_139] : memref<2x32x32xbf16, #tpu.memory_space<vmem>>, vector<1x32x32xbf16>
    %417 = vector.shape_cast %416 : vector<1x32x32xbf16> to vector<32x32xbf16>
    %c0_140 = arith.constant 0 : index
    %c0_141 = arith.constant 0 : index
    %c0_142 = arith.constant 0 : index
    %418 = vector.load %arg8[%c0_140, %c0_141, %c0_142] : memref<2x1x32xf32, #tpu.memory_space<vmem>>, vector<1x1x32xf32>
    %419 = vector.shape_cast %418 : vector<1x1x32xf32> to vector<1x32xf32>
    %c0_143 = arith.constant 0 : index
    %c0_144 = arith.constant 0 : index
    %c0_145 = arith.constant 0 : index
    %420 = vector.load %arg13[%c0_143, %c0_144, %c0_145] : memref<2x32x64xbf16, #tpu.memory_space<vmem>>, vector<1x32x64xbf16>
    %421 = vector.shape_cast %420 : vector<1x32x64xbf16> to vector<32x64xbf16>
    %c0_146 = arith.constant 0 : index
    %c0_147 = arith.constant 0 : index
    %c0_148 = arith.constant 0 : index
    %422 = vector.load %arg5[%c0_146, %c0_147, %c0_148] : memref<2x1x64xf32, #tpu.memory_space<vmem>>, vector<1x1x64xf32>
    %423 = vector.shape_cast %422 : vector<1x1x64xf32> to vector<1x64xf32>
    %c0_149 = arith.constant 0 : index
    %c0_150 = arith.constant 0 : index
    %c0_151 = arith.constant 0 : index
    %424 = vector.load %arg14[%c0_149, %c0_150, %c0_151] : memref<2x32x32xbf16, #tpu.memory_space<vmem>>, vector<1x32x32xbf16>
    %425 = vector.shape_cast %424 : vector<1x32x32xbf16> to vector<32x32xbf16>
    %c0_152 = arith.constant 0 : index
    %c0_153 = arith.constant 0 : index
    %c0_154 = arith.constant 0 : index
    %426 = vector.load %arg6[%c0_152, %c0_153, %c0_154] : memref<2x1x32xf32, #tpu.memory_space<vmem>>, vector<1x1x32xf32>
    %427 = vector.shape_cast %426 : vector<1x1x32xf32> to vector<1x32xf32>
    %428 = arith.truncf %415 : vector<8x32xf32> to vector<8x32xbf16>
    %cst_155 = arith.constant dense<0.000000e+00> : vector<8x32xf32>
    %429 = tpu.matmul %428, %417, %cst_155 {dimension_numbers = #tpu.dot_dimension_numbers<[1], [0], [0], [1], [0, 0, 1, 1], [], []>} : vector<8x32xbf16>, vector<32x32xbf16>, vector<8x32xf32> -> vector<8x32xf32>
    %430 = vector.broadcast %419 : vector<1x32xf32> to vector<8x32xf32>
    %431 = arith.addf %429, %430 : vector<8x32xf32>
    %432 = arith.truncf %318 : vector<8x32xf32> to vector<8x32xbf16>
    %cst_156 = arith.constant dense<0.000000e+00> : vector<8x64xf32>
    %433 = tpu.matmul %432, %421, %cst_156 {dimension_numbers = #tpu.dot_dimension_numbers<[1], [0], [0], [1], [0, 0, 1, 1], [], []>} : vector<8x32xbf16>, vector<32x64xbf16>, vector<8x64xf32> -> vector<8x64xf32>
    %434 = vector.broadcast %423 : vector<1x64xf32> to vector<8x64xf32>
    %435 = arith.addf %433, %434 : vector<8x64xf32>
    %436 = vector.extract_strided_slice %431 {offsets = [0, 0], sizes = [8, 8], strides = [1, 1]} : vector<8x32xf32> to vector<8x8xf32>
    %437 = vector.shape_cast %436 : vector<8x8xf32> to vector<1x8x8xf32>
    %438 = vector.extract_strided_slice %431 {offsets = [0, 8], sizes = [8, 8], strides = [1, 1]} : vector<8x32xf32> to vector<8x8xf32>
    %439 = vector.shape_cast %438 : vector<8x8xf32> to vector<1x8x8xf32>
    %440 = vector.extract_strided_slice %431 {offsets = [0, 16], sizes = [8, 8], strides = [1, 1]} : vector<8x32xf32> to vector<8x8xf32>
    %441 = vector.shape_cast %440 : vector<8x8xf32> to vector<1x8x8xf32>
    %442 = vector.extract_strided_slice %431 {offsets = [0, 24], sizes = [8, 8], strides = [1, 1]} : vector<8x32xf32> to vector<8x8xf32>
    %443 = vector.shape_cast %442 : vector<8x8xf32> to vector<1x8x8xf32>
    %444 = tpu.concatenate %437, %439, %441, %443 in 0 : vector<1x8x8xf32>, vector<1x8x8xf32>, vector<1x8x8xf32>, vector<1x8x8xf32> -> vector<4x8x8xf32>
    %445 = vector.extract_strided_slice %435 {offsets = [0, 0], sizes = [8, 8], strides = [1, 1]} : vector<8x64xf32> to vector<8x8xf32>
    %446 = vector.shape_cast %445 : vector<8x8xf32> to vector<1x8x8xf32>
    %447 = vector.extract_strided_slice %435 {offsets = [0, 8], sizes = [8, 8], strides = [1, 1]} : vector<8x64xf32> to vector<8x8xf32>
    %448 = vector.shape_cast %447 : vector<8x8xf32> to vector<1x8x8xf32>
    %449 = vector.extract_strided_slice %435 {offsets = [0, 16], sizes = [8, 8], strides = [1, 1]} : vector<8x64xf32> to vector<8x8xf32>
    %450 = vector.shape_cast %449 : vector<8x8xf32> to vector<1x8x8xf32>
    %451 = vector.extract_strided_slice %435 {offsets = [0, 24], sizes = [8, 8], strides = [1, 1]} : vector<8x64xf32> to vector<8x8xf32>
    %452 = vector.shape_cast %451 : vector<8x8xf32> to vector<1x8x8xf32>
    %453 = tpu.concatenate %446, %448, %450, %452 in 0 : vector<1x8x8xf32>, vector<1x8x8xf32>, vector<1x8x8xf32>, vector<1x8x8xf32> -> vector<4x8x8xf32>
    %454 = vector.extract_strided_slice %435 {offsets = [0, 32], sizes = [8, 8], strides = [1, 1]} : vector<8x64xf32> to vector<8x8xf32>
    %455 = vector.shape_cast %454 : vector<8x8xf32> to vector<1x8x8xf32>
    %456 = vector.extract_strided_slice %435 {offsets = [0, 40], sizes = [8, 8], strides = [1, 1]} : vector<8x64xf32> to vector<8x8xf32>
    %457 = vector.shape_cast %456 : vector<8x8xf32> to vector<1x8x8xf32>
    %458 = vector.extract_strided_slice %435 {offsets = [0, 48], sizes = [8, 8], strides = [1, 1]} : vector<8x64xf32> to vector<8x8xf32>
    %459 = vector.shape_cast %458 : vector<8x8xf32> to vector<1x8x8xf32>
    %460 = vector.extract_strided_slice %435 {offsets = [0, 56], sizes = [8, 8], strides = [1, 1]} : vector<8x64xf32> to vector<8x8xf32>
    %461 = vector.shape_cast %460 : vector<8x8xf32> to vector<1x8x8xf32>
    %462 = tpu.concatenate %455, %457, %459, %461 in 0 : vector<1x8x8xf32>, vector<1x8x8xf32>, vector<1x8x8xf32>, vector<1x8x8xf32> -> vector<4x8x8xf32>
    %463 = arith.truncf %444 : vector<4x8x8xf32> to vector<4x8x8xbf16>
    %464 = arith.truncf %453 : vector<4x8x8xf32> to vector<4x8x8xbf16>
    "tpu.trace_start"() <{level = 10 : i32, message = "hqd,hkd->hqk"}> : () -> ()
    %cst_157 = arith.constant dense<0.000000e+00> : vector<4x8x8xf32>
    %465 = tpu.matmul %463, %464, %cst_157 {dimension_numbers = #tpu.dot_dimension_numbers<[2], [2], [1], [1], [0, 0, 0, 1, 1, 1], [0], [0]>} : vector<4x8x8xbf16>, vector<4x8x8xbf16>, vector<4x8x8xf32> -> vector<4x8x8xf32>
    "tpu.trace_stop"() : () -> ()
    %cst_158 = arith.constant 0.353553385 : f32
    %466 = vector.broadcast %cst_158 : f32 to vector<4x8x8xf32>
    %467 = arith.mulf %465, %466 : vector<4x8x8xf32>
    %cst_159 = arith.constant dense<0xFF800000> : vector<4x8xf32>
    %468 = vector.multi_reduction <maximumf>, %467, %cst_159 [2] : vector<4x8x8xf32> to vector<4x8xf32>
    %469 = vector.shape_cast %468 : vector<4x8xf32> to vector<4x8x1xf32>
    %470 = vector.broadcast %469 : vector<4x8x1xf32> to vector<4x8x8xf32>
    %471 = arith.subf %467, %470 : vector<4x8x8xf32>
    %472 = math.exp %471 : vector<4x8x8xf32>
    %cst_160 = arith.constant dense<0.000000e+00> : vector<4x8xf32>
    %473 = vector.multi_reduction <add>, %472, %cst_160 [2] : vector<4x8x8xf32> to vector<4x8xf32>
    %474 = vector.shape_cast %473 : vector<4x8xf32> to vector<4x8x1xf32>
    %475 = tpu.reciprocal %474 {approx = true} : vector<4x8x1xf32> -> vector<4x8x1xf32>
    %476 = vector.broadcast %475 : vector<4x8x1xf32> to vector<4x8x8xf32>
    %477 = arith.mulf %472, %476 : vector<4x8x8xf32>
    %478 = arith.truncf %477 : vector<4x8x8xf32> to vector<4x8x8xbf16>
    %479 = arith.truncf %462 : vector<4x8x8xf32> to vector<4x8x8xbf16>
    "tpu.trace_start"() <{level = 10 : i32, message = "hqk,hkd->hqd"}> : () -> ()
    %cst_161 = arith.constant dense<0.000000e+00> : vector<4x8x8xf32>
    %480 = tpu.matmul %478, %479, %cst_161 {dimension_numbers = #tpu.dot_dimension_numbers<[2], [1], [1], [2], [0, 0, 0, 1, 1, 2], [0], [0]>} : vector<4x8x8xbf16>, vector<4x8x8xbf16>, vector<4x8x8xf32> -> vector<4x8x8xf32>
    "tpu.trace_stop"() : () -> ()
    %481 = vector.extract_strided_slice %480 {offsets = [0, 0, 0], sizes = [1, 8, 8], strides = [1, 1, 1]} : vector<4x8x8xf32> to vector<1x8x8xf32>
    %482 = vector.shape_cast %481 : vector<1x8x8xf32> to vector<8x8xf32>
    %483 = vector.extract_strided_slice %480 {offsets = [1, 0, 0], sizes = [1, 8, 8], strides = [1, 1, 1]} : vector<4x8x8xf32> to vector<1x8x8xf32>
    %484 = vector.shape_cast %483 : vector<1x8x8xf32> to vector<8x8xf32>
    %485 = vector.extract_strided_slice %480 {offsets = [2, 0, 0], sizes = [1, 8, 8], strides = [1, 1, 1]} : vector<4x8x8xf32> to vector<1x8x8xf32>
    %486 = vector.shape_cast %485 : vector<1x8x8xf32> to vector<8x8xf32>
    %487 = vector.extract_strided_slice %480 {offsets = [3, 0, 0], sizes = [1, 8, 8], strides = [1, 1, 1]} : vector<4x8x8xf32> to vector<1x8x8xf32>
    %488 = vector.shape_cast %487 : vector<1x8x8xf32> to vector<8x8xf32>
    %489 = tpu.concatenate %482, %484, %486, %488 in 1 : vector<8x8xf32>, vector<8x8xf32>, vector<8x8xf32>, vector<8x8xf32> -> vector<8x32xf32>
    %490 = arith.truncf %489 : vector<8x32xf32> to vector<8x32xbf16>
    %cst_162 = arith.constant dense<0.000000e+00> : vector<8x32xf32>
    %491 = tpu.matmul %490, %425, %cst_162 {dimension_numbers = #tpu.dot_dimension_numbers<[1], [0], [0], [1], [0, 0, 1, 1], [], []>} : vector<8x32xbf16>, vector<32x32xbf16>, vector<8x32xf32> -> vector<8x32xf32>
    %492 = vector.broadcast %427 : vector<1x32xf32> to vector<8x32xf32>
    %493 = arith.addf %491, %492 : vector<8x32xf32>
    %494 = arith.addf %415, %493 : vector<8x32xf32>
    %495 = vector.extract_strided_slice %320 {offsets = [2, 0], sizes = [1, 32], strides = [1, 1]} : vector<6x32xf32> to vector<1x32xf32>
    %496 = vector.extract_strided_slice %320 {offsets = [3, 0], sizes = [1, 32], strides = [1, 1]} : vector<6x32xf32> to vector<1x32xf32>
    %cst_163 = arith.constant dense<0.000000e+00> : vector<8xf32>
    %497 = vector.multi_reduction <add>, %494, %cst_163 [1] : vector<8x32xf32> to vector<8xf32>
    %498 = vector.shape_cast %497 : vector<8xf32> to vector<8x1xf32>
    %cst_164 = arith.constant 3.200000e+01 : f32
    %499 = vector.broadcast %cst_164 : f32 to vector<8x1xf32>
    %500 = arith.divf %498, %499 : vector<8x1xf32>
    %501 = vector.broadcast %500 : vector<8x1xf32> to vector<8x32xf32>
    %502 = arith.subf %494, %501 : vector<8x32xf32>
    %503 = arith.mulf %502, %502 : vector<8x32xf32>
    %cst_165 = arith.constant dense<0.000000e+00> : vector<8xf32>
    %504 = vector.multi_reduction <add>, %503, %cst_165 [1] : vector<8x32xf32> to vector<8xf32>
    %505 = vector.shape_cast %504 : vector<8xf32> to vector<8x1xf32>
    %cst_166 = arith.constant 3.200000e+01 : f32
    %506 = vector.broadcast %cst_166 : f32 to vector<8x1xf32>
    %507 = arith.divf %505, %506 : vector<8x1xf32>
    %508 = vector.broadcast %500 : vector<8x1xf32> to vector<8x32xf32>
    %509 = arith.subf %494, %508 : vector<8x32xf32>
    %cst_167 = arith.constant 9.99999974E-6 : f32
    %510 = vector.broadcast %cst_167 : f32 to vector<8x1xf32>
    %511 = arith.addf %507, %510 : vector<8x1xf32>
    %512 = math.rsqrt %511 : vector<8x1xf32>
    %513 = vector.broadcast %512 : vector<8x1xf32> to vector<8x32xf32>
    %514 = arith.mulf %509, %513 : vector<8x32xf32>
    %515 = vector.broadcast %495 : vector<1x32xf32> to vector<8x32xf32>
    %516 = arith.mulf %514, %515 : vector<8x32xf32>
    %517 = vector.broadcast %496 : vector<1x32xf32> to vector<8x32xf32>
    %518 = arith.addf %516, %517 : vector<8x32xf32>
    %c0_168 = arith.constant 0 : index
    %c0_169 = arith.constant 0 : index
    %c0_170 = arith.constant 0 : index
    %519 = vector.load %arg11[%c0_168, %c0_169, %c0_170] : memref<2x32x64xbf16, #tpu.memory_space<vmem>>, vector<1x32x64xbf16>
    %520 = vector.shape_cast %519 : vector<1x32x64xbf16> to vector<32x64xbf16>
    %c0_171 = arith.constant 0 : index
    %c0_172 = arith.constant 0 : index
    %c0_173 = arith.constant 0 : index
    %521 = vector.load %arg3[%c0_171, %c0_172, %c0_173] : memref<2x1x64xf32, #tpu.memory_space<vmem>>, vector<1x1x64xf32>
    %522 = vector.shape_cast %521 : vector<1x1x64xf32> to vector<1x64xf32>
    %c0_174 = arith.constant 0 : index
    %c0_175 = arith.constant 0 : index
    %c0_176 = arith.constant 0 : index
    %523 = vector.load %arg12[%c0_174, %c0_175, %c0_176] : memref<2x64x32xbf16, #tpu.memory_space<vmem>>, vector<1x64x32xbf16>
    %524 = vector.shape_cast %523 : vector<1x64x32xbf16> to vector<64x32xbf16>
    %c0_177 = arith.constant 0 : index
    %c0_178 = arith.constant 0 : index
    %c0_179 = arith.constant 0 : index
    %525 = vector.load %arg4[%c0_177, %c0_178, %c0_179] : memref<2x1x32xf32, #tpu.memory_space<vmem>>, vector<1x1x32xf32>
    %526 = vector.shape_cast %525 : vector<1x1x32xf32> to vector<1x32xf32>
    %527 = arith.truncf %518 : vector<8x32xf32> to vector<8x32xbf16>
    %cst_180 = arith.constant dense<0.000000e+00> : vector<8x64xf32>
    %528 = tpu.matmul %527, %520, %cst_180 {dimension_numbers = #tpu.dot_dimension_numbers<[1], [0], [0], [1], [0, 0, 1, 1], [], []>} : vector<8x32xbf16>, vector<32x64xbf16>, vector<8x64xf32> -> vector<8x64xf32>
    %529 = vector.broadcast %522 : vector<1x64xf32> to vector<8x64xf32>
    %530 = arith.addf %528, %529 : vector<8x64xf32>
    %cst_181 = arith.constant 0.000000e+00 : f32
    %531 = vector.broadcast %cst_181 : f32 to vector<8x64xf32>
    %532 = arith.maximumf %530, %531 : vector<8x64xf32>
    %533 = arith.truncf %532 : vector<8x64xf32> to vector<8x64xbf16>
    %cst_182 = arith.constant dense<0.000000e+00> : vector<8x32xf32>
    %534 = tpu.matmul %533, %524, %cst_182 {dimension_numbers = #tpu.dot_dimension_numbers<[1], [0], [0], [1], [0, 0, 1, 1], [], []>} : vector<8x64xbf16>, vector<64x32xbf16>, vector<8x32xf32> -> vector<8x32xf32>
    %535 = vector.broadcast %526 : vector<1x32xf32> to vector<8x32xf32>
    %536 = arith.addf %534, %535 : vector<8x32xf32>
    %537 = arith.addf %518, %536 : vector<8x32xf32>
    %538 = vector.extract_strided_slice %320 {offsets = [4, 0], sizes = [1, 32], strides = [1, 1]} : vector<6x32xf32> to vector<1x32xf32>
    %539 = vector.extract_strided_slice %320 {offsets = [5, 0], sizes = [1, 32], strides = [1, 1]} : vector<6x32xf32> to vector<1x32xf32>
    %cst_183 = arith.constant dense<0.000000e+00> : vector<8xf32>
    %540 = vector.multi_reduction <add>, %537, %cst_183 [1] : vector<8x32xf32> to vector<8xf32>
    %541 = vector.shape_cast %540 : vector<8xf32> to vector<8x1xf32>
    %cst_184 = arith.constant 3.200000e+01 : f32
    %542 = vector.broadcast %cst_184 : f32 to vector<8x1xf32>
    %543 = arith.divf %541, %542 : vector<8x1xf32>
    %544 = vector.broadcast %543 : vector<8x1xf32> to vector<8x32xf32>
    %545 = arith.subf %537, %544 : vector<8x32xf32>
    %546 = arith.mulf %545, %545 : vector<8x32xf32>
    %cst_185 = arith.constant dense<0.000000e+00> : vector<8xf32>
    %547 = vector.multi_reduction <add>, %546, %cst_185 [1] : vector<8x32xf32> to vector<8xf32>
    %548 = vector.shape_cast %547 : vector<8xf32> to vector<8x1xf32>
    %cst_186 = arith.constant 3.200000e+01 : f32
    %549 = vector.broadcast %cst_186 : f32 to vector<8x1xf32>
    %550 = arith.divf %548, %549 : vector<8x1xf32>
    %551 = vector.broadcast %543 : vector<8x1xf32> to vector<8x32xf32>
    %552 = arith.subf %537, %551 : vector<8x32xf32>
    %cst_187 = arith.constant 9.99999974E-6 : f32
    %553 = vector.broadcast %cst_187 : f32 to vector<8x1xf32>
    %554 = arith.addf %550, %553 : vector<8x1xf32>
    %555 = math.rsqrt %554 : vector<8x1xf32>
    %556 = vector.broadcast %555 : vector<8x1xf32> to vector<8x32xf32>
    %557 = arith.mulf %552, %556 : vector<8x32xf32>
    %558 = vector.broadcast %538 : vector<1x32xf32> to vector<8x32xf32>
    %559 = arith.mulf %557, %558 : vector<8x32xf32>
    %560 = vector.broadcast %539 : vector<1x32xf32> to vector<8x32xf32>
    %561 = arith.addf %559, %560 : vector<8x32xf32>
    %c1_188 = arith.constant 1 : index
    %c0_189 = arith.constant 0 : index
    %c0_190 = arith.constant 0 : index
    %562 = vector.load %arg10[%c1_188, %c0_189, %c0_190] : memref<2x6x32xf32, #tpu.memory_space<vmem>>, vector<1x6x32xf32>
    %563 = vector.shape_cast %562 : vector<1x6x32xf32> to vector<6x32xf32>
    %c1_191 = arith.constant 1 : index
    %c0_192 = arith.constant 0 : index
    %c0_193 = arith.constant 0 : index
    %564 = vector.load %arg17[%c1_191, %c0_192, %c0_193] : memref<2x32x96xbf16, #tpu.memory_space<vmem>>, vector<1x32x96xbf16>
    %565 = vector.shape_cast %564 : vector<1x32x96xbf16> to vector<32x96xbf16>
    %c1_194 = arith.constant 1 : index
    %c0_195 = arith.constant 0 : index
    %c0_196 = arith.constant 0 : index
    %566 = vector.load %arg9[%c1_194, %c0_195, %c0_196] : memref<2x1x96xf32, #tpu.memory_space<vmem>>, vector<1x1x96xf32>
    %567 = vector.shape_cast %566 : vector<1x1x96xf32> to vector<1x96xf32>
    %c1_197 = arith.constant 1 : index
    %c0_198 = arith.constant 0 : index
    %c0_199 = arith.constant 0 : index
    %568 = vector.load %arg15[%c1_197, %c0_198, %c0_199] : memref<2x32x32xbf16, #tpu.memory_space<vmem>>, vector<1x32x32xbf16>
    %569 = vector.shape_cast %568 : vector<1x32x32xbf16> to vector<32x32xbf16>
    %c1_200 = arith.constant 1 : index
    %c0_201 = arith.constant 0 : index
    %c0_202 = arith.constant 0 : index
    %570 = vector.load %arg7[%c1_200, %c0_201, %c0_202] : memref<2x1x32xf32, #tpu.memory_space<vmem>>, vector<1x1x32xf32>
    %571 = vector.shape_cast %570 : vector<1x1x32xf32> to vector<1x32xf32>
    %572 = arith.truncf %561 : vector<8x32xf32> to vector<8x32xbf16>
    %cst_203 = arith.constant dense<0.000000e+00> : vector<8x96xf32>
    %573 = tpu.matmul %572, %565, %cst_203 {dimension_numbers = #tpu.dot_dimension_numbers<[1], [0], [0], [1], [0, 0, 1, 1], [], []>} : vector<8x32xbf16>, vector<32x96xbf16>, vector<8x96xf32> -> vector<8x96xf32>
    %574 = vector.broadcast %567 : vector<1x96xf32> to vector<8x96xf32>
    %575 = arith.addf %573, %574 : vector<8x96xf32>
    %576 = vector.extract_strided_slice %575 {offsets = [0, 0], sizes = [8, 8], strides = [1, 1]} : vector<8x96xf32> to vector<8x8xf32>
    %577 = vector.shape_cast %576 : vector<8x8xf32> to vector<1x8x8xf32>
    %578 = vector.extract_strided_slice %575 {offsets = [0, 8], sizes = [8, 8], strides = [1, 1]} : vector<8x96xf32> to vector<8x8xf32>
    %579 = vector.shape_cast %578 : vector<8x8xf32> to vector<1x8x8xf32>
    %580 = vector.extract_strided_slice %575 {offsets = [0, 16], sizes = [8, 8], strides = [1, 1]} : vector<8x96xf32> to vector<8x8xf32>
    %581 = vector.shape_cast %580 : vector<8x8xf32> to vector<1x8x8xf32>
    %582 = vector.extract_strided_slice %575 {offsets = [0, 24], sizes = [8, 8], strides = [1, 1]} : vector<8x96xf32> to vector<8x8xf32>
    %583 = vector.shape_cast %582 : vector<8x8xf32> to vector<1x8x8xf32>
    %584 = tpu.concatenate %577, %579, %581, %583 in 0 : vector<1x8x8xf32>, vector<1x8x8xf32>, vector<1x8x8xf32>, vector<1x8x8xf32> -> vector<4x8x8xf32>
    %585 = vector.extract_strided_slice %575 {offsets = [0, 32], sizes = [8, 8], strides = [1, 1]} : vector<8x96xf32> to vector<8x8xf32>
    %586 = vector.shape_cast %585 : vector<8x8xf32> to vector<1x8x8xf32>
    %587 = vector.extract_strided_slice %575 {offsets = [0, 40], sizes = [8, 8], strides = [1, 1]} : vector<8x96xf32> to vector<8x8xf32>
    %588 = vector.shape_cast %587 : vector<8x8xf32> to vector<1x8x8xf32>
    %589 = vector.extract_strided_slice %575 {offsets = [0, 48], sizes = [8, 8], strides = [1, 1]} : vector<8x96xf32> to vector<8x8xf32>
    %590 = vector.shape_cast %589 : vector<8x8xf32> to vector<1x8x8xf32>
    %591 = vector.extract_strided_slice %575 {offsets = [0, 56], sizes = [8, 8], strides = [1, 1]} : vector<8x96xf32> to vector<8x8xf32>
    %592 = vector.shape_cast %591 : vector<8x8xf32> to vector<1x8x8xf32>
    %593 = tpu.concatenate %586, %588, %590, %592 in 0 : vector<1x8x8xf32>, vector<1x8x8xf32>, vector<1x8x8xf32>, vector<1x8x8xf32> -> vector<4x8x8xf32>
    %594 = vector.extract_strided_slice %575 {offsets = [0, 64], sizes = [8, 8], strides = [1, 1]} : vector<8x96xf32> to vector<8x8xf32>
    %595 = vector.shape_cast %594 : vector<8x8xf32> to vector<1x8x8xf32>
    %596 = vector.extract_strided_slice %575 {offsets = [0, 72], sizes = [8, 8], strides = [1, 1]} : vector<8x96xf32> to vector<8x8xf32>
    %597 = vector.shape_cast %596 : vector<8x8xf32> to vector<1x8x8xf32>
    %598 = vector.extract_strided_slice %575 {offsets = [0, 80], sizes = [8, 8], strides = [1, 1]} : vector<8x96xf32> to vector<8x8xf32>
    %599 = vector.shape_cast %598 : vector<8x8xf32> to vector<1x8x8xf32>
    %600 = vector.extract_strided_slice %575 {offsets = [0, 88], sizes = [8, 8], strides = [1, 1]} : vector<8x96xf32> to vector<8x8xf32>
    %601 = vector.shape_cast %600 : vector<8x8xf32> to vector<1x8x8xf32>
    %602 = tpu.concatenate %595, %597, %599, %601 in 0 : vector<1x8x8xf32>, vector<1x8x8xf32>, vector<1x8x8xf32>, vector<1x8x8xf32> -> vector<4x8x8xf32>
    %603 = arith.truncf %584 : vector<4x8x8xf32> to vector<4x8x8xbf16>
    %604 = arith.truncf %593 : vector<4x8x8xf32> to vector<4x8x8xbf16>
    "tpu.trace_start"() <{level = 10 : i32, message = "hqd,hkd->hqk"}> : () -> ()
    %cst_204 = arith.constant dense<0.000000e+00> : vector<4x8x8xf32>
    %605 = tpu.matmul %603, %604, %cst_204 {dimension_numbers = #tpu.dot_dimension_numbers<[2], [2], [1], [1], [0, 0, 0, 1, 1, 1], [0], [0]>} : vector<4x8x8xbf16>, vector<4x8x8xbf16>, vector<4x8x8xf32> -> vector<4x8x8xf32>
    "tpu.trace_stop"() : () -> ()
    %cst_205 = arith.constant 0.353553385 : f32
    %606 = vector.broadcast %cst_205 : f32 to vector<4x8x8xf32>
    %607 = arith.mulf %605, %606 : vector<4x8x8xf32>
    %cst_206 = arith.constant dense<0xFF800000> : vector<4x8xf32>
    %608 = vector.multi_reduction <maximumf>, %607, %cst_206 [2] : vector<4x8x8xf32> to vector<4x8xf32>
    %609 = vector.shape_cast %608 : vector<4x8xf32> to vector<4x8x1xf32>
    %610 = vector.broadcast %609 : vector<4x8x1xf32> to vector<4x8x8xf32>
    %611 = arith.subf %607, %610 : vector<4x8x8xf32>
    %612 = math.exp %611 : vector<4x8x8xf32>
    %cst_207 = arith.constant dense<0.000000e+00> : vector<4x8xf32>
    %613 = vector.multi_reduction <add>, %612, %cst_207 [2] : vector<4x8x8xf32> to vector<4x8xf32>
    %614 = vector.shape_cast %613 : vector<4x8xf32> to vector<4x8x1xf32>
    %615 = tpu.reciprocal %614 {approx = true} : vector<4x8x1xf32> -> vector<4x8x1xf32>
    %616 = vector.broadcast %615 : vector<4x8x1xf32> to vector<4x8x8xf32>
    %617 = arith.mulf %612, %616 : vector<4x8x8xf32>
    %618 = arith.truncf %617 : vector<4x8x8xf32> to vector<4x8x8xbf16>
    %619 = arith.truncf %602 : vector<4x8x8xf32> to vector<4x8x8xbf16>
    "tpu.trace_start"() <{level = 10 : i32, message = "hqk,hkd->hqd"}> : () -> ()
    %cst_208 = arith.constant dense<0.000000e+00> : vector<4x8x8xf32>
    %620 = tpu.matmul %618, %619, %cst_208 {dimension_numbers = #tpu.dot_dimension_numbers<[2], [1], [1], [2], [0, 0, 0, 1, 1, 2], [0], [0]>} : vector<4x8x8xbf16>, vector<4x8x8xbf16>, vector<4x8x8xf32> -> vector<4x8x8xf32>
    "tpu.trace_stop"() : () -> ()
    %621 = vector.extract_strided_slice %620 {offsets = [0, 0, 0], sizes = [1, 8, 8], strides = [1, 1, 1]} : vector<4x8x8xf32> to vector<1x8x8xf32>
    %622 = vector.shape_cast %621 : vector<1x8x8xf32> to vector<8x8xf32>
    %623 = vector.extract_strided_slice %620 {offsets = [1, 0, 0], sizes = [1, 8, 8], strides = [1, 1, 1]} : vector<4x8x8xf32> to vector<1x8x8xf32>
    %624 = vector.shape_cast %623 : vector<1x8x8xf32> to vector<8x8xf32>
    %625 = vector.extract_strided_slice %620 {offsets = [2, 0, 0], sizes = [1, 8, 8], strides = [1, 1, 1]} : vector<4x8x8xf32> to vector<1x8x8xf32>
    %626 = vector.shape_cast %625 : vector<1x8x8xf32> to vector<8x8xf32>
    %627 = vector.extract_strided_slice %620 {offsets = [3, 0, 0], sizes = [1, 8, 8], strides = [1, 1, 1]} : vector<4x8x8xf32> to vector<1x8x8xf32>
    %628 = vector.shape_cast %627 : vector<1x8x8xf32> to vector<8x8xf32>
    %629 = tpu.concatenate %622, %624, %626, %628 in 1 : vector<8x8xf32>, vector<8x8xf32>, vector<8x8xf32>, vector<8x8xf32> -> vector<8x32xf32>
    %630 = arith.truncf %629 : vector<8x32xf32> to vector<8x32xbf16>
    %cst_209 = arith.constant dense<0.000000e+00> : vector<8x32xf32>
    %631 = tpu.matmul %630, %569, %cst_209 {dimension_numbers = #tpu.dot_dimension_numbers<[1], [0], [0], [1], [0, 0, 1, 1], [], []>} : vector<8x32xbf16>, vector<32x32xbf16>, vector<8x32xf32> -> vector<8x32xf32>
    %632 = vector.broadcast %571 : vector<1x32xf32> to vector<8x32xf32>
    %633 = arith.addf %631, %632 : vector<8x32xf32>
    %634 = arith.addf %561, %633 : vector<8x32xf32>
    %635 = vector.extract_strided_slice %563 {offsets = [0, 0], sizes = [1, 32], strides = [1, 1]} : vector<6x32xf32> to vector<1x32xf32>
    %636 = vector.extract_strided_slice %563 {offsets = [1, 0], sizes = [1, 32], strides = [1, 1]} : vector<6x32xf32> to vector<1x32xf32>
    %cst_210 = arith.constant dense<0.000000e+00> : vector<8xf32>
    %637 = vector.multi_reduction <add>, %634, %cst_210 [1] : vector<8x32xf32> to vector<8xf32>
    %638 = vector.shape_cast %637 : vector<8xf32> to vector<8x1xf32>
    %cst_211 = arith.constant 3.200000e+01 : f32
    %639 = vector.broadcast %cst_211 : f32 to vector<8x1xf32>
    %640 = arith.divf %638, %639 : vector<8x1xf32>
    %641 = vector.broadcast %640 : vector<8x1xf32> to vector<8x32xf32>
    %642 = arith.subf %634, %641 : vector<8x32xf32>
    %643 = arith.mulf %642, %642 : vector<8x32xf32>
    %cst_212 = arith.constant dense<0.000000e+00> : vector<8xf32>
    %644 = vector.multi_reduction <add>, %643, %cst_212 [1] : vector<8x32xf32> to vector<8xf32>
    %645 = vector.shape_cast %644 : vector<8xf32> to vector<8x1xf32>
    %cst_213 = arith.constant 3.200000e+01 : f32
    %646 = vector.broadcast %cst_213 : f32 to vector<8x1xf32>
    %647 = arith.divf %645, %646 : vector<8x1xf32>
    %648 = vector.broadcast %640 : vector<8x1xf32> to vector<8x32xf32>
    %649 = arith.subf %634, %648 : vector<8x32xf32>
    %cst_214 = arith.constant 9.99999974E-6 : f32
    %650 = vector.broadcast %cst_214 : f32 to vector<8x1xf32>
    %651 = arith.addf %647, %650 : vector<8x1xf32>
    %652 = math.rsqrt %651 : vector<8x1xf32>
    %653 = vector.broadcast %652 : vector<8x1xf32> to vector<8x32xf32>
    %654 = arith.mulf %649, %653 : vector<8x32xf32>
    %655 = vector.broadcast %635 : vector<1x32xf32> to vector<8x32xf32>
    %656 = arith.mulf %654, %655 : vector<8x32xf32>
    %657 = vector.broadcast %636 : vector<1x32xf32> to vector<8x32xf32>
    %658 = arith.addf %656, %657 : vector<8x32xf32>
    %c1_215 = arith.constant 1 : index
    %c0_216 = arith.constant 0 : index
    %c0_217 = arith.constant 0 : index
    %659 = vector.load %arg16[%c1_215, %c0_216, %c0_217] : memref<2x32x32xbf16, #tpu.memory_space<vmem>>, vector<1x32x32xbf16>
    %660 = vector.shape_cast %659 : vector<1x32x32xbf16> to vector<32x32xbf16>
    %c1_218 = arith.constant 1 : index
    %c0_219 = arith.constant 0 : index
    %c0_220 = arith.constant 0 : index
    %661 = vector.load %arg8[%c1_218, %c0_219, %c0_220] : memref<2x1x32xf32, #tpu.memory_space<vmem>>, vector<1x1x32xf32>
    %662 = vector.shape_cast %661 : vector<1x1x32xf32> to vector<1x32xf32>
    %c1_221 = arith.constant 1 : index
    %c0_222 = arith.constant 0 : index
    %c0_223 = arith.constant 0 : index
    %663 = vector.load %arg13[%c1_221, %c0_222, %c0_223] : memref<2x32x64xbf16, #tpu.memory_space<vmem>>, vector<1x32x64xbf16>
    %664 = vector.shape_cast %663 : vector<1x32x64xbf16> to vector<32x64xbf16>
    %c1_224 = arith.constant 1 : index
    %c0_225 = arith.constant 0 : index
    %c0_226 = arith.constant 0 : index
    %665 = vector.load %arg5[%c1_224, %c0_225, %c0_226] : memref<2x1x64xf32, #tpu.memory_space<vmem>>, vector<1x1x64xf32>
    %666 = vector.shape_cast %665 : vector<1x1x64xf32> to vector<1x64xf32>
    %c1_227 = arith.constant 1 : index
    %c0_228 = arith.constant 0 : index
    %c0_229 = arith.constant 0 : index
    %667 = vector.load %arg14[%c1_227, %c0_228, %c0_229] : memref<2x32x32xbf16, #tpu.memory_space<vmem>>, vector<1x32x32xbf16>
    %668 = vector.shape_cast %667 : vector<1x32x32xbf16> to vector<32x32xbf16>
    %c1_230 = arith.constant 1 : index
    %c0_231 = arith.constant 0 : index
    %c0_232 = arith.constant 0 : index
    %669 = vector.load %arg6[%c1_230, %c0_231, %c0_232] : memref<2x1x32xf32, #tpu.memory_space<vmem>>, vector<1x1x32xf32>
    %670 = vector.shape_cast %669 : vector<1x1x32xf32> to vector<1x32xf32>
    %671 = arith.truncf %658 : vector<8x32xf32> to vector<8x32xbf16>
    %cst_233 = arith.constant dense<0.000000e+00> : vector<8x32xf32>
    %672 = tpu.matmul %671, %660, %cst_233 {dimension_numbers = #tpu.dot_dimension_numbers<[1], [0], [0], [1], [0, 0, 1, 1], [], []>} : vector<8x32xbf16>, vector<32x32xbf16>, vector<8x32xf32> -> vector<8x32xf32>
    %673 = vector.broadcast %662 : vector<1x32xf32> to vector<8x32xf32>
    %674 = arith.addf %672, %673 : vector<8x32xf32>
    %675 = arith.truncf %318 : vector<8x32xf32> to vector<8x32xbf16>
    %cst_234 = arith.constant dense<0.000000e+00> : vector<8x64xf32>
    %676 = tpu.matmul %675, %664, %cst_234 {dimension_numbers = #tpu.dot_dimension_numbers<[1], [0], [0], [1], [0, 0, 1, 1], [], []>} : vector<8x32xbf16>, vector<32x64xbf16>, vector<8x64xf32> -> vector<8x64xf32>
    %677 = vector.broadcast %666 : vector<1x64xf32> to vector<8x64xf32>
    %678 = arith.addf %676, %677 : vector<8x64xf32>
    %679 = vector.extract_strided_slice %674 {offsets = [0, 0], sizes = [8, 8], strides = [1, 1]} : vector<8x32xf32> to vector<8x8xf32>
    %680 = vector.shape_cast %679 : vector<8x8xf32> to vector<1x8x8xf32>
    %681 = vector.extract_strided_slice %674 {offsets = [0, 8], sizes = [8, 8], strides = [1, 1]} : vector<8x32xf32> to vector<8x8xf32>
    %682 = vector.shape_cast %681 : vector<8x8xf32> to vector<1x8x8xf32>
    %683 = vector.extract_strided_slice %674 {offsets = [0, 16], sizes = [8, 8], strides = [1, 1]} : vector<8x32xf32> to vector<8x8xf32>
    %684 = vector.shape_cast %683 : vector<8x8xf32> to vector<1x8x8xf32>
    %685 = vector.extract_strided_slice %674 {offsets = [0, 24], sizes = [8, 8], strides = [1, 1]} : vector<8x32xf32> to vector<8x8xf32>
    %686 = vector.shape_cast %685 : vector<8x8xf32> to vector<1x8x8xf32>
    %687 = tpu.concatenate %680, %682, %684, %686 in 0 : vector<1x8x8xf32>, vector<1x8x8xf32>, vector<1x8x8xf32>, vector<1x8x8xf32> -> vector<4x8x8xf32>
    %688 = vector.extract_strided_slice %678 {offsets = [0, 0], sizes = [8, 8], strides = [1, 1]} : vector<8x64xf32> to vector<8x8xf32>
    %689 = vector.shape_cast %688 : vector<8x8xf32> to vector<1x8x8xf32>
    %690 = vector.extract_strided_slice %678 {offsets = [0, 8], sizes = [8, 8], strides = [1, 1]} : vector<8x64xf32> to vector<8x8xf32>
    %691 = vector.shape_cast %690 : vector<8x8xf32> to vector<1x8x8xf32>
    %692 = vector.extract_strided_slice %678 {offsets = [0, 16], sizes = [8, 8], strides = [1, 1]} : vector<8x64xf32> to vector<8x8xf32>
    %693 = vector.shape_cast %692 : vector<8x8xf32> to vector<1x8x8xf32>
    %694 = vector.extract_strided_slice %678 {offsets = [0, 24], sizes = [8, 8], strides = [1, 1]} : vector<8x64xf32> to vector<8x8xf32>
    %695 = vector.shape_cast %694 : vector<8x8xf32> to vector<1x8x8xf32>
    %696 = tpu.concatenate %689, %691, %693, %695 in 0 : vector<1x8x8xf32>, vector<1x8x8xf32>, vector<1x8x8xf32>, vector<1x8x8xf32> -> vector<4x8x8xf32>
    %697 = vector.extract_strided_slice %678 {offsets = [0, 32], sizes = [8, 8], strides = [1, 1]} : vector<8x64xf32> to vector<8x8xf32>
    %698 = vector.shape_cast %697 : vector<8x8xf32> to vector<1x8x8xf32>
    %699 = vector.extract_strided_slice %678 {offsets = [0, 40], sizes = [8, 8], strides = [1, 1]} : vector<8x64xf32> to vector<8x8xf32>
    %700 = vector.shape_cast %699 : vector<8x8xf32> to vector<1x8x8xf32>
    %701 = vector.extract_strided_slice %678 {offsets = [0, 48], sizes = [8, 8], strides = [1, 1]} : vector<8x64xf32> to vector<8x8xf32>
    %702 = vector.shape_cast %701 : vector<8x8xf32> to vector<1x8x8xf32>
    %703 = vector.extract_strided_slice %678 {offsets = [0, 56], sizes = [8, 8], strides = [1, 1]} : vector<8x64xf32> to vector<8x8xf32>
    %704 = vector.shape_cast %703 : vector<8x8xf32> to vector<1x8x8xf32>
    %705 = tpu.concatenate %698, %700, %702, %704 in 0 : vector<1x8x8xf32>, vector<1x8x8xf32>, vector<1x8x8xf32>, vector<1x8x8xf32> -> vector<4x8x8xf32>
    %706 = arith.truncf %687 : vector<4x8x8xf32> to vector<4x8x8xbf16>
    %707 = arith.truncf %696 : vector<4x8x8xf32> to vector<4x8x8xbf16>
    "tpu.trace_start"() <{level = 10 : i32, message = "hqd,hkd->hqk"}> : () -> ()
    %cst_235 = arith.constant dense<0.000000e+00> : vector<4x8x8xf32>
    %708 = tpu.matmul %706, %707, %cst_235 {dimension_numbers = #tpu.dot_dimension_numbers<[2], [2], [1], [1], [0, 0, 0, 1, 1, 1], [0], [0]>} : vector<4x8x8xbf16>, vector<4x8x8xbf16>, vector<4x8x8xf32> -> vector<4x8x8xf32>
    "tpu.trace_stop"() : () -> ()
    %cst_236 = arith.constant 0.353553385 : f32
    %709 = vector.broadcast %cst_236 : f32 to vector<4x8x8xf32>
    %710 = arith.mulf %708, %709 : vector<4x8x8xf32>
    %cst_237 = arith.constant dense<0xFF800000> : vector<4x8xf32>
    %711 = vector.multi_reduction <maximumf>, %710, %cst_237 [2] : vector<4x8x8xf32> to vector<4x8xf32>
    %712 = vector.shape_cast %711 : vector<4x8xf32> to vector<4x8x1xf32>
    %713 = vector.broadcast %712 : vector<4x8x1xf32> to vector<4x8x8xf32>
    %714 = arith.subf %710, %713 : vector<4x8x8xf32>
    %715 = math.exp %714 : vector<4x8x8xf32>
    %cst_238 = arith.constant dense<0.000000e+00> : vector<4x8xf32>
    %716 = vector.multi_reduction <add>, %715, %cst_238 [2] : vector<4x8x8xf32> to vector<4x8xf32>
    %717 = vector.shape_cast %716 : vector<4x8xf32> to vector<4x8x1xf32>
    %718 = tpu.reciprocal %717 {approx = true} : vector<4x8x1xf32> -> vector<4x8x1xf32>
    %719 = vector.broadcast %718 : vector<4x8x1xf32> to vector<4x8x8xf32>
    %720 = arith.mulf %715, %719 : vector<4x8x8xf32>
    %721 = arith.truncf %720 : vector<4x8x8xf32> to vector<4x8x8xbf16>
    %722 = arith.truncf %705 : vector<4x8x8xf32> to vector<4x8x8xbf16>
    "tpu.trace_start"() <{level = 10 : i32, message = "hqk,hkd->hqd"}> : () -> ()
    %cst_239 = arith.constant dense<0.000000e+00> : vector<4x8x8xf32>
    %723 = tpu.matmul %721, %722, %cst_239 {dimension_numbers = #tpu.dot_dimension_numbers<[2], [1], [1], [2], [0, 0, 0, 1, 1, 2], [0], [0]>} : vector<4x8x8xbf16>, vector<4x8x8xbf16>, vector<4x8x8xf32> -> vector<4x8x8xf32>
    "tpu.trace_stop"() : () -> ()
    %724 = vector.extract_strided_slice %723 {offsets = [0, 0, 0], sizes = [1, 8, 8], strides = [1, 1, 1]} : vector<4x8x8xf32> to vector<1x8x8xf32>
    %725 = vector.shape_cast %724 : vector<1x8x8xf32> to vector<8x8xf32>
    %726 = vector.extract_strided_slice %723 {offsets = [1, 0, 0], sizes = [1, 8, 8], strides = [1, 1, 1]} : vector<4x8x8xf32> to vector<1x8x8xf32>
    %727 = vector.shape_cast %726 : vector<1x8x8xf32> to vector<8x8xf32>
    %728 = vector.extract_strided_slice %723 {offsets = [2, 0, 0], sizes = [1, 8, 8], strides = [1, 1, 1]} : vector<4x8x8xf32> to vector<1x8x8xf32>
    %729 = vector.shape_cast %728 : vector<1x8x8xf32> to vector<8x8xf32>
    %730 = vector.extract_strided_slice %723 {offsets = [3, 0, 0], sizes = [1, 8, 8], strides = [1, 1, 1]} : vector<4x8x8xf32> to vector<1x8x8xf32>
    %731 = vector.shape_cast %730 : vector<1x8x8xf32> to vector<8x8xf32>
    %732 = tpu.concatenate %725, %727, %729, %731 in 1 : vector<8x8xf32>, vector<8x8xf32>, vector<8x8xf32>, vector<8x8xf32> -> vector<8x32xf32>
    %733 = arith.truncf %732 : vector<8x32xf32> to vector<8x32xbf16>
    %cst_240 = arith.constant dense<0.000000e+00> : vector<8x32xf32>
    %734 = tpu.matmul %733, %668, %cst_240 {dimension_numbers = #tpu.dot_dimension_numbers<[1], [0], [0], [1], [0, 0, 1, 1], [], []>} : vector<8x32xbf16>, vector<32x32xbf16>, vector<8x32xf32> -> vector<8x32xf32>
    %735 = vector.broadcast %670 : vector<1x32xf32> to vector<8x32xf32>
    %736 = arith.addf %734, %735 : vector<8x32xf32>
    %737 = arith.addf %658, %736 : vector<8x32xf32>
    %738 = vector.extract_strided_slice %563 {offsets = [2, 0], sizes = [1, 32], strides = [1, 1]} : vector<6x32xf32> to vector<1x32xf32>
    %739 = vector.extract_strided_slice %563 {offsets = [3, 0], sizes = [1, 32], strides = [1, 1]} : vector<6x32xf32> to vector<1x32xf32>
    %cst_241 = arith.constant dense<0.000000e+00> : vector<8xf32>
    %740 = vector.multi_reduction <add>, %737, %cst_241 [1] : vector<8x32xf32> to vector<8xf32>
    %741 = vector.shape_cast %740 : vector<8xf32> to vector<8x1xf32>
    %cst_242 = arith.constant 3.200000e+01 : f32
    %742 = vector.broadcast %cst_242 : f32 to vector<8x1xf32>
    %743 = arith.divf %741, %742 : vector<8x1xf32>
    %744 = vector.broadcast %743 : vector<8x1xf32> to vector<8x32xf32>
    %745 = arith.subf %737, %744 : vector<8x32xf32>
    %746 = arith.mulf %745, %745 : vector<8x32xf32>
    %cst_243 = arith.constant dense<0.000000e+00> : vector<8xf32>
    %747 = vector.multi_reduction <add>, %746, %cst_243 [1] : vector<8x32xf32> to vector<8xf32>
    %748 = vector.shape_cast %747 : vector<8xf32> to vector<8x1xf32>
    %cst_244 = arith.constant 3.200000e+01 : f32
    %749 = vector.broadcast %cst_244 : f32 to vector<8x1xf32>
    %750 = arith.divf %748, %749 : vector<8x1xf32>
    %751 = vector.broadcast %743 : vector<8x1xf32> to vector<8x32xf32>
    %752 = arith.subf %737, %751 : vector<8x32xf32>
    %cst_245 = arith.constant 9.99999974E-6 : f32
    %753 = vector.broadcast %cst_245 : f32 to vector<8x1xf32>
    %754 = arith.addf %750, %753 : vector<8x1xf32>
    %755 = math.rsqrt %754 : vector<8x1xf32>
    %756 = vector.broadcast %755 : vector<8x1xf32> to vector<8x32xf32>
    %757 = arith.mulf %752, %756 : vector<8x32xf32>
    %758 = vector.broadcast %738 : vector<1x32xf32> to vector<8x32xf32>
    %759 = arith.mulf %757, %758 : vector<8x32xf32>
    %760 = vector.broadcast %739 : vector<1x32xf32> to vector<8x32xf32>
    %761 = arith.addf %759, %760 : vector<8x32xf32>
    %c1_246 = arith.constant 1 : index
    %c0_247 = arith.constant 0 : index
    %c0_248 = arith.constant 0 : index
    %762 = vector.load %arg11[%c1_246, %c0_247, %c0_248] : memref<2x32x64xbf16, #tpu.memory_space<vmem>>, vector<1x32x64xbf16>
    %763 = vector.shape_cast %762 : vector<1x32x64xbf16> to vector<32x64xbf16>
    %c1_249 = arith.constant 1 : index
    %c0_250 = arith.constant 0 : index
    %c0_251 = arith.constant 0 : index
    %764 = vector.load %arg3[%c1_249, %c0_250, %c0_251] : memref<2x1x64xf32, #tpu.memory_space<vmem>>, vector<1x1x64xf32>
    %765 = vector.shape_cast %764 : vector<1x1x64xf32> to vector<1x64xf32>
    %c1_252 = arith.constant 1 : index
    %c0_253 = arith.constant 0 : index
    %c0_254 = arith.constant 0 : index
    %766 = vector.load %arg12[%c1_252, %c0_253, %c0_254] : memref<2x64x32xbf16, #tpu.memory_space<vmem>>, vector<1x64x32xbf16>
    %767 = vector.shape_cast %766 : vector<1x64x32xbf16> to vector<64x32xbf16>
    %c1_255 = arith.constant 1 : index
    %c0_256 = arith.constant 0 : index
    %c0_257 = arith.constant 0 : index
    %768 = vector.load %arg4[%c1_255, %c0_256, %c0_257] : memref<2x1x32xf32, #tpu.memory_space<vmem>>, vector<1x1x32xf32>
    %769 = vector.shape_cast %768 : vector<1x1x32xf32> to vector<1x32xf32>
    %770 = arith.truncf %761 : vector<8x32xf32> to vector<8x32xbf16>
    %cst_258 = arith.constant dense<0.000000e+00> : vector<8x64xf32>
    %771 = tpu.matmul %770, %763, %cst_258 {dimension_numbers = #tpu.dot_dimension_numbers<[1], [0], [0], [1], [0, 0, 1, 1], [], []>} : vector<8x32xbf16>, vector<32x64xbf16>, vector<8x64xf32> -> vector<8x64xf32>
    %772 = vector.broadcast %765 : vector<1x64xf32> to vector<8x64xf32>
    %773 = arith.addf %771, %772 : vector<8x64xf32>
    %cst_259 = arith.constant 0.000000e+00 : f32
    %774 = vector.broadcast %cst_259 : f32 to vector<8x64xf32>
    %775 = arith.maximumf %773, %774 : vector<8x64xf32>
    %776 = arith.truncf %775 : vector<8x64xf32> to vector<8x64xbf16>
    %cst_260 = arith.constant dense<0.000000e+00> : vector<8x32xf32>
    %777 = tpu.matmul %776, %767, %cst_260 {dimension_numbers = #tpu.dot_dimension_numbers<[1], [0], [0], [1], [0, 0, 1, 1], [], []>} : vector<8x64xbf16>, vector<64x32xbf16>, vector<8x32xf32> -> vector<8x32xf32>
    %778 = vector.broadcast %769 : vector<1x32xf32> to vector<8x32xf32>
    %779 = arith.addf %777, %778 : vector<8x32xf32>
    %780 = arith.addf %761, %779 : vector<8x32xf32>
    %781 = vector.extract_strided_slice %563 {offsets = [4, 0], sizes = [1, 32], strides = [1, 1]} : vector<6x32xf32> to vector<1x32xf32>
    %782 = vector.extract_strided_slice %563 {offsets = [5, 0], sizes = [1, 32], strides = [1, 1]} : vector<6x32xf32> to vector<1x32xf32>
    %cst_261 = arith.constant dense<0.000000e+00> : vector<8xf32>
    %783 = vector.multi_reduction <add>, %780, %cst_261 [1] : vector<8x32xf32> to vector<8xf32>
    %784 = vector.shape_cast %783 : vector<8xf32> to vector<8x1xf32>
    %cst_262 = arith.constant 3.200000e+01 : f32
    %785 = vector.broadcast %cst_262 : f32 to vector<8x1xf32>
    %786 = arith.divf %784, %785 : vector<8x1xf32>
    %787 = vector.broadcast %786 : vector<8x1xf32> to vector<8x32xf32>
    %788 = arith.subf %780, %787 : vector<8x32xf32>
    %789 = arith.mulf %788, %788 : vector<8x32xf32>
    %cst_263 = arith.constant dense<0.000000e+00> : vector<8xf32>
    %790 = vector.multi_reduction <add>, %789, %cst_263 [1] : vector<8x32xf32> to vector<8xf32>
    %791 = vector.shape_cast %790 : vector<8xf32> to vector<8x1xf32>
    %cst_264 = arith.constant 3.200000e+01 : f32
    %792 = vector.broadcast %cst_264 : f32 to vector<8x1xf32>
    %793 = arith.divf %791, %792 : vector<8x1xf32>
    %794 = vector.broadcast %786 : vector<8x1xf32> to vector<8x32xf32>
    %795 = arith.subf %780, %794 : vector<8x32xf32>
    %cst_265 = arith.constant 9.99999974E-6 : f32
    %796 = vector.broadcast %cst_265 : f32 to vector<8x1xf32>
    %797 = arith.addf %793, %796 : vector<8x1xf32>
    %798 = math.rsqrt %797 : vector<8x1xf32>
    %799 = vector.broadcast %798 : vector<8x1xf32> to vector<8x32xf32>
    %800 = arith.mulf %795, %799 : vector<8x32xf32>
    %801 = vector.broadcast %781 : vector<1x32xf32> to vector<8x32xf32>
    %802 = arith.mulf %800, %801 : vector<8x32xf32>
    %803 = vector.broadcast %782 : vector<1x32xf32> to vector<8x32xf32>
    %804 = arith.addf %802, %803 : vector<8x32xf32>
    %805 = vector.extract_strided_slice %294 {offsets = [2, 0], sizes = [1, 32], strides = [1, 1]} : vector<4x32xf32> to vector<1x32xf32>
    %806 = vector.extract_strided_slice %294 {offsets = [3, 0], sizes = [1, 32], strides = [1, 1]} : vector<4x32xf32> to vector<1x32xf32>
    %cst_266 = arith.constant dense<0.000000e+00> : vector<8xf32>
    %807 = vector.multi_reduction <add>, %804, %cst_266 [1] : vector<8x32xf32> to vector<8xf32>
    %808 = vector.shape_cast %807 : vector<8xf32> to vector<8x1xf32>
    %cst_267 = arith.constant 3.200000e+01 : f32
    %809 = vector.broadcast %cst_267 : f32 to vector<8x1xf32>
    %810 = arith.divf %808, %809 : vector<8x1xf32>
    %811 = vector.broadcast %810 : vector<8x1xf32> to vector<8x32xf32>
    %812 = arith.subf %804, %811 : vector<8x32xf32>
    %813 = arith.mulf %812, %812 : vector<8x32xf32>
    %cst_268 = arith.constant dense<0.000000e+00> : vector<8xf32>
    %814 = vector.multi_reduction <add>, %813, %cst_268 [1] : vector<8x32xf32> to vector<8xf32>
    %815 = vector.shape_cast %814 : vector<8xf32> to vector<8x1xf32>
    %cst_269 = arith.constant 3.200000e+01 : f32
    %816 = vector.broadcast %cst_269 : f32 to vector<8x1xf32>
    %817 = arith.divf %815, %816 : vector<8x1xf32>
    %818 = vector.broadcast %810 : vector<8x1xf32> to vector<8x32xf32>
    %819 = arith.subf %804, %818 : vector<8x32xf32>
    %cst_270 = arith.constant 9.99999974E-6 : f32
    %820 = vector.broadcast %cst_270 : f32 to vector<8x1xf32>
    %821 = arith.addf %817, %820 : vector<8x1xf32>
    %822 = math.rsqrt %821 : vector<8x1xf32>
    %823 = vector.broadcast %822 : vector<8x1xf32> to vector<8x32xf32>
    %824 = arith.mulf %819, %823 : vector<8x32xf32>
    %825 = vector.broadcast %805 : vector<1x32xf32> to vector<8x32xf32>
    %826 = arith.mulf %824, %825 : vector<8x32xf32>
    %827 = vector.broadcast %806 : vector<1x32xf32> to vector<8x32xf32>
    %828 = arith.addf %826, %827 : vector<8x32xf32>
    %c0_271 = arith.constant 0 : index
    %c0_272 = arith.constant 0 : index
    %829 = vector.load %arg30[%c0_271, %c0_272] : memref<32x64xbf16, #tpu.memory_space<vmem>>, vector<32x64xbf16>
    %830 = arith.truncf %828 : vector<8x32xf32> to vector<8x32xbf16>
    %cst_273 = arith.constant dense<0.000000e+00> : vector<8x64xf32>
    %831 = tpu.matmul %830, %829, %cst_273 {dimension_numbers = #tpu.dot_dimension_numbers<[1], [0], [0], [1], [0, 0, 1, 1], [], []>} : vector<8x32xbf16>, vector<32x64xbf16>, vector<8x64xf32> -> vector<8x64xf32>
    %c0_274 = arith.constant 0 : index
    %c0_275 = arith.constant 0 : index
    %832 = vector.load %arg29[%c0_274, %c0_275] : memref<1x64xf32, #tpu.memory_space<vmem>>, vector<1x64xf32>
    %833 = vector.broadcast %832 : vector<1x64xf32> to vector<8x64xf32>
    %834 = arith.addf %831, %833 : vector<8x64xf32>
    %835 = vector.extract_strided_slice %834 {offsets = [0, 0], sizes = [1, 64], strides = [1, 1]} : vector<8x64xf32> to vector<1x64xf32>
    %836 = vector.extract_strided_slice %834 {offsets = [1, 0], sizes = [1, 64], strides = [1, 1]} : vector<8x64xf32> to vector<1x64xf32>
    %837 = vector.extract_strided_slice %834 {offsets = [2, 0], sizes = [1, 64], strides = [1, 1]} : vector<8x64xf32> to vector<1x64xf32>
    %838 = vector.extract_strided_slice %834 {offsets = [3, 0], sizes = [1, 64], strides = [1, 1]} : vector<8x64xf32> to vector<1x64xf32>
    %839 = vector.extract_strided_slice %834 {offsets = [4, 0], sizes = [1, 64], strides = [1, 1]} : vector<8x64xf32> to vector<1x64xf32>
    %840 = vector.extract_strided_slice %834 {offsets = [5, 0], sizes = [1, 64], strides = [1, 1]} : vector<8x64xf32> to vector<1x64xf32>
    %841 = vector.extract_strided_slice %834 {offsets = [6, 0], sizes = [1, 64], strides = [1, 1]} : vector<8x64xf32> to vector<1x64xf32>
    %842 = vector.extract_strided_slice %834 {offsets = [7, 0], sizes = [1, 64], strides = [1, 1]} : vector<8x64xf32> to vector<1x64xf32>
    %843 = tpu.concatenate %835, %836, %837, %838, %839, %840, %841, %842 in 1 : vector<1x64xf32>, vector<1x64xf32>, vector<1x64xf32>, vector<1x64xf32>, vector<1x64xf32>, vector<1x64xf32>, vector<1x64xf32>, vector<1x64xf32> -> vector<1x512xf32>
    %c0_276 = arith.constant 0 : index
    %c0_277 = arith.constant 0 : index
    %c0_278 = arith.constant 0 : index
    %844 = vector.load %arg32[%c0_276, %c0_277, %c0_278] : memref<1x1x512xf32, #tpu.memory_space<vmem>>, vector<1x1x512xf32>
    %845 = vector.shape_cast %844 : vector<1x1x512xf32> to vector<1x512xf32>
    %846 = vector.shape_cast %843 : vector<1x512xf32> to vector<1x1x512xf32>
    tpu.vector_store %arg32[%c0_276, %c0_277, %c0_278], %846 {strides = array<i32>} : memref<1x1x512xf32, #tpu.memory_space<vmem>>, vector<1x1x512xf32>,
    return
  }
  func.func @transform_0(%arg0: i32) -> (i32, i32, i32) {
    %c0_i32 = arith.constant 0 : i32
    %c0_i32_0 = arith.constant 0 : i32
    %c0_i32_1 = arith.constant 0 : i32
    return %arg0, %c0_i32, %c0_i32_0 : i32, i32, i32
  }
  func.func @transform_1(%arg0: i32) -> (i32, i32, i32) {
    %c0_i32 = arith.constant 0 : i32
    %c0_i32_0 = arith.constant 0 : i32
    %c0_i32_1 = arith.constant 0 : i32
    return %arg0, %c0_i32, %c0_i32_0 : i32, i32, i32
  }
  func.func @transform_2(%arg0: i32) -> (i32, i32, i32) {
    %c0_i32 = arith.constant 0 : i32
    %c0_i32_0 = arith.constant 0 : i32
    %c0_i32_1 = arith.constant 0 : i32
    %c0_i32_2 = arith.constant 0 : i32
    return %c0_i32, %c0_i32_0, %c0_i32_1 : i32, i32, i32
  }
  func.func @transform_3(%arg0: i32) -> (i32, i32, i32) {
    %c0_i32 = arith.constant 0 : i32
    %c0_i32_0 = arith.constant 0 : i32
    %c0_i32_1 = arith.constant 0 : i32
    %c0_i32_2 = arith.constant 0 : i32
    return %c0_i32, %c0_i32_0, %c0_i32_1 : i32, i32, i32
  }
  func.func @transform_4(%arg0: i32) -> (i32, i32, i32) {
    %c0_i32 = arith.constant 0 : i32
    %c0_i32_0 = arith.constant 0 : i32
    %c0_i32_1 = arith.constant 0 : i32
    %c0_i32_2 = arith.constant 0 : i32
    return %c0_i32, %c0_i32_0, %c0_i32_1 : i32, i32, i32
  }
  func.func @transform_5(%arg0: i32) -> (i32, i32, i32) {
    %c0_i32 = arith.constant 0 : i32
    %c0_i32_0 = arith.constant 0 : i32
    %c0_i32_1 = arith.constant 0 : i32
    %c0_i32_2 = arith.constant 0 : i32
    return %c0_i32, %c0_i32_0, %c0_i32_1 : i32, i32, i32
  }
  func.func @transform_6(%arg0: i32) -> (i32, i32, i32) {
    %c0_i32 = arith.constant 0 : i32
    %c0_i32_0 = arith.constant 0 : i32
    %c0_i32_1 = arith.constant 0 : i32
    %c0_i32_2 = arith.constant 0 : i32
    return %c0_i32, %c0_i32_0, %c0_i32_1 : i32, i32, i32
  }
  func.func @transform_7(%arg0: i32) -> (i32, i32, i32) {
    %c0_i32 = arith.constant 0 : i32
    %c0_i32_0 = arith.constant 0 : i32
    %c0_i32_1 = arith.constant 0 : i32
    %c0_i32_2 = arith.constant 0 : i32
    return %c0_i32, %c0_i32_0, %c0_i32_1 : i32, i32, i32
  }
  func.func @transform_8(%arg0: i32) -> (i32, i32, i32) {
    %c0_i32 = arith.constant 0 : i32
    %c0_i32_0 = arith.constant 0 : i32
    %c0_i32_1 = arith.constant 0 : i32
    %c0_i32_2 = arith.constant 0 : i32
    return %c0_i32, %c0_i32_0, %c0_i32_1 : i32, i32, i32
  }
  func.func @transform_9(%arg0: i32) -> (i32, i32, i32) {
    %c0_i32 = arith.constant 0 : i32
    %c0_i32_0 = arith.constant 0 : i32
    %c0_i32_1 = arith.constant 0 : i32
    %c0_i32_2 = arith.constant 0 : i32
    return %c0_i32, %c0_i32_0, %c0_i32_1 : i32, i32, i32
  }
  func.func @transform_10(%arg0: i32) -> (i32, i32, i32) {
    %c0_i32 = arith.constant 0 : i32
    %c0_i32_0 = arith.constant 0 : i32
    %c0_i32_1 = arith.constant 0 : i32
    %c0_i32_2 = arith.constant 0 : i32
    return %c0_i32, %c0_i32_0, %c0_i32_1 : i32, i32, i32
  }
  func.func @transform_11(%arg0: i32) -> (i32, i32, i32) {
    %c0_i32 = arith.constant 0 : i32
    %c0_i32_0 = arith.constant 0 : i32
    %c0_i32_1 = arith.constant 0 : i32
    %c0_i32_2 = arith.constant 0 : i32
    return %c0_i32, %c0_i32_0, %c0_i32_1 : i32, i32, i32
  }
  func.func @transform_12(%arg0: i32) -> (i32, i32, i32) {
    %c0_i32 = arith.constant 0 : i32
    %c0_i32_0 = arith.constant 0 : i32
    %c0_i32_1 = arith.constant 0 : i32
    %c0_i32_2 = arith.constant 0 : i32
    return %c0_i32, %c0_i32_0, %c0_i32_1 : i32, i32, i32
  }
  func.func @transform_13(%arg0: i32) -> (i32, i32, i32) {
    %c0_i32 = arith.constant 0 : i32
    %c0_i32_0 = arith.constant 0 : i32
    %c0_i32_1 = arith.constant 0 : i32
    %c0_i32_2 = arith.constant 0 : i32
    return %c0_i32, %c0_i32_0, %c0_i32_1 : i32, i32, i32
  }
  func.func @transform_14(%arg0: i32) -> (i32, i32, i32) {
    %c0_i32 = arith.constant 0 : i32
    %c0_i32_0 = arith.constant 0 : i32
    %c0_i32_1 = arith.constant 0 : i32
    %c0_i32_2 = arith.constant 0 : i32
    return %c0_i32, %c0_i32_0, %c0_i32_1 : i32, i32, i32
  }
  func.func @transform_15(%arg0: i32) -> (i32, i32, i32) {
    %c0_i32 = arith.constant 0 : i32
    %c0_i32_0 = arith.constant 0 : i32
    %c0_i32_1 = arith.constant 0 : i32
    %c0_i32_2 = arith.constant 0 : i32
    return %c0_i32, %c0_i32_0, %c0_i32_1 : i32, i32, i32
  }
  func.func @transform_16(%arg0: i32) -> (i32, i32, i32) {
    %c0_i32 = arith.constant 0 : i32
    %c0_i32_0 = arith.constant 0 : i32
    %c0_i32_1 = arith.constant 0 : i32
    %c0_i32_2 = arith.constant 0 : i32
    return %c0_i32, %c0_i32_0, %c0_i32_1 : i32, i32, i32
  }
  func.func @transform_17(%arg0: i32) -> (i32, i32) {
    %c0_i32 = arith.constant 0 : i32
    %c0_i32_0 = arith.constant 0 : i32
    %c0_i32_1 = arith.constant 0 : i32
    return %c0_i32, %c0_i32_0 : i32, i32
  }
  func.func @transform_18(%arg0: i32) -> (i32, i32) {
    %c0_i32 = arith.constant 0 : i32
    %c0_i32_0 = arith.constant 0 : i32
    %c0_i32_1 = arith.constant 0 : i32
    return %c0_i32, %c0_i32_0 : i32, i32
  }
  func.func @transform_19(%arg0: i32) -> (i32, i32, i32) {
    %c0_i32 = arith.constant 0 : i32
    %c0_i32_0 = arith.constant 0 : i32
    %c0_i32_1 = arith.constant 0 : i32
    %c0_i32_2 = arith.constant 0 : i32
    return %c0_i32, %c0_i32_0, %c0_i32_1 : i32, i32, i32
  }
  func.func @transform_20(%arg0: i32) -> (i32, i32, i32) {
    %c0_i32 = arith.constant 0 : i32
    %c0_i32_0 = arith.constant 0 : i32
    %c0_i32_1 = arith.constant 0 : i32
    %c0_i32_2 = arith.constant 0 : i32
    return %c0_i32, %c0_i32_0, %c0_i32_1 : i32, i32, i32
  }
  func.func @transform_21(%arg0: i32) -> (i32, i32, i32) {
    %c0_i32 = arith.constant 0 : i32
    %c0_i32_0 = arith.constant 0 : i32
    %c0_i32_1 = arith.constant 0 : i32
    %c0_i32_2 = arith.constant 0 : i32
    return %c0_i32, %c0_i32_0, %c0_i32_1 : i32, i32, i32
  }
  func.func @transform_22(%arg0: i32) -> (i32, i32, i32) {
    %c0_i32 = arith.constant 0 : i32
    %c0_i32_0 = arith.constant 0 : i32
    %c0_i32_1 = arith.constant 0 : i32
    %c0_i32_2 = arith.constant 0 : i32
    return %c0_i32, %c0_i32_0, %c0_i32_1 : i32, i32, i32
  }
  func.func @transform_23(%arg0: i32) -> (i32, i32, i32) {
    %c0_i32 = arith.constant 0 : i32
    %c0_i32_0 = arith.constant 0 : i32
    %c0_i32_1 = arith.constant 0 : i32
    %c0_i32_2 = arith.constant 0 : i32
    return %c0_i32, %c0_i32_0, %c0_i32_1 : i32, i32, i32
  }
  func.func @transform_24(%arg0: i32) -> (i32, i32, i32) {
    %c0_i32 = arith.constant 0 : i32
    %c0_i32_0 = arith.constant 0 : i32
    %c0_i32_1 = arith.constant 0 : i32
    %c0_i32_2 = arith.constant 0 : i32
    return %c0_i32, %c0_i32_0, %c0_i32_1 : i32, i32, i32
  }
  func.func @transform_25(%arg0: i32) -> (i32, i32, i32) {
    %c0_i32 = arith.constant 0 : i32
    %c0_i32_0 = arith.constant 0 : i32
    %c0_i32_1 = arith.constant 0 : i32
    %c0_i32_2 = arith.constant 0 : i32
    return %c0_i32, %c0_i32_0, %c0_i32_1 : i32, i32, i32
  }
  func.func @transform_26(%arg0: i32) -> (i32, i32, i32) {
    %c0_i32 = arith.constant 0 : i32
    %c0_i32_0 = arith.constant 0 : i32
    %c0_i32_1 = arith.constant 0 : i32
    %c0_i32_2 = arith.constant 0 : i32
    return %c0_i32, %c0_i32_0, %c0_i32_1 : i32, i32, i32
  }
  func.func @transform_27(%arg0: i32) -> (i32, i32, i32) {
    %c0_i32 = arith.constant 0 : i32
    %c0_i32_0 = arith.constant 0 : i32
    %c0_i32_1 = arith.constant 0 : i32
    %c0_i32_2 = arith.constant 0 : i32
    return %c0_i32, %c0_i32_0, %c0_i32_1 : i32, i32, i32
  }
  func.func @transform_28(%arg0: i32) -> (i32, i32) {
    %c0_i32 = arith.constant 0 : i32
    %c0_i32_0 = arith.constant 0 : i32
    %c0_i32_1 = arith.constant 0 : i32
    return %c0_i32, %c0_i32_0 : i32, i32
  }
  func.func @transform_29(%arg0: i32) -> (i32, i32) {
    %c0_i32 = arith.constant 0 : i32
    %c0_i32_0 = arith.constant 0 : i32
    %c0_i32_1 = arith.constant 0 : i32
    return %c0_i32, %c0_i32_0 : i32, i32
  }
  func.func @transform_30(%arg0: i32) -> (i32, i32) {
    %c0_i32 = arith.constant 0 : i32
    %c0_i32_0 = arith.constant 0 : i32
    %c0_i32_1 = arith.constant 0 : i32
    return %c0_i32, %c0_i32_0 : i32, i32
  }
  func.func @transform_31(%arg0: i32) -> (i32, i32, i32) {
    %c0_i32 = arith.constant 0 : i32
    %c0_i32_0 = arith.constant 0 : i32
    %c0_i32_1 = arith.constant 0 : i32
    return %arg0, %c0_i32, %c0_i32_0 : i32, i32, i32
  }
}

</mosaic_0001>

<llo_original>
// kernel: transformer_forecasting.1
$region0: #{transformer_forecasting.1}
  #allocation0 [shape = 'u32[]', space=smem, size = 0x4, offset = 0x4, fixed_abs, tag = 'smem constant byte address 0x4 - core index']
  #allocation1 [shape = 'u32[72,128]{1,0:T(1,128)}', space=vmem, size = 0x9000, scoped, tag = 'internal scratch']
  %s0 = inlined_call_operand.smem [shape: u32[32], index: -1, kind: input, shape index: {}]
  %s1 = sld [smem:[%s0]]
  %s2 = scalar_lea.smem %s0, 1
  %s3 = sld [smem:[%s2]]
  %s4 = scalar_lea.smem %s0, 2
  %s5 = sld [smem:[%s4]]
  %s6 = scalar_lea.smem %s0, 3
  %s7 = sld [smem:[%s6]]
  %s8 = scalar_lea.smem %s0, 4
  %s9 = sld [smem:[%s8]]
  %s10 = scalar_lea.smem %s0, 5
  %s11 = sld [smem:[%s10]]
  %s12 = scalar_lea.smem %s0, 6
  %s13 = sld [smem:[%s12]]
  %s14 = scalar_lea.smem %s0, 7
  %s15 = sld [smem:[%s14]]
  %s16 = scalar_lea.smem %s0, 8
  %s17 = sld [smem:[%s16]]
  %s18 = scalar_lea.smem %s0, 9
  %s19 = sld [smem:[%s18]]
  %s20 = scalar_lea.smem %s0, 10
  %s21 = sld [smem:[%s20]]
  %s22 = scalar_lea.smem %s0, 11
  %s23 = sld [smem:[%s22]]
  %s24 = scalar_lea.smem %s0, 12
  %s25 = sld [smem:[%s24]]
  %s26 = scalar_lea.smem %s0, 13
  %s27 = sld [smem:[%s26]]
  %s28 = scalar_lea.smem %s0, 14
  %s29 = sld [smem:[%s28]]
  %s30 = scalar_lea.smem %s0, 15
  %s31 = sld [smem:[%s30]]
  %s32 = scalar_lea.smem %s0, 16
  %s33 = sld [smem:[%s32]]
  %s34 = scalar_lea.smem %s0, 17
  %s35 = sld [smem:[%s34]]
  %s36 = scalar_lea.smem %s0, 18
  %s37 = sld [smem:[%s36]]
  %s38 = scalar_lea.smem %s0, 19
  %s39 = sld [smem:[%s38]]
  %s40 = scalar_lea.smem %s0, 20
  %s41 = sld [smem:[%s40]]
  %s42 = scalar_lea.smem %s0, 21
  %s43 = sld [smem:[%s42]]
  %s44 = scalar_lea.smem %s0, 22
  %s45 = sld [smem:[%s44]]
  %s46 = scalar_lea.smem %s0, 23
  %s47 = sld [smem:[%s46]]
  %s48 = scalar_lea.smem %s0, 24
  %s49 = sld [smem:[%s48]]
  %s50 = scalar_lea.smem %s0, 25
  %s51 = sld [smem:[%s50]]
  %s52 = scalar_lea.smem %s0, 26
  %s53 = sld [smem:[%s52]]
  %s54 = scalar_lea.smem %s0, 27
  %s55 = sld [smem:[%s54]]
  %s56 = scalar_lea.smem %s0, 28
  %s57 = sld [smem:[%s56]]
  %s58 = scalar_lea.smem %s0, 29
  %s59 = sld [smem:[%s58]]
  %s60 = scalar_lea.smem %s0, 30
  %s61 = sld [smem:[%s60]]
  %s62 = scalar_lea.smem %s0, 31
  %s63 = sld [smem:[%s62]]
  %s64 = sld [smem:[#allocation0]]
  $region157: #{transformer_forecasting.1} parent=0
    _
  %s66 = ssub.s32 1, %s64
  %s67 = scalar_select 0, %s66, %s64
  loop: start=0, step=1, limit=4
  $region2: #{transformer_forecasting.1} parent=0 // loop_pre_header
    _
  $region3: #{transformer_forecasting.1} parent=0 // loop_header
    %s69 = sphi 0, %s73
    %p70 = scmp.ge.s32.totalorder %s69, 4
    %s79 = sphi 0, %s81
    %s82 = sphi 0, %s79
    %s83 = sphi 0, %s82
    %s99 = sphi 0, %s83
    %s105 = sphi 0, %s107
    %s108 = sphi 0, %s105
    %s109 = sphi 0, %s108
    %s125 = sphi 0, %s109
    %s129 = sphi 0, %s129
    %s131 = sphi 0, %s129
    %s132 = sphi 0, %s131
    %s146 = sphi 0, %s132
    %s150 = sphi 0, %s150
    %s152 = sphi 0, %s150
    %s153 = sphi 0, %s152
    %s167 = sphi 0, %s153
    %s171 = sphi 0, %s171
    %s173 = sphi 0, %s171
    %s174 = sphi 0, %s173
    %s188 = sphi 0, %s174
    %s192 = sphi 0, %s192
    %s194 = sphi 0, %s192
    %s195 = sphi 0, %s194
    %s209 = sphi 0, %s195
    %s213 = sphi 0, %s213
    %s215 = sphi 0, %s213
    %s216 = sphi 0, %s215
    %s230 = sphi 0, %s216
    %s234 = sphi 0, %s234
    %s236 = sphi 0, %s234
    %s237 = sphi 0, %s236
    %s251 = sphi 0, %s237
    %s255 = sphi 0, %s255
    %s257 = sphi 0, %s255
    %s258 = sphi 0, %s257
    %s272 = sphi 0, %s258
    %s276 = sphi 0, %s276
    %s278 = sphi 0, %s276
    %s279 = sphi 0, %s278
    %s293 = sphi 0, %s279
    %s297 = sphi 0, %s297
    %s299 = sphi 0, %s297
    %s300 = sphi 0, %s299
    %s314 = sphi 0, %s300
    %s318 = sphi 0, %s318
    %s320 = sphi 0, %s318
    %s321 = sphi 0, %s320
    %s335 = sphi 0, %s321
    %s339 = sphi 0, %s339
    %s341 = sphi 0, %s339
    %s342 = sphi 0, %s341
    %s356 = sphi 0, %s342
    %s360 = sphi 0, %s360
    %s362 = sphi 0, %s360
    %s363 = sphi 0, %s362
    %s377 = sphi 0, %s363
    %s381 = sphi 0, %s381
    %s383 = sphi 0, %s381
    %s384 = sphi 0, %s383
    %s398 = sphi 0, %s384
    %s402 = sphi 0, %s402
    %s404 = sphi 0, %s402
    %s405 = sphi 0, %s404
    %s419 = sphi 0, %s405
    %s423 = sphi 0, %s423
    %s425 = sphi 0, %s423
    %s426 = sphi 0, %s425
    %s440 = sphi 0, %s426
    %s444 = sphi 0, %s444
    %s446 = sphi 0, %s444
    %s447 = sphi 0, %s446
    %s461 = sphi 0, %s447
    %s465 = sphi 0, %s465
    %s467 = sphi 0, %s465
    %s468 = sphi 0, %s467
    %s482 = sphi 0, %s468
    %s486 = sphi 0, %s486
    %s488 = sphi 0, %s486
    %s489 = sphi 0, %s488
    %s503 = sphi 0, %s489
    %s507 = sphi 0, %s507
    %s509 = sphi 0, %s507
    %s510 = sphi 0, %s509
    %s524 = sphi 0, %s510
    %s528 = sphi 0, %s528
    %s530 = sphi 0, %s528
    %s531 = sphi 0, %s530
    %s545 = sphi 0, %s531
    %s549 = sphi 0, %s549
    %s551 = sphi 0, %s549
    %s552 = sphi 0, %s551
    %s566 = sphi 0, %s552
    %s570 = sphi 0, %s570
    %s572 = sphi 0, %s570
    %s573 = sphi 0, %s572
    %s587 = sphi 0, %s573
    %s591 = sphi 0, %s591
    %s593 = sphi 0, %s591
    %s594 = sphi 0, %s593
    %s608 = sphi 0, %s594
    %s612 = sphi 0, %s612
    %s614 = sphi 0, %s612
    %s615 = sphi 0, %s614
    %s629 = sphi 0, %s615
    %s633 = sphi 0, %s633
    %s635 = sphi 0, %s633
    %s636 = sphi 0, %s635
    %s650 = sphi 0, %s636
    %s654 = sphi 0, %s654
    %s656 = sphi 0, %s654
    %s657 = sphi 0, %s656
    %s671 = sphi 0, %s657
    %s675 = sphi 0, %s675
    %s677 = sphi 0, %s675
    %s678 = sphi 0, %s677
    %s692 = sphi 0, %s678
    %s696 = sphi 0, %s696
    %s698 = sphi 0, %s696
    %s699 = sphi 0, %s698
    %s713 = sphi 0, %s699
    %s717 = sphi 0, %s717
    %s719 = sphi 0, %s717
    %s720 = sphi 0, %s719
    %s734 = sphi 0, %s720
    %s740 = sphi 0, %s742
    %s743 = sphi 0, %s740
    %s744 = sphi 0, %s743
    %s760 = sphi 0, %s744
  $region4: #{transformer_forecasting.1} parent=0 // loop_header_branch
    %72 = sbr.rel (%p70) target = $region8
  $region5: #{transformer_forecasting.1} parent=0 // loop_body
    %s74 = ssub.s32 %s69, 1
    %s75 = ssub.s32 %s69, 2
    %s76 = sadd.s32 %s69, 1
    %s77 = ssub.s32 %s69, %s76
    %p78 = scmp.eq.s32.totalorder %s77, 0
    %s80 = sadd.s32 %s79, 1
    %s81 = scalar_select %p78, %s79, %s80
    %p84 = pneg %p78
    %p85 = scmp.eq.s32.totalorder %s69, 1
    %p86 = por %p84, %p85
    %p87 = scmp.ne.s32.totalorder %s79, %s82
    %p88 = scmp.eq.s32.totalorder %s69, 0
    %p89 = por %p87, %p88
    %p90 = scmp.ne.s32.totalorder %s79, %s82
    %p91 = scmp.eq.s32.totalorder %s74, 1
    %p92 = por %p90, %p91
    %p93 = scmp.ne.s32.totalorder %s82, %s83
    %p94 = scmp.eq.s32.totalorder %s74, 0
    %p95 = por %p93, %p94
    %p96 = scmp.ne.s32.totalorder %s82, %s83
    %p97 = scmp.eq.s32.totalorder %s75, 1
    %p98 = por %p96, %p97
    %p100 = scmp.ne.s32.totalorder %s83, %s99
    %p101 = scmp.eq.s32.totalorder %s75, 0
    %p102 = por %p100, %p101
    %s103 = ssub.s32 %s69, %s76
    %p104 = scmp.eq.s32.totalorder %s103, 0
    %s106 = sadd.s32 %s105, 1
    %s107 = scalar_select %p104, %s105, %s106
    %p110 = pneg %p104
    %p111 = scmp.eq.s32.totalorder %s69, 1
    %p112 = por %p110, %p111
    %p113 = scmp.ne.s32.totalorder %s105, %s108
    %p114 = scmp.eq.s32.totalorder %s69, 0
    %p115 = por %p113, %p114
    %p116 = scmp.ne.s32.totalorder %s105, %s108
    %p117 = scmp.eq.s32.totalorder %s74, 1
    %p118 = por %p116, %p117
    %p119 = scmp.ne.s32.totalorder %s108, %s109
    %p120 = scmp.eq.s32.totalorder %s74, 0
    %p121 = por %p119, %p120
    %p122 = scmp.ne.s32.totalorder %s108, %s109
    %p123 = scmp.eq.s32.totalorder %s75, 1
    %p124 = por %p122, %p123
    %p126 = scmp.ne.s32.totalorder %s109, %s125
    %p127 = scmp.eq.s32.totalorder %s75, 0
    %p128 = por %p126, %p127
    %s130 = sadd.s32 %s129, 1
    %p133 = scmp.eq.s32.totalorder %s69, 1
    %p134 = scmp.ne.s32.totalorder %s129, %s131
    %p135 = scmp.eq.s32.totalorder %s69, 0
    %p136 = por %p134, %p135
    %p137 = scmp.ne.s32.totalorder %s129, %s131
    %p138 = scmp.eq.s32.totalorder %s74, 1
    %p139 = por %p137, %p138
    %p140 = scmp.ne.s32.totalorder %s131, %s132
    %p141 = scmp.eq.s32.totalorder %s74, 0
    %p142 = por %p140, %p141
    %p143 = scmp.ne.s32.totalorder %s131, %s132
    %p144 = scmp.eq.s32.totalorder %s75, 1
    %p145 = por %p143, %p144
    %p147 = scmp.ne.s32.totalorder %s132, %s146
    %p148 = scmp.eq.s32.totalorder %s75, 0
    %p149 = por %p147, %p148
    %s151 = sadd.s32 %s150, 1
    %p154 = scmp.eq.s32.totalorder %s69, 1
    %p155 = scmp.ne.s32.totalorder %s150, %s152
    %p156 = scmp.eq.s32.totalorder %s69, 0
    %p157 = por %p155, %p156
    %p158 = scmp.ne.s32.totalorder %s150, %s152
    %p159 = scmp.eq.s32.totalorder %s74, 1
    %p160 = por %p158, %p159
    %p161 = scmp.ne.s32.totalorder %s152, %s153
    %p162 = scmp.eq.s32.totalorder %s74, 0
    %p163 = por %p161, %p162
    %p164 = scmp.ne.s32.totalorder %s152, %s153
    %p165 = scmp.eq.s32.totalorder %s75, 1
    %p166 = por %p164, %p165
    %p168 = scmp.ne.s32.totalorder %s153, %s167
    %p169 = scmp.eq.s32.totalorder %s75, 0
    %p170 = por %p168, %p169
    %s172 = sadd.s32 %s171, 1
    %p175 = scmp.eq.s32.totalorder %s69, 1
    %p176 = scmp.ne.s32.totalorder %s171, %s173
    %p177 = scmp.eq.s32.totalorder %s69, 0
    %p178 = por %p176, %p177
    %p179 = scmp.ne.s32.totalorder %s171, %s173
    %p180 = scmp.eq.s32.totalorder %s74, 1
    %p181 = por %p179, %p180
    %p182 = scmp.ne.s32.totalorder %s173, %s174
    %p183 = scmp.eq.s32.totalorder %s74, 0
    %p184 = por %p182, %p183
    %p185 = scmp.ne.s32.totalorder %s173, %s174
    %p186 = scmp.eq.s32.totalorder %s75, 1
    %p187 = por %p185, %p186
    %p189 = scmp.ne.s32.totalorder %s174, %s188
    %p190 = scmp.eq.s32.totalorder %s75, 0
    %p191 = por %p189, %p190
    %s193 = sadd.s32 %s192, 1
    %p196 = scmp.eq.s32.totalorder %s69, 1
    %p197 = scmp.ne.s32.totalorder %s192, %s194
    %p198 = scmp.eq.s32.totalorder %s69, 0
    %p199 = por %p197, %p198
    %p200 = scmp.ne.s32.totalorder %s192, %s194
    %p201 = scmp.eq.s32.totalorder %s74, 1
    %p202 = por %p200, %p201
    %p203 = scmp.ne.s32.totalorder %s194, %s195
    %p204 = scmp.eq.s32.totalorder %s74, 0
    %p205 = por %p203, %p204
    %p206 = scmp.ne.s32.totalorder %s194, %s195
    %p207 = scmp.eq.s32.totalorder %s75, 1
    %p208 = por %p206, %p207
    %p210 = scmp.ne.s32.totalorder %s195, %s209
    %p211 = scmp.eq.s32.totalorder %s75, 0
    %p212 = por %p210, %p211
    %s214 = sadd.s32 %s213, 1
    %p217 = scmp.eq.s32.totalorder %s69, 1
    %p218 = scmp.ne.s32.totalorder %s213, %s215
    %p219 = scmp.eq.s32.totalorder %s69, 0
    %p220 = por %p218, %p219
    %p221 = scmp.ne.s32.totalorder %s213, %s215
    %p222 = scmp.eq.s32.totalorder %s74, 1
    %p223 = por %p221, %p222
    %p224 = scmp.ne.s32.totalorder %s215, %s216
    %p225 = scmp.eq.s32.totalorder %s74, 0
    %p226 = por %p224, %p225
    %p227 = scmp.ne.s32.totalorder %s215, %s216
    %p228 = scmp.eq.s32.totalorder %s75, 1
    %p229 = por %p227, %p228
    %p231 = scmp.ne.s32.totalorder %s216, %s230
    %p232 = scmp.eq.s32.totalorder %s75, 0
    %p233 = por %p231, %p232
    %s235 = sadd.s32 %s234, 1
    %p238 = scmp.eq.s32.totalorder %s69, 1
    %p239 = scmp.ne.s32.totalorder %s234, %s236
    %p240 = scmp.eq.s32.totalorder %s69, 0
    %p241 = por %p239, %p240
    %p242 = scmp.ne.s32.totalorder %s234, %s236
    %p243 = scmp.eq.s32.totalorder %s74, 1
    %p244 = por %p242, %p243
    %p245 = scmp.ne.s32.totalorder %s236, %s237
    %p246 = scmp.eq.s32.totalorder %s74, 0
    %p247 = por %p245, %p246
    %p248 = scmp.ne.s32.totalorder %s236, %s237
    %p249 = scmp.eq.s32.totalorder %s75, 1
    %p250 = por %p248, %p249
    %p252 = scmp.ne.s32.totalorder %s237, %s251
    %p253 = scmp.eq.s32.totalorder %s75, 0
    %p254 = por %p252, %p253
    %s256 = sadd.s32 %s255, 1
    %p259 = scmp.eq.s32.totalorder %s69, 1
    %p260 = scmp.ne.s32.totalorder %s255, %s257
    %p261 = scmp.eq.s32.totalorder %s69, 0
    %p262 = por %p260, %p261
    %p263 = scmp.ne.s32.totalorder %s255, %s257
    %p264 = scmp.eq.s32.totalorder %s74, 1
    %p265 = por %p263, %p264
    %p266 = scmp.ne.s32.totalorder %s257, %s258
    %p267 = scmp.eq.s32.totalorder %s74, 0
    %p268 = por %p266, %p267
    %p269 = scmp.ne.s32.totalorder %s257, %s258
    %p270 = scmp.eq.s32.totalorder %s75, 1
    %p271 = por %p269, %p270
    %p273 = scmp.ne.s32.totalorder %s258, %s272
    %p274 = scmp.eq.s32.totalorder %s75, 0
    %p275 = por %p273, %p274
    %s277 = sadd.s32 %s276, 1
    %p280 = scmp.eq.s32.totalorder %s69, 1
    %p281 = scmp.ne.s32.totalorder %s276, %s278
    %p282 = scmp.eq.s32.totalorder %s69, 0
    %p283 = por %p281, %p282
    %p284 = scmp.ne.s32.totalorder %s276, %s278
    %p285 = scmp.eq.s32.totalorder %s74, 1
    %p286 = por %p284, %p285
    %p287 = scmp.ne.s32.totalorder %s278, %s279
    %p288 = scmp.eq.s32.totalorder %s74, 0
    %p289 = por %p287, %p288
    %p290 = scmp.ne.s32.totalorder %s278, %s279
    %p291 = scmp.eq.s32.totalorder %s75, 1
    %p292 = por %p290, %p291
    %p294 = scmp.ne.s32.totalorder %s279, %s293
    %p295 = scmp.eq.s32.totalorder %s75, 0
    %p296 = por %p294, %p295
    %s298 = sadd.s32 %s297, 1
    %p301 = scmp.eq.s32.totalorder %s69, 1
    %p302 = scmp.ne.s32.totalorder %s297, %s299
    %p303 = scmp.eq.s32.totalorder %s69, 0
    %p304 = por %p302, %p303
    %p305 = scmp.ne.s32.totalorder %s297, %s299
    %p306 = scmp.eq.s32.totalorder %s74, 1
    %p307 = por %p305, %p306
    %p308 = scmp.ne.s32.totalorder %s299, %s300
    %p309 = scmp.eq.s32.totalorder %s74, 0
    %p310 = por %p308, %p309
    %p311 = scmp.ne.s32.totalorder %s299, %s300
    %p312 = scmp.eq.s32.totalorder %s75, 1
    %p313 = por %p311, %p312
    %p315 = scmp.ne.s32.totalorder %s300, %s314
    %p316 = scmp.eq.s32.totalorder %s75, 0
    %p317 = por %p315, %p316
    %s319 = sadd.s32 %s318, 1
    %p322 = scmp.eq.s32.totalorder %s69, 1
    %p323 = scmp.ne.s32.totalorder %s318, %s320
    %p324 = scmp.eq.s32.totalorder %s69, 0
    %p325 = por %p323, %p324
    %p326 = scmp.ne.s32.totalorder %s318, %s320
    %p327 = scmp.eq.s32.totalorder %s74, 1
    %p328 = por %p326, %p327
    %p329 = scmp.ne.s32.totalorder %s320, %s321
    %p330 = scmp.eq.s32.totalorder %s74, 0
    %p331 = por %p329, %p330
    %p332 = scmp.ne.s32.totalorder %s320, %s321
    %p333 = scmp.eq.s32.totalorder %s75, 1
    %p334 = por %p332, %p333
    %p336 = scmp.ne.s32.totalorder %s321, %s335
    %p337 = scmp.eq.s32.totalorder %s75, 0
    %p338 = por %p336, %p337
    %s340 = sadd.s32 %s339, 1
    %p343 = scmp.eq.s32.totalorder %s69, 1
    %p344 = scmp.ne.s32.totalorder %s339, %s341
    %p345 = scmp.eq.s32.totalorder %s69, 0
    %p346 = por %p344, %p345
    %p347 = scmp.ne.s32.totalorder %s339, %s341
    %p348 = scmp.eq.s32.totalorder %s74, 1
    %p349 = por %p347, %p348
    %p350 = scmp.ne.s32.totalorder %s341, %s342
    %p351 = scmp.eq.s32.totalorder %s74, 0
    %p352 = por %p350, %p351
    %p353 = scmp.ne.s32.totalorder %s341, %s342
    %p354 = scmp.eq.s32.totalorder %s75, 1
    %p355 = por %p353, %p354
    %p357 = scmp.ne.s32.totalorder %s342, %s356
    %p358 = scmp.eq.s32.totalorder %s75, 0
    %p359 = por %p357, %p358
    %s361 = sadd.s32 %s360, 1
    %p364 = scmp.eq.s32.totalorder %s69, 1
    %p365 = scmp.ne.s32.totalorder %s360, %s362
    %p366 = scmp.eq.s32.totalorder %s69, 0
    %p367 = por %p365, %p366
    %p368 = scmp.ne.s32.totalorder %s360, %s362
    %p369 = scmp.eq.s32.totalorder %s74, 1
    %p370 = por %p368, %p369
    %p371 = scmp.ne.s32.totalorder %s362, %s363
    %p372 = scmp.eq.s32.totalorder %s74, 0
    %p373 = por %p371, %p372
    %p374 = scmp.ne.s32.totalorder %s362, %s363
    %p375 = scmp.eq.s32.totalorder %s75, 1
    %p376 = por %p374, %p375
    %p378 = scmp.ne.s32.totalorder %s363, %s377
    %p379 = scmp.eq.s32.totalorder %s75, 0
    %p380 = por %p378, %p379
    %s382 = sadd.s32 %s381, 1
    %p385 = scmp.eq.s32.totalorder %s69, 1
    %p386 = scmp.ne.s32.totalorder %s381, %s383
    %p387 = scmp.eq.s32.totalorder %s69, 0
    %p388 = por %p386, %p387
    %p389 = scmp.ne.s32.totalorder %s381, %s383
    %p390 = scmp.eq.s32.totalorder %s74, 1
    %p391 = por %p389, %p390
    %p392 = scmp.ne.s32.totalorder %s383, %s384
    %p393 = scmp.eq.s32.totalorder %s74, 0
    %p394 = por %p392, %p393
    %p395 = scmp.ne.s32.totalorder %s383, %s384
    %p396 = scmp.eq.s32.totalorder %s75, 1
    %p397 = por %p395, %p396
    %p399 = scmp.ne.s32.totalorder %s384, %s398
    %p400 = scmp.eq.s32.totalorder %s75, 0
    %p401 = por %p399, %p400
    %s403 = sadd.s32 %s402, 1
    %p406 = scmp.eq.s32.totalorder %s69, 1
    %p407 = scmp.ne.s32.totalorder %s402, %s404
    %p408 = scmp.eq.s32.totalorder %s69, 0
    %p409 = por %p407, %p408
    %p410 = scmp.ne.s32.totalorder %s402, %s404
    %p411 = scmp.eq.s32.totalorder %s74, 1
    %p412 = por %p410, %p411
    %p413 = scmp.ne.s32.totalorder %s404, %s405
    %p414 = scmp.eq.s32.totalorder %s74, 0
    %p415 = por %p413, %p414
    %p416 = scmp.ne.s32.totalorder %s404, %s405
    %p417 = scmp.eq.s32.totalorder %s75, 1
    %p418 = por %p416, %p417
    %p420 = scmp.ne.s32.totalorder %s405, %s419
    %p421 = scmp.eq.s32.totalorder %s75, 0
    %p422 = por %p420, %p421
    %s424 = sadd.s32 %s423, 1
    %p427 = scmp.eq.s32.totalorder %s69, 1
    %p428 = scmp.ne.s32.totalorder %s423, %s425
    %p429 = scmp.eq.s32.totalorder %s69, 0
    %p430 = por %p428, %p429
    %p431 = scmp.ne.s32.totalorder %s423, %s425
    %p432 = scmp.eq.s32.totalorder %s74, 1
    %p433 = por %p431, %p432
    %p434 = scmp.ne.s32.totalorder %s425, %s426
    %p435 = scmp.eq.s32.totalorder %s74, 0
    %p436 = por %p434, %p435
    %p437 = scmp.ne.s32.totalorder %s425, %s426
    %p438 = scmp.eq.s32.totalorder %s75, 1
    %p439 = por %p437, %p438
    %p441 = scmp.ne.s32.totalorder %s426, %s440
    %p442 = scmp.eq.s32.totalorder %s75, 0
    %p443 = por %p441, %p442
    %s445 = sadd.s32 %s444, 1
    %p448 = scmp.eq.s32.totalorder %s69, 1
    %p449 = scmp.ne.s32.totalorder %s444, %s446
    %p450 = scmp.eq.s32.totalorder %s69, 0
    %p451 = por %p449, %p450
    %p452 = scmp.ne.s32.totalorder %s444, %s446
    %p453 = scmp.eq.s32.totalorder %s74, 1
    %p454 = por %p452, %p453
    %p455 = scmp.ne.s32.totalorder %s446, %s447
    %p456 = scmp.eq.s32.totalorder %s74, 0
    %p457 = por %p455, %p456
    %p458 = scmp.ne.s32.totalorder %s446, %s447
    %p459 = scmp.eq.s32.totalorder %s75, 1
    %p460 = por %p458, %p459
    %p462 = scmp.ne.s32.totalorder %s447, %s461
    %p463 = scmp.eq.s32.totalorder %s75, 0
    %p464 = por %p462, %p463
    %s466 = sadd.s32 %s465, 1
    %p469 = scmp.eq.s32.totalorder %s69, 1
    %p470 = scmp.ne.s32.totalorder %s465, %s467
    %p471 = scmp.eq.s32.totalorder %s69, 0
    %p472 = por %p470, %p471
    %p473 = scmp.ne.s32.totalorder %s465, %s467
    %p474 = scmp.eq.s32.totalorder %s74, 1
    %p475 = por %p473, %p474
    %p476 = scmp.ne.s32.totalorder %s467, %s468
    %p477 = scmp.eq.s32.totalorder %s74, 0
    %p478 = por %p476, %p477
    %p479 = scmp.ne.s32.totalorder %s467, %s468
    %p480 = scmp.eq.s32.totalorder %s75, 1
    %p481 = por %p479, %p480
    %p483 = scmp.ne.s32.totalorder %s468, %s482
    %p484 = scmp.eq.s32.totalorder %s75, 0
    %p485 = por %p483, %p484
    %s487 = sadd.s32 %s486, 1
    %p490 = scmp.eq.s32.totalorder %s69, 1
    %p491 = scmp.ne.s32.totalorder %s486, %s488
    %p492 = scmp.eq.s32.totalorder %s69, 0
    %p493 = por %p491, %p492
    %p494 = scmp.ne.s32.totalorder %s486, %s488
    %p495 = scmp.eq.s32.totalorder %s74, 1
    %p496 = por %p494, %p495
    %p497 = scmp.ne.s32.totalorder %s488, %s489
    %p498 = scmp.eq.s32.totalorder %s74, 0
    %p499 = por %p497, %p498
    %p500 = scmp.ne.s32.totalorder %s488, %s489
    %p501 = scmp.eq.s32.totalorder %s75, 1
    %p502 = por %p500, %p501
    %p504 = scmp.ne.s32.totalorder %s489, %s503
    %p505 = scmp.eq.s32.totalorder %s75, 0
    %p506 = por %p504, %p505
    %s508 = sadd.s32 %s507, 1
    %p511 = scmp.eq.s32.totalorder %s69, 1
    %p512 = scmp.ne.s32.totalorder %s507, %s509
    %p513 = scmp.eq.s32.totalorder %s69, 0
    %p514 = por %p512, %p513
    %p515 = scmp.ne.s32.totalorder %s507, %s509
    %p516 = scmp.eq.s32.totalorder %s74, 1
    %p517 = por %p515, %p516
    %p518 = scmp.ne.s32.totalorder %s509, %s510
    %p519 = scmp.eq.s32.totalorder %s74, 0
    %p520 = por %p518, %p519
    %p521 = scmp.ne.s32.totalorder %s509, %s510
    %p522 = scmp.eq.s32.totalorder %s75, 1
    %p523 = por %p521, %p522
    %p525 = scmp.ne.s32.totalorder %s510, %s524
    %p526 = scmp.eq.s32.totalorder %s75, 0
    %p527 = por %p525, %p526
    %s529 = sadd.s32 %s528, 1
    %p532 = scmp.eq.s32.totalorder %s69, 1
    %p533 = scmp.ne.s32.totalorder %s528, %s530
    %p534 = scmp.eq.s32.totalorder %s69, 0
    %p535 = por %p533, %p534
    %p536 = scmp.ne.s32.totalorder %s528, %s530
    %p537 = scmp.eq.s32.totalorder %s74, 1
    %p538 = por %p536, %p537
    %p539 = scmp.ne.s32.totalorder %s530, %s531
    %p540 = scmp.eq.s32.totalorder %s74, 0
    %p541 = por %p539, %p540
    %p542 = scmp.ne.s32.totalorder %s530, %s531
    %p543 = scmp.eq.s32.totalorder %s75, 1
    %p544 = por %p542, %p543
    %p546 = scmp.ne.s32.totalorder %s531, %s545
    %p547 = scmp.eq.s32.totalorder %s75, 0
    %p548 = por %p546, %p547
    %s550 = sadd.s32 %s549, 1
    %p553 = scmp.eq.s32.totalorder %s69, 1
    %p554 = scmp.ne.s32.totalorder %s549, %s551
    %p555 = scmp.eq.s32.totalorder %s69, 0
    %p556 = por %p554, %p555
    %p557 = scmp.ne.s32.totalorder %s549, %s551
    %p558 = scmp.eq.s32.totalorder %s74, 1
    %p559 = por %p557, %p558
    %p560 = scmp.ne.s32.totalorder %s551, %s552
    %p561 = scmp.eq.s32.totalorder %s74, 0
    %p562 = por %p560, %p561
    %p563 = scmp.ne.s32.totalorder %s551, %s552
    %p564 = scmp.eq.s32.totalorder %s75, 1
    %p565 = por %p563, %p564
    %p567 = scmp.ne.s32.totalorder %s552, %s566
    %p568 = scmp.eq.s32.totalorder %s75, 0
    %p569 = por %p567, %p568
    %s571 = sadd.s32 %s570, 1
    %p574 = scmp.eq.s32.totalorder %s69, 1
    %p575 = scmp.ne.s32.totalorder %s570, %s572
    %p576 = scmp.eq.s32.totalorder %s69, 0
    %p577 = por %p575, %p576
    %p578 = scmp.ne.s32.totalorder %s570, %s572
    %p579 = scmp.eq.s32.totalorder %s74, 1
    %p580 = por %p578, %p579
    %p581 = scmp.ne.s32.totalorder %s572, %s573
    %p582 = scmp.eq.s32.totalorder %s74, 0
    %p583 = por %p581, %p582
    %p584 = scmp.ne.s32.totalorder %s572, %s573
    %p585 = scmp.eq.s32.totalorder %s75, 1
    %p586 = por %p584, %p585
    %p588 = scmp.ne.s32.totalorder %s573, %s587
    %p589 = scmp.eq.s32.totalorder %s75, 0
    %p590 = por %p588, %p589
    %s592 = sadd.s32 %s591, 1
    %p595 = scmp.eq.s32.totalorder %s69, 1
    %p596 = scmp.ne.s32.totalorder %s591, %s593
    %p597 = scmp.eq.s32.totalorder %s69, 0
    %p598 = por %p596, %p597
    %p599 = scmp.ne.s32.totalorder %s591, %s593
    %p600 = scmp.eq.s32.totalorder %s74, 1
    %p601 = por %p599, %p600
    %p602 = scmp.ne.s32.totalorder %s593, %s594
    %p603 = scmp.eq.s32.totalorder %s74, 0
    %p604 = por %p602, %p603
    %p605 = scmp.ne.s32.totalorder %s593, %s594
    %p606 = scmp.eq.s32.totalorder %s75, 1
    %p607 = por %p605, %p606
    %p609 = scmp.ne.s32.totalorder %s594, %s608
    %p610 = scmp.eq.s32.totalorder %s75, 0
    %p611 = por %p609, %p610
    %s613 = sadd.s32 %s612, 1
    %p616 = scmp.eq.s32.totalorder %s69, 1
    %p617 = scmp.ne.s32.totalorder %s612, %s614
    %p618 = scmp.eq.s32.totalorder %s69, 0
    %p619 = por %p617, %p618
    %p620 = scmp.ne.s32.totalorder %s612, %s614
    %p621 = scmp.eq.s32.totalorder %s74, 1
    %p622 = por %p620, %p621
    %p623 = scmp.ne.s32.totalorder %s614, %s615
    %p624 = scmp.eq.s32.totalorder %s74, 0
    %p625 = por %p623, %p624
    %p626 = scmp.ne.s32.totalorder %s614, %s615
    %p627 = scmp.eq.s32.totalorder %s75, 1
    %p628 = por %p626, %p627
    %p630 = scmp.ne.s32.totalorder %s615, %s629
    %p631 = scmp.eq.s32.totalorder %s75, 0
    %p632 = por %p630, %p631
    %s634 = sadd.s32 %s633, 1
    %p637 = scmp.eq.s32.totalorder %s69, 1
    %p638 = scmp.ne.s32.totalorder %s633, %s635
    %p639 = scmp.eq.s32.totalorder %s69, 0
    %p640 = por %p638, %p639
    %p641 = scmp.ne.s32.totalorder %s633, %s635
    %p642 = scmp.eq.s32.totalorder %s74, 1
    %p643 = por %p641, %p642
    %p644 = scmp.ne.s32.totalorder %s635, %s636
    %p645 = scmp.eq.s32.totalorder %s74, 0
    %p646 = por %p644, %p645
    %p647 = scmp.ne.s32.totalorder %s635, %s636
    %p648 = scmp.eq.s32.totalorder %s75, 1
    %p649 = por %p647, %p648
    %p651 = scmp.ne.s32.totalorder %s636, %s650
    %p652 = scmp.eq.s32.totalorder %s75, 0
    %p653 = por %p651, %p652
    %s655 = sadd.s32 %s654, 1
    %p658 = scmp.eq.s32.totalorder %s69, 1
    %p659 = scmp.ne.s32.totalorder %s654, %s656
    %p660 = scmp.eq.s32.totalorder %s69, 0
    %p661 = por %p659, %p660
    %p662 = scmp.ne.s32.totalorder %s654, %s656
    %p663 = scmp.eq.s32.totalorder %s74, 1
    %p664 = por %p662, %p663
    %p665 = scmp.ne.s32.totalorder %s656, %s657
    %p666 = scmp.eq.s32.totalorder %s74, 0
    %p667 = por %p665, %p666
    %p668 = scmp.ne.s32.totalorder %s656, %s657
    %p669 = scmp.eq.s32.totalorder %s75, 1
    %p670 = por %p668, %p669
    %p672 = scmp.ne.s32.totalorder %s657, %s671
    %p673 = scmp.eq.s32.totalorder %s75, 0
    %p674 = por %p672, %p673
    %s676 = sadd.s32 %s675, 1
    %p679 = scmp.eq.s32.totalorder %s69, 1
    %p680 = scmp.ne.s32.totalorder %s675, %s677
    %p681 = scmp.eq.s32.totalorder %s69, 0
    %p682 = por %p680, %p681
    %p683 = scmp.ne.s32.totalorder %s675, %s677
    %p684 = scmp.eq.s32.totalorder %s74, 1
    %p685 = por %p683, %p684
    %p686 = scmp.ne.s32.totalorder %s677, %s678
    %p687 = scmp.eq.s32.totalorder %s74, 0
    %p688 = por %p686, %p687
    %p689 = scmp.ne.s32.totalorder %s677, %s678
    %p690 = scmp.eq.s32.totalorder %s75, 1
    %p691 = por %p689, %p690
    %p693 = scmp.ne.s32.totalorder %s678, %s692
    %p694 = scmp.eq.s32.totalorder %s75, 0
    %p695 = por %p693, %p694
    %s697 = sadd.s32 %s696, 1
    %p700 = scmp.eq.s32.totalorder %s69, 1
    %p701 = scmp.ne.s32.totalorder %s696, %s698
    %p702 = scmp.eq.s32.totalorder %s69, 0
    %p703 = por %p701, %p702
    %p704 = scmp.ne.s32.totalorder %s696, %s698
    %p705 = scmp.eq.s32.totalorder %s74, 1
    %p706 = por %p704, %p705
    %p707 = scmp.ne.s32.totalorder %s698, %s699
    %p708 = scmp.eq.s32.totalorder %s74, 0
    %p709 = por %p707, %p708
    %p710 = scmp.ne.s32.totalorder %s698, %s699
    %p711 = scmp.eq.s32.totalorder %s75, 1
    %p712 = por %p710, %p711
    %p714 = scmp.ne.s32.totalorder %s699, %s713
    %p715 = scmp.eq.s32.totalorder %s75, 0
    %p716 = por %p714, %p715
    %s718 = sadd.s32 %s717, 1
    %p721 = scmp.eq.s32.totalorder %s69, 1
    %p722 = scmp.ne.s32.totalorder %s717, %s719
    %p723 = scmp.eq.s32.totalorder %s69, 0
    %p724 = por %p722, %p723
    %p725 = scmp.ne.s32.totalorder %s717, %s719
    %p726 = scmp.eq.s32.totalorder %s74, 1
    %p727 = por %p725, %p726
    %p728 = scmp.ne.s32.totalorder %s719, %s720
    %p729 = scmp.eq.s32.totalorder %s74, 0
    %p730 = por %p728, %p729
    %p731 = scmp.ne.s32.totalorder %s719, %s720
    %p732 = scmp.eq.s32.totalorder %s75, 1
    %p733 = por %p731, %p732
    %p735 = scmp.ne.s32.totalorder %s720, %s734
    %p736 = scmp.eq.s32.totalorder %s75, 0
    %p737 = por %p735, %p736
    %s738 = ssub.s32 %s69, %s76
    %p739 = scmp.eq.s32.totalorder %s738, 0
    %s741 = sadd.s32 %s740, 1
    %s742 = scalar_select %p739, %s740, %s741
    %p745 = pneg %p739
    %p746 = scmp.eq.s32.totalorder %s69, 1
    %p747 = por %p745, %p746
    %p748 = scmp.ne.s32.totalorder %s740, %s743
    %p749 = scmp.eq.s32.totalorder %s69, 0
    %p750 = por %p748, %p749
    %p751 = scmp.ne.s32.totalorder %s740, %s743
    %p752 = scmp.eq.s32.totalorder %s74, 1
    %p753 = por %p751, %p752
    %p754 = scmp.ne.s32.totalorder %s743, %s744
    %p755 = scmp.eq.s32.totalorder %s74, 0
    %p756 = por %p754, %p755
    %p757 = scmp.ne.s32.totalorder %s743, %s744
    %p758 = scmp.eq.s32.totalorder %s75, 1
    %p759 = por %p757, %p758
    %p761 = scmp.ne.s32.totalorder %s744, %s760
    %p762 = scmp.eq.s32.totalorder %s75, 0
    %p763 = por %p761, %p762
    %p764 = scmp.le.s32.totalorder 1, %s69
    %p765 = scmp.lt.s32.totalorder %s69, 3
    %p766 = pnand %p764, %p765
    %p767 = pneg %p766
    // Predicated region
    $region9: #{transformer_forecasting.1} parent=5 // pred_check
      _
    $region10: #{transformer_forecasting.1} parent=5 // pred_check_branch
      %769 = sbr.rel (%p766) target = $region12
    $region11: #{transformer_forecasting.1} parent=5 // pred_region
      %s770 = ssub.s32 %s69, 1
      // Predicated region
      $region13: #{transformer_forecasting.1} parent=11 // pred_check
        %p771 = pneg %p142
      $region14: #{transformer_forecasting.1} parent=11 // pred_check_branch
        %773 = sbr.rel (%p771) target = $region16
      $region15: #{transformer_forecasting.1} parent=11 // pred_region
        _
      $region16: #{transformer_forecasting.1} parent=11 // pred_fallthru
        _
      // Predicated region
      $region17: #{transformer_forecasting.1} parent=11 // pred_check
        %p774 = pneg %p163
      $region18: #{transformer_forecasting.1} parent=11 // pred_check_branch
        %776 = sbr.rel (%p774) target = $region20
      $region19: #{transformer_forecasting.1} parent=11 // pred_region
        _
      $region20: #{transformer_forecasting.1} parent=11 // pred_fallthru
        _
      // Predicated region
      $region21: #{transformer_forecasting.1} parent=11 // pred_check
        %p777 = pneg %p184
      $region22: #{transformer_forecasting.1} parent=11 // pred_check_branch
        %779 = sbr.rel (%p777) target = $region24
      $region23: #{transformer_forecasting.1} parent=11 // pred_region
        _
      $region24: #{transformer_forecasting.1} parent=11 // pred_fallthru
        _
      // Predicated region
      $region25: #{transformer_forecasting.1} parent=11 // pred_check
        %p780 = pneg %p205
      $region26: #{transformer_forecasting.1} parent=11 // pred_check_branch
        %782 = sbr.rel (%p780) target = $region28
      $region27: #{transformer_forecasting.1} parent=11 // pred_region
        _
      $region28: #{transformer_forecasting.1} parent=11 // pred_fallthru
        _
      // Predicated region
      $region29: #{transformer_forecasting.1} parent=11 // pred_check
        %p783 = pneg %p226
      $region30: #{transformer_forecasting.1} parent=11 // pred_check_branch
        %785 = sbr.rel (%p783) target = $region32
      $region31: #{transformer_forecasting.1} parent=11 // pred_region
        _
      $region32: #{transformer_forecasting.1} parent=11 // pred_fallthru
        _
      // Predicated region
      $region33: #{transformer_forecasting.1} parent=11 // pred_check
        %p786 = pneg %p247
      $region34: #{transformer_forecasting.1} parent=11 // pred_check_branch
        %788 = sbr.rel (%p786) target = $region36
      $region35: #{transformer_forecasting.1} parent=11 // pred_region
        _
      $region36: #{transformer_forecasting.1} parent=11 // pred_fallthru
        _
      // Predicated region
      $region37: #{transformer_forecasting.1} parent=11 // pred_check
        %p789 = pneg %p268
      $region38: #{transformer_forecasting.1} parent=11 // pred_check_branch
        %791 = sbr.rel (%p789) target = $region40
      $region39: #{transformer_forecasting.1} parent=11 // pred_region
        _
      $region40: #{transformer_forecasting.1} parent=11 // pred_fallthru
        _
      // Predicated region
      $region41: #{transformer_forecasting.1} parent=11 // pred_check
        %p792 = pneg %p289
      $region42: #{transformer_forecasting.1} parent=11 // pred_check_branch
        %794 = sbr.rel (%p792) target = $region44
      $region43: #{transformer_forecasting.1} parent=11 // pred_region
        _
      $region44: #{transformer_forecasting.1} parent=11 // pred_fallthru
        _
      // Predicated region
      $region45: #{transformer_forecasting.1} parent=11 // pred_check
        %p795 = pneg %p310
      $region46: #{transformer_forecasting.1} parent=11 // pred_check_branch
        %797 = sbr.rel (%p795) target = $region48
      $region47: #{transformer_forecasting.1} parent=11 // pred_region
        _
      $region48: #{transformer_forecasting.1} parent=11 // pred_fallthru
        _
      // Predicated region
      $region49: #{transformer_forecasting.1} parent=11 // pred_check
        %p798 = pneg %p331
      $region50: #{transformer_forecasting.1} parent=11 // pred_check_branch
        %800 = sbr.rel (%p798) target = $region52
      $region51: #{transformer_forecasting.1} parent=11 // pred_region
        _
      $region52: #{transformer_forecasting.1} parent=11 // pred_fallthru
        _
      // Predicated region
      $region53: #{transformer_forecasting.1} parent=11 // pred_check
        %p801 = pneg %p352
      $region54: #{transformer_forecasting.1} parent=11 // pred_check_branch
        %803 = sbr.rel (%p801) target = $region56
      $region55: #{transformer_forecasting.1} parent=11 // pred_region
        _
      $region56: #{transformer_forecasting.1} parent=11 // pred_fallthru
        _
      // Predicated region
      $region57: #{transformer_forecasting.1} parent=11 // pred_check
        %p804 = pneg %p373
      $region58: #{transformer_forecasting.1} parent=11 // pred_check_branch
        %806 = sbr.rel (%p804) target = $region60
      $region59: #{transformer_forecasting.1} parent=11 // pred_region
        _
      $region60: #{transformer_forecasting.1} parent=11 // pred_fallthru
        _
      // Predicated region
      $region61: #{transformer_forecasting.1} parent=11 // pred_check
        %p807 = pneg %p394
      $region62: #{transformer_forecasting.1} parent=11 // pred_check_branch
        %809 = sbr.rel (%p807) target = $region64
      $region63: #{transformer_forecasting.1} parent=11 // pred_region
        _
      $region64: #{transformer_forecasting.1} parent=11 // pred_fallthru
        _
      // Predicated region
      $region65: #{transformer_forecasting.1} parent=11 // pred_check
        %p810 = pneg %p415
      $region66: #{transformer_forecasting.1} parent=11 // pred_check_branch
        %812 = sbr.rel (%p810) target = $region68
      $region67: #{transformer_forecasting.1} parent=11 // pred_region
        _
      $region68: #{transformer_forecasting.1} parent=11 // pred_fallthru
        _
      // Predicated region
      $region69: #{transformer_forecasting.1} parent=11 // pred_check
        %p813 = pneg %p436
      $region70: #{transformer_forecasting.1} parent=11 // pred_check_branch
        %815 = sbr.rel (%p813) target = $region72
      $region71: #{transformer_forecasting.1} parent=11 // pred_region
        _
      $region72: #{transformer_forecasting.1} parent=11 // pred_fallthru
        _
      // Predicated region
      $region73: #{transformer_forecasting.1} parent=11 // pred_check
        %p816 = pneg %p457
      $region74: #{transformer_forecasting.1} parent=11 // pred_check_branch
        %818 = sbr.rel (%p816) target = $region76
      $region75: #{transformer_forecasting.1} parent=11 // pred_region
        _
      $region76: #{transformer_forecasting.1} parent=11 // pred_fallthru
        _
      // Predicated region
      $region77: #{transformer_forecasting.1} parent=11 // pred_check
        %p819 = pneg %p478
      $region78: #{transformer_forecasting.1} parent=11 // pred_check_branch
        %821 = sbr.rel (%p819) target = $region80
      $region79: #{transformer_forecasting.1} parent=11 // pred_region
        _
      $region80: #{transformer_forecasting.1} parent=11 // pred_fallthru
        _
      // Predicated region
      $region81: #{transformer_forecasting.1} parent=11 // pred_check
        %p822 = pneg %p499
      $region82: #{transformer_forecasting.1} parent=11 // pred_check_branch
        %824 = sbr.rel (%p822) target = $region84
      $region83: #{transformer_forecasting.1} parent=11 // pred_region
        _
      $region84: #{transformer_forecasting.1} parent=11 // pred_fallthru
        _
      // Predicated region
      $region85: #{transformer_forecasting.1} parent=11 // pred_check
        %p825 = pneg %p520
      $region86: #{transformer_forecasting.1} parent=11 // pred_check_branch
        %827 = sbr.rel (%p825) target = $region88
      $region87: #{transformer_forecasting.1} parent=11 // pred_region
        _
      $region88: #{transformer_forecasting.1} parent=11 // pred_fallthru
        _
      // Predicated region
      $region89: #{transformer_forecasting.1} parent=11 // pred_check
        %p828 = pneg %p541
      $region90: #{transformer_forecasting.1} parent=11 // pred_check_branch
        %830 = sbr.rel (%p828) target = $region92
      $region91: #{transformer_forecasting.1} parent=11 // pred_region
        _
      $region92: #{transformer_forecasting.1} parent=11 // pred_fallthru
        _
      // Predicated region
      $region93: #{transformer_forecasting.1} parent=11 // pred_check
        %p831 = pneg %p562
      $region94: #{transformer_forecasting.1} parent=11 // pred_check_branch
        %833 = sbr.rel (%p831) target = $region96
      $region95: #{transformer_forecasting.1} parent=11 // pred_region
        _
      $region96: #{transformer_forecasting.1} parent=11 // pred_fallthru
        _
      // Predicated region
      $region97: #{transformer_forecasting.1} parent=11 // pred_check
        %p834 = pneg %p583
      $region98: #{transformer_forecasting.1} parent=11 // pred_check_branch
        %836 = sbr.rel (%p834) target = $region100
      $region99: #{transformer_forecasting.1} parent=11 // pred_region
        _
      $region100: #{transformer_forecasting.1} parent=11 // pred_fallthru
        _
      // Predicated region
      $region101: #{transformer_forecasting.1} parent=11 // pred_check
        %p837 = pneg %p604
      $region102: #{transformer_forecasting.1} parent=11 // pred_check_branch
        %839 = sbr.rel (%p837) target = $region104
      $region103: #{transformer_forecasting.1} parent=11 // pred_region
        _
      $region104: #{transformer_forecasting.1} parent=11 // pred_fallthru
        _
      // Predicated region
      $region105: #{transformer_forecasting.1} parent=11 // pred_check
        %p840 = pneg %p625
      $region106: #{transformer_forecasting.1} parent=11 // pred_check_branch
        %842 = sbr.rel (%p840) target = $region108
      $region107: #{transformer_forecasting.1} parent=11 // pred_region
        _
      $region108: #{transformer_forecasting.1} parent=11 // pred_fallthru
        _
      // Predicated region
      $region109: #{transformer_forecasting.1} parent=11 // pred_check
        %p843 = pneg %p646
      $region110: #{transformer_forecasting.1} parent=11 // pred_check_branch
        %845 = sbr.rel (%p843) target = $region112
      $region111: #{transformer_forecasting.1} parent=11 // pred_region
        _
      $region112: #{transformer_forecasting.1} parent=11 // pred_fallthru
        _
      // Predicated region
      $region113: #{transformer_forecasting.1} parent=11 // pred_check
        %p846 = pneg %p667
      $region114: #{transformer_forecasting.1} parent=11 // pred_check_branch
        %848 = sbr.rel (%p846) target = $region116
      $region115: #{transformer_forecasting.1} parent=11 // pred_region
        _
      $region116: #{transformer_forecasting.1} parent=11 // pred_fallthru
        _
      // Predicated region
      $region117: #{transformer_forecasting.1} parent=11 // pred_check
        %p849 = pneg %p688
      $region118: #{transformer_forecasting.1} parent=11 // pred_check_branch
        %851 = sbr.rel (%p849) target = $region120
      $region119: #{transformer_forecasting.1} parent=11 // pred_region
        _
      $region120: #{transformer_forecasting.1} parent=11 // pred_fallthru
        _
      // Predicated region
      $region121: #{transformer_forecasting.1} parent=11 // pred_check
        %p852 = pneg %p709
      $region122: #{transformer_forecasting.1} parent=11 // pred_check_branch
        %854 = sbr.rel (%p852) target = $region124
      $region123: #{transformer_forecasting.1} parent=11 // pred_region
        _
      $region124: #{transformer_forecasting.1} parent=11 // pred_fallthru
        _
      // Predicated region
      $region125: #{transformer_forecasting.1} parent=11 // pred_check
        %p855 = pneg %p730
      $region126: #{transformer_forecasting.1} parent=11 // pred_check_branch
        %857 = sbr.rel (%p855) target = $region128
      $region127: #{transformer_forecasting.1} parent=11 // pred_region
        _
      $region128: #{transformer_forecasting.1} parent=11 // pred_fallthru
        _
    $region12: #{transformer_forecasting.1} parent=5 // pred_fallthru
      _
    %p858 = scmp.lt.s32.totalorder %s69, 2
    // Predicated region
    $region129: #{transformer_forecasting.1} parent=5 // pred_check
      %p859 = pneg %p858
    $region130: #{transformer_forecasting.1} parent=5 // pred_check_branch
      %861 = sbr.rel (%p859) target = $region132
    $region131: #{transformer_forecasting.1} parent=5 // pred_region
      // Predicated region
      $region133: #{transformer_forecasting.1} parent=131 // pred_check
        %p862 = pneg %p89
      $region134: #{transformer_forecasting.1} parent=131 // pred_check_branch
        %864 = sbr.rel (%p862) target = $region136
      $region135: #{transformer_forecasting.1} parent=131 // pred_region
        %p865 = scmp.lt.s32.totalorder %s69, 1
        %s866 = scalar_select %p865, %s69, 1
        %s867 = smul.addr %s866, 8
        %s868 = scalar_lea.vmem %s1, %s867
      $region136: #{transformer_forecasting.1} parent=131 // pred_fallthru
        _
      // Predicated region
      $region137: #{transformer_forecasting.1} parent=131 // pred_check
        %p869 = pneg %p115
      $region138: #{transformer_forecasting.1} parent=131 // pred_check_branch
        %871 = sbr.rel (%p869) target = $region140
      $region139: #{transformer_forecasting.1} parent=131 // pred_region
        %p872 = scmp.lt.s32.totalorder %s69, 1
        %s873 = scalar_select %p872, %s69, 1
        %s874 = smul.addr %s873, 8
        %s875 = scalar_lea.vmem %s3, %s874
      $region140: #{transformer_forecasting.1} parent=131 // pred_fallthru
        _
    $region132: #{transformer_forecasting.1} parent=5 // pred_fallthru
      _
    %p876 = scmp.le.s32.totalorder 1, %s69
    %p877 = scmp.lt.s32.totalorder %s69, 3
    %p878 = pnand %p876, %p877
    %p879 = pneg %p878
    // Predicated region
    $region141: #{transformer_forecasting.1} parent=5 // pred_check
      _
    $region142: #{transformer_forecasting.1} parent=5 // pred_check_branch
      %881 = sbr.rel (%p878) target = $region144
    $region143: #{transformer_forecasting.1} parent=5 // pred_region
      %s882 = ssub.s32 %s69, 1
      %p883 = scmp.lt.s32.totalorder %s74, 1
      %s884 = scalar_select %p883, %s74, 1
      %s885 = smul.addr %s884, 8
      %s886 = scalar_lea.vmem %s1, %s885
      %p887 = pneg %p95
      %p888 = pneg %p92
      %p889 = scmp.lt.s32.totalorder %s74, 1
      %s890 = scalar_select %p889, %s74, 1
      %s891 = smul.addr %s890, 8
      %s892 = scalar_lea.vmem %s3, %s891
      %p893 = pneg %p121
      %p894 = pneg %p118
      %p895 = pneg %p142
      %p896 = pneg %p139
      %p897 = pneg %p163
      %p898 = pneg %p160
      %p899 = pneg %p184
      %p900 = pneg %p181
      %p901 = pneg %p205
      %p902 = pneg %p202
      %p903 = pneg %p226
      %p904 = pneg %p223
      %p905 = pneg %p247
      %p906 = pneg %p244
      %p907 = pneg %p268
      %p908 = pneg %p265
      %p909 = pneg %p289
      %p910 = pneg %p286
      %p911 = pneg %p310
      %p912 = pneg %p307
      %p913 = pneg %p331
      %p914 = pneg %p328
      %p915 = pneg %p352
      %p916 = pneg %p349
      %p917 = pneg %p373
      %p918 = pneg %p370
      %p919 = pneg %p394
      %p920 = pneg %p391
      %p921 = pneg %p415
      %p922 = pneg %p412
      %p923 = pneg %p436
      %p924 = pneg %p433
      %p925 = pneg %p457
      %p926 = pneg %p454
      %p927 = pneg %p478
      %p928 = pneg %p475
      %p929 = pneg %p499
      %p930 = pneg %p496
      %p931 = pneg %p520
      %p932 = pneg %p517
      %p933 = pneg %p541
      %p934 = pneg %p538
      %p935 = pneg %p562
      %p936 = pneg %p559
      %p937 = pneg %p583
      %p938 = pneg %p580
      %p939 = pneg %p604
      %p940 = pneg %p601
      %p941 = pneg %p625
      %p942 = pneg %p622
      %p943 = pneg %p646
      %p944 = pneg %p643
      %p945 = pneg %p667
      %p946 = pneg %p664
      %p947 = pneg %p688
      %p948 = pneg %p685
      %p949 = pneg %p709
      %p950 = pneg %p706
      %p951 = pneg %p730
      %p952 = pneg %p727
      %p953 = pneg %p756
      %p954 = pneg %p753
      %p955 = scmp.lt.s32.totalorder %s74, 1
      %s956 = scalar_select %p955, %s74, 1
      %s957 = smul.addr %s956, 4
      %s958 = scalar_lea.vmem %s63, %s957
      %p959 = scmp.lt.s32.totalorder %s74, 1
      %s960 = scalar_select %p959, %s74, 1
      %s961 = smul.addr %s960, 8
      %s962 = scalar_lea.vmem %s1, %s961
      %p963 = scmp.lt.s32.totalorder %s74, 1
      %s964 = scalar_select %p963, %s74, 1
      %s965 = smul.addr %s964, 8
      %s966 = scalar_lea.vmem %s3, %s965
      %p967 = scmp.lt.s32.totalorder %s74, 1
      %s968 = scalar_select %p967, %s74, 1
      %s969 = smul.addr %s968, 4
      %s970 = scalar_lea.vmem %s63, %s969
      %v972 = vld [vmem:[%s962] sm:$0xff]
      %v973 = vld [vmem:[%s966] sm:$0xff]
      %v974 = vld [vmem:[%s37] sm:$0xf]
      %v975 = vld [vmem:[%s37 + $0x4] sm:$0xf]
      %v976 = vld [vmem:[%s37 + $0x8] sm:$0xf]
      %v977 = vld [vmem:[%s37 + $0xc] sm:$0xf]
      %v978 = vld [vmem:[%s37 + $0x10] sm:$0xf]
      %v979 = vld [vmem:[%s37 + $0x14] sm:$0xf]
      %v980 = vld [vmem:[%s37 + $0x18] sm:$0xf]
      %v981 = vld [vmem:[%s37 + $0x1c] sm:$0xf]
      %v982 = vld [vmem:[%s35] sm:$0x1]
      %v983 = vpack.c.bf16 %v972, %v972
      %v985 = vperm.slane %v982, 0
      %v995 = vunpack.c.l.b16 %v974
      %v996 = vunpack.c.l.b16 %v975
      %v997 = vunpack.c.l.b16 %v976
      %v998 = vunpack.c.l.b16 %v977
      %v999 = vunpack.c.l.b16 %v978
      %v1000 = vunpack.c.l.b16 %v979
      %v1001 = vunpack.c.l.b16 %v980
      %v1002 = vunpack.c.l.b16 %v981
      %v1003 = vpack.c.b16 %v996, %v995
      %v1004 = vpack.c.b16 %v998, %v997
      %v1005 = vpack.c.b16 %v1000, %v999
      %v1006 = vpack.c.b16 %v1002, %v1001
      %vm1011 = vcmask 523264
      %v1013 = vsel %vm1011, %v983, 0
      %1015 = vmatpush.bf16.msra.mxu0 0
      %1016 = vmatpush.bf16.msra.mxu0 0
      %1017 = vmatpush.bf16.msra.mxu0 0
      %1018 = vmatpush.bf16.msra.mxu0 0
      %1019 = vmatpush.bf16.msra.mxu0 %v1006
      %1020 = vmatpush.bf16.msra.mxu0 %v1005
      %1021 = vmatpush.bf16.msra.mxu0 %v1004
      %1022 = vmatpush.bf16.msra.mxu0 %v1003
      %1023 = vmatmul.bf16.gmra.mxu0 %v1013
      %v1024 = vpop.f32.mrf.mxu0
      %v1025 = vadd.f32 %v985, %v1024
      %v1026 = vpop.f32.mrf.mxu0
      %1027 = vdwg.mxu0
      %v1028 = vpack.c.bf16 %v973, %v973
      %v1030 = vsel %vm1011, %v1028, 0
      %1032 = vmatpush.bf16.msra.mxu0 0
      %1033 = vmatpush.bf16.msra.mxu0 0
      %1034 = vmatpush.bf16.msra.mxu0 0
      %1035 = vmatpush.bf16.msra.mxu0 0
      %1036 = vmatpush.bf16.msra.mxu0 %v1006
      %1037 = vmatpush.bf16.msra.mxu0 %v1005
      %1038 = vmatpush.bf16.msra.mxu0 %v1004
      %1039 = vmatpush.bf16.msra.mxu0 %v1003
      %1040 = vmatmul.bf16.gmra.mxu0 %v1030
      %v1041 = vpop.f32.mrf.mxu0
      %v1042 = vadd.f32 %v985, %v1041
      %v1043 = vpop.f32.mrf.mxu0
      %1044 = vdwg.mxu0
      %v1045 = vld [vmem:[%s47] sm:$0xf]
      %v1046 = vld [vmem:[%s55] sm:$0xf]
      %v1047 = vld [vmem:[%s55 + $0x4] sm:$0xf]
      %v1048 = vld [vmem:[%s55 + $0x8] sm:$0xf]
      %v1049 = vld [vmem:[%s55 + $0xc] sm:$0xf]
      %v1050 = vld [vmem:[%s45] sm:$0x1]
      %v1051 = vld [vmem:[%s53] sm:$0xf]
      %v1052 = vld [vmem:[%s53 + $0x4] sm:$0xf]
      %v1053 = vld [vmem:[%s53 + $0x8] sm:$0xf]
      %v1054 = vld [vmem:[%s53 + $0xc] sm:$0xf]
      %v1055 = vld [vmem:[%s43] sm:$0x1]
      %v1056 = vpack.c.bf16 %v1025, %v1025
      %v1058 = vperm.slane %v1050, 0
      %v1064 = vunpack.c.l.b16 %v1046
      %v1065 = vunpack.c.l.b16 %v1047
      %v1066 = vunpack.c.l.b16 %v1048
      %v1067 = vunpack.c.l.b16 %v1049
      %v1068 = vpack.c.b16 %v1065, %v1064
      %v1069 = vpack.c.b16 %v1067, %v1066
      %vm1072 = vcmask 261120
      %v1074 = vsel %vm1072, %v1056, 0
      %1076 = vmatpush.bf16.msra.mxu0 0
      %1077 = vmatpush.bf16.msra.mxu0 0
      %1078 = vmatpush.bf16.msra.mxu0 0
      %1079 = vmatpush.bf16.msra.mxu0 0
      %1080 = vmatpush.bf16.msra.mxu0 0
      %1081 = vmatpush.bf16.msra.mxu0 0
      %1082 = vmatpush.bf16.msra.mxu0 %v1069
      %1083 = vmatpush.bf16.msra.mxu0 %v1068
      %1084 = vmatmul.bf16.gmra.mxu0 %v1074
      %v1085 = vpop.f32.mrf.mxu0
      %v1086 = vadd.f32 %v1058, %v1085
      %v1087 = vpop.f32.mrf.mxu0
      %1088 = vdwg.mxu0
      %1090 = vrot.lane.b32.xlu0 %v1086, 120
      %v1091 = vpop.permute.xlu0 %1090
      %1093 = vrot.lane.b32.xlu0 %v1086, 112
      %v1094 = vpop.permute.xlu0 %1093
      %1096 = vrot.lane.b32.xlu0 %v1086, 104
      %v1097 = vpop.permute.xlu0 %1096
      %v1099 = vpack.c.bf16 %v1086, %v1086
      %v1100 = vpack.c.bf16 %v1091, %v1091
      %v1101 = vpack.c.bf16 %v1094, %v1094
      %v1102 = vpack.c.bf16 %v1097, %v1097
      %v1104 = vunpack.c.l.b16 %v1099
      %v1105 = vpack.c.b16 %v1104, %v1104
      %1106 = vrot.lane.b32.xlu0 %v1105, 96
      %v1107 = vpop.permute.xlu0 %1106
      %vm1108 = vcmask 64512
      %v1110 = vsel %vm1108, %v1099, 0
      %v1113 = vsel %vm1108, %v1107, 0
      %1115 = vmatpush.bf16.xpose.msra.mxu0 0
      %1116 = vmatpush.bf16.xpose.msra.mxu0 0
      %1117 = vmatpush.bf16.xpose.msra.mxu0 0
      %1118 = vmatpush.bf16.xpose.msra.mxu0 0
      %1119 = vmatpush.bf16.xpose.msra.mxu0 0
      %1120 = vmatpush.bf16.xpose.msra.mxu0 0
      %1121 = vmatpush.bf16.xpose.msra.mxu0 0
      %1122 = vmatpush.bf16.xpose.msra.mxu0 %v1113
      %1123 = vmatmul.bf16.gmra.mxu0 %v1110
      %v1124 = vpop.f32.mrf.mxu0
      %v1125 = vadd.f32 0.0, %v1124
      %v1126 = vpop.f32.mrf.mxu0
      %1127 = vdwg.mxu0
      %v1129 = vunpack.c.l.b16 %v1100
      %v1130 = vpack.c.b16 %v1129, %v1129
      %1131 = vrot.lane.b32.xlu0 %v1130, 96
      %v1132 = vpop.permute.xlu0 %1131
      %v1134 = vsel %vm1108, %v1100, 0
      %v1137 = vsel %vm1108, %v1132, 0
      %1139 = vmatpush.bf16.xpose.msra.mxu0 0
      %1140 = vmatpush.bf16.xpose.msra.mxu0 0
      %1141 = vmatpush.bf16.xpose.msra.mxu0 0
      %1142 = vmatpush.bf16.xpose.msra.mxu0 0
      %1143 = vmatpush.bf16.xpose.msra.mxu0 0
      %1144 = vmatpush.bf16.xpose.msra.mxu0 0
      %1145 = vmatpush.bf16.xpose.msra.mxu0 0
      %1146 = vmatpush.bf16.xpose.msra.mxu0 %v1137
      %1147 = vmatmul.bf16.gmra.mxu0 %v1134
      %v1148 = vpop.f32.mrf.mxu0
      %v1149 = vadd.f32 0.0, %v1148
      %v1150 = vpop.f32.mrf.mxu0
      %1151 = vdwg.mxu0
      %v1153 = vunpack.c.l.b16 %v1101
      %v1154 = vpack.c.b16 %v1153, %v1153
      %1155 = vrot.lane.b32.xlu0 %v1154, 96
      %v1156 = vpop.permute.xlu0 %1155
      %v1158 = vsel %vm1108, %v1101, 0
      %v1161 = vsel %vm1108, %v1156, 0
      %1163 = vmatpush.bf16.xpose.msra.mxu0 0
      %1164 = vmatpush.bf16.xpose.msra.mxu0 0
      %1165 = vmatpush.bf16.xpose.msra.mxu0 0
      %1166 = vmatpush.bf16.xpose.msra.mxu0 0
      %1167 = vmatpush.bf16.xpose.msra.mxu0 0
      %1168 = vmatpush.bf16.xpose.msra.mxu0 0
      %1169 = vmatpush.bf16.xpose.msra.mxu0 0
      %1170 = vmatpush.bf16.xpose.msra.mxu0 %v1161
      %1171 = vmatmul.bf16.gmra.mxu0 %v1158
      %v1172 = vpop.f32.mrf.mxu0
      %v1173 = vadd.f32 0.0, %v1172
      %v1174 = vpop.f32.mrf.mxu0
      %1175 = vdwg.mxu0
      %v1177 = vunpack.c.l.b16 %v1102
      %v1178 = vpack.c.b16 %v1177, %v1177
      %1179 = vrot.lane.b32.xlu0 %v1178, 96
      %v1180 = vpop.permute.xlu0 %1179
      %v1182 = vsel %vm1108, %v1102, 0
      %v1185 = vsel %vm1108, %v1180, 0
      %1187 = vmatpush.bf16.xpose.msra.mxu0 0
      %1188 = vmatpush.bf16.xpose.msra.mxu0 0
      %1189 = vmatpush.bf16.xpose.msra.mxu0 0
      %1190 = vmatpush.bf16.xpose.msra.mxu0 0
      %1191 = vmatpush.bf16.xpose.msra.mxu0 0
      %1192 = vmatpush.bf16.xpose.msra.mxu0 0
      %1193 = vmatpush.bf16.xpose.msra.mxu0 0
      %1194 = vmatpush.bf16.xpose.msra.mxu0 %v1185
      %1195 = vmatmul.bf16.gmra.mxu0 %v1182
      %v1196 = vpop.f32.mrf.mxu0
      %v1197 = vadd.f32 0.0, %v1196
      %v1198 = vpop.f32.mrf.mxu0
      %1199 = vdwg.mxu0
      %v1200 = vmul.f32 %v1125, 0.35355338
      %v1201 = vmul.f32 %v1149, 0.35355338
      %v1202 = vmul.f32 %v1173, 0.35355338
      %v1203 = vmul.f32 %v1197, 0.35355338
      %v1204 = vsel %vm1108, %v1200, -inf
      %1205 = vmax.xlane.f32.xlu0 %v1204
      %v1206 = vpop.xlane.xlu0 %1205
      %v1207 = vsel %vm1108, %v1201, -inf
      %1208 = vmax.xlane.f32.xlu0 %v1207
      %v1209 = vpop.xlane.xlu0 %1208
      %v1210 = vsel %vm1108, %v1202, -inf
      %1211 = vmax.xlane.f32.xlu0 %v1210
      %v1212 = vpop.xlane.xlu0 %1211
      %v1213 = vsel %vm1108, %v1203, -inf
      %1214 = vmax.xlane.f32.xlu0 %v1213
      %v1215 = vpop.xlane.xlu0 %1214
      %v1216 = vsub.f32 %v1200, %v1206
      %v1217 = vsub.f32 %v1201, %v1209
      %v1218 = vsub.f32 %v1202, %v1212
      %v1219 = vsub.f32 %v1203, %v1215
      %v1220 = vmul.f32 %v1216, 1.442695
      %v1221 = vpow.pop %v1220
      %v1222 = vmul.f32 %v1217, 1.442695
      %v1223 = vpow.pop %v1222
      %v1224 = vmul.f32 %v1218, 1.442695
      %v1225 = vpow.pop %v1224
      %v1226 = vmul.f32 %v1219, 1.442695
      %v1227 = vpow.pop %v1226
      %v1228 = vsel %vm1108, %v1221, 0.0
      %1229 = vadd.xlane.f32.xlu0 %v1228
      %v1230 = vpop.xlane.xlu0 %1229
      %v1231 = vsel %vm1108, %v1223, 0.0
      %1232 = vadd.xlane.f32.xlu0 %v1231
      %v1233 = vpop.xlane.xlu0 %1232
      %v1234 = vsel %vm1108, %v1225, 0.0
      %1235 = vadd.xlane.f32.xlu0 %v1234
      %v1236 = vpop.xlane.xlu0 %1235
      %v1237 = vsel %vm1108, %v1227, 0.0
      %1238 = vadd.xlane.f32.xlu0 %v1237
      %v1239 = vpop.xlane.xlu0 %1238
      %v1240 = vrcp.pop %v1230
      %v1241 = vrcp.pop %v1233
      %v1242 = vrcp.pop %v1236
      %v1243 = vrcp.pop %v1239
      %v1244 = vmul.f32 %v1221, %v1240
      %v1245 = vmul.f32 %v1223, %v1241
      %v1246 = vmul.f32 %v1225, %v1242
      %v1247 = vmul.f32 %v1227, %v1243
      %v1248 = vpack.c.bf16 %v1244, %v1244
      %v1249 = vpack.c.bf16 %v1245, %v1245
      %v1250 = vpack.c.bf16 %v1246, %v1246
      %v1251 = vpack.c.bf16 %v1247, %v1247
      %1252 = vrot.lane.b32.xlu0 %v1105, 64
      %v1253 = vpop.permute.xlu0 %1252
      %v1255 = vsel %vm1108, %v1248, 0
      %vm1257 = vcmask 1043456
      %v1259 = vsel %vm1257, %v1253, 0
      %1261 = vmatpush.bf16.msra.mxu0 0
      %1262 = vmatpush.bf16.msra.mxu0 0
      %1263 = vmatpush.bf16.msra.mxu0 0
      %1264 = vmatpush.bf16.msra.mxu0 0
      %1265 = vmatpush.bf16.msra.mxu0 0
      %1266 = vmatpush.bf16.msra.mxu0 0
      %1267 = vmatpush.bf16.msra.mxu0 0
      %1268 = vmatpush.bf16.msra.mxu0 %v1259
      %1269 = vmatmul.bf16.gmra.mxu0 %v1255
      %v1270 = vpop.f32.mrf.mxu0
      %v1271 = vadd.f32 0.0, %v1270
      %v1272 = vpop.f32.mrf.mxu0
      %1273 = vdwg.mxu0
      %1274 = vrot.lane.b32.xlu0 %v1130, 64
      %v1275 = vpop.permute.xlu0 %1274
      %v1277 = vsel %vm1108, %v1249, 0
      %v1280 = vsel %vm1257, %v1275, 0
      %1282 = vmatpush.bf16.msra.mxu0 0
      %1283 = vmatpush.bf16.msra.mxu0 0
      %1284 = vmatpush.bf16.msra.mxu0 0
      %1285 = vmatpush.bf16.msra.mxu0 0
      %1286 = vmatpush.bf16.msra.mxu0 0
      %1287 = vmatpush.bf16.msra.mxu0 0
      %1288 = vmatpush.bf16.msra.mxu0 0
      %1289 = vmatpush.bf16.msra.mxu0 %v1280
      %1290 = vmatmul.bf16.gmra.mxu0 %v1277
      %v1291 = vpop.f32.mrf.mxu0
      %v1292 = vadd.f32 0.0, %v1291
      %v1293 = vpop.f32.mrf.mxu0
      %1294 = vdwg.mxu0
      %1295 = vrot.lane.b32.xlu0 %v1154, 64
      %v1296 = vpop.permute.xlu0 %1295
      %v1298 = vsel %vm1108, %v1250, 0
      %v1301 = vsel %vm1257, %v1296, 0
      %1303 = vmatpush.bf16.msra.mxu0 0
      %1304 = vmatpush.bf16.msra.mxu0 0
      %1305 = vmatpush.bf16.msra.mxu0 0
      %1306 = vmatpush.bf16.msra.mxu0 0
      %1307 = vmatpush.bf16.msra.mxu0 0
      %1308 = vmatpush.bf16.msra.mxu0 0
      %1309 = vmatpush.bf16.msra.mxu0 0
      %1310 = vmatpush.bf16.msra.mxu0 %v1301
      %1311 = vmatmul.bf16.gmra.mxu0 %v1298
      %v1312 = vpop.f32.mrf.mxu0
      %v1313 = vadd.f32 0.0, %v1312
      %v1314 = vpop.f32.mrf.mxu0
      %1315 = vdwg.mxu0
      %1316 = vrot.lane.b32.xlu0 %v1178, 64
      %v1317 = vpop.permute.xlu0 %1316
      %v1319 = vsel %vm1108, %v1251, 0
      %v1322 = vsel %vm1257, %v1317, 0
      %1324 = vmatpush.bf16.msra.mxu0 0
      %1325 = vmatpush.bf16.msra.mxu0 0
      %1326 = vmatpush.bf16.msra.mxu0 0
      %1327 = vmatpush.bf16.msra.mxu0 0
      %1328 = vmatpush.bf16.msra.mxu0 0
      %1329 = vmatpush.bf16.msra.mxu0 0
      %1330 = vmatpush.bf16.msra.mxu0 0
      %1331 = vmatpush.bf16.msra.mxu0 %v1322
      %1332 = vmatmul.bf16.gmra.mxu0 %v1319
      %v1333 = vpop.f32.mrf.mxu0
      %v1334 = vadd.f32 0.0, %v1333
      %v1335 = vpop.f32.mrf.mxu0
      %1336 = vdwg.mxu0
      %1338 = vrot.lane.b32.xlu0 %v1292, 8
      %v1339 = vpop.permute.xlu0 %1338
      %1342 = vrot.lane.b32.xlu0 %v1313, 16
      %v1343 = vpop.permute.xlu0 %1342
      %1346 = vrot.lane.b32.xlu0 %v1334, 24
      %v1347 = vpop.permute.xlu0 %1346
      %v1349 = vsel %vm1108, %v1271, %v1339
      %vm1350 = vcmask 130048
      %v1351 = vsel %vm1350, %v1349, %v1343
      %vm1352 = vcmask 195584
      %v1353 = vsel %vm1352, %v1351, %v1347
      %v1354 = vpack.c.bf16 %v1353, %v1353
      %v1356 = vperm.slane %v1055, 0
      %v1362 = vunpack.c.l.b16 %v1051
      %v1363 = vunpack.c.l.b16 %v1052
      %v1364 = vunpack.c.l.b16 %v1053
      %v1365 = vunpack.c.l.b16 %v1054
      %v1366 = vpack.c.b16 %v1363, %v1362
      %v1367 = vpack.c.b16 %v1365, %v1364
      %v1371 = vsel %vm1072, %v1354, 0
      %1373 = vmatpush.bf16.msra.mxu0 0
      %1374 = vmatpush.bf16.msra.mxu0 0
      %1375 = vmatpush.bf16.msra.mxu0 0
      %1376 = vmatpush.bf16.msra.mxu0 0
      %1377 = vmatpush.bf16.msra.mxu0 0
      %1378 = vmatpush.bf16.msra.mxu0 0
      %1379 = vmatpush.bf16.msra.mxu0 %v1367
      %1380 = vmatpush.bf16.msra.mxu0 %v1366
      %1381 = vmatmul.bf16.gmra.mxu0 %v1371
      %v1382 = vpop.f32.mrf.mxu0
      %v1383 = vadd.f32 %v1356, %v1382
      %v1384 = vpop.f32.mrf.mxu0
      %1385 = vdwg.mxu0
      %v1386 = vadd.f32 %v1025, %v1383
      %v1387 = vsel %vm1072, %v1386, 0.0
      %1388 = vadd.xlane.f32.xlu0 %v1387
      %v1389 = vpop.xlane.xlu0 %1388
      %v1390 = vrcp.pop 32.0
      %v1391 = vmul.f32 32.0, %v1390
      %v1392 = vsub.f32 1.0, %v1391
      %v1393 = vmul.f32 %v1390, %v1392
      %v1394 = vadd.f32 %v1390, %v1393
      %vm1395 = vweird.f32 %v1390
      %v1396 = vsel %vm1395, %v1390, %v1394
      %v1397 = vmul.f32 %v1389, %v1396
      %v1398 = vsub.f32 %v1386, %v1397
      %v1399 = vmul.f32 %v1398, %v1398
      %v1400 = vsel %vm1072, %v1399, 0.0
      %1401 = vadd.xlane.f32.xlu0 %v1400
      %v1402 = vpop.xlane.xlu0 %1401
      %v1403 = vmul.f32 %v1402, %v1396
      %v1404 = vadd.f32 %v1403, 1e-05
      %v1405 = vrsqrt.pop %v1404
      %v1406 = vmul.f32 %v1405, %v1404
      %v1407 = vmul.f32 %v1406, %v1405
      %v1408 = vmul.f32 0.5, %v1407
      %v1409 = vsub.f32 1.5, %v1408
      %v1410 = vmul.f32 %v1405, %v1409
      %vm1411 = vweird.f32 %v1404
      %vm1412 = vweird.f32 %v1405
      %vm1413 = vmor %vm1411, %vm1412
      %v1414 = vsel %vm1413, %v1405, %v1410
      %v1415 = vmul.f32 %v1398, %v1414
      %v1416 = vperm.slane %v1045, 0
      %v1417 = vmul.f32 %v1415, %v1416
      %v1418 = vperm.slane %v1045, 1
      %v1419 = vadd.f32 %v1417, %v1418
      %v1420 = vld [vmem:[%s49] sm:$0xf]
      %v1421 = vld [vmem:[%s49 + $0x4] sm:$0xf]
      %v1422 = vld [vmem:[%s49 + $0x8] sm:$0xf]
      %v1423 = vld [vmem:[%s49 + $0xc] sm:$0xf]
      %v1424 = vld [vmem:[%s39] sm:$0x1]
      %v1425 = vld [vmem:[%s51] sm:$0xf]
      %v1426 = vld [vmem:[%s51 + $0x4] sm:$0xf]
      %v1427 = vld [vmem:[%s51 + $0x8] sm:$0xf]
      %v1428 = vld [vmem:[%s51 + $0xc] sm:$0xf]
      %v1429 = vld [vmem:[%s51 + $0x10] sm:$0xf]
      %v1430 = vld [vmem:[%s51 + $0x14] sm:$0xf]
      %v1431 = vld [vmem:[%s51 + $0x18] sm:$0xf]
      %v1432 = vld [vmem:[%s51 + $0x1c] sm:$0xf]
      %v1433 = vld [vmem:[%s41] sm:$0x1]
      %v1434 = vpack.c.bf16 %v1419, %v1419
      %v1436 = vperm.slane %v1424, 0
      %v1442 = vunpack.c.l.b16 %v1420
      %v1443 = vunpack.c.l.b16 %v1421
      %v1444 = vunpack.c.l.b16 %v1422
      %v1445 = vunpack.c.l.b16 %v1423
      %v1446 = vpack.c.b16 %v1443, %v1442
      %v1447 = vpack.c.b16 %v1445, %v1444
      %v1451 = vsel %vm1072, %v1434, 0
      %1453 = vmatpush.bf16.msra.mxu0 0
      %1454 = vmatpush.bf16.msra.mxu0 0
      %1455 = vmatpush.bf16.msra.mxu0 0
      %1456 = vmatpush.bf16.msra.mxu0 0
      %1457 = vmatpush.bf16.msra.mxu0 0
      %1458 = vmatpush.bf16.msra.mxu0 0
      %1459 = vmatpush.bf16.msra.mxu0 %v1447
      %1460 = vmatpush.bf16.msra.mxu0 %v1446
      %1461 = vmatmul.bf16.gmra.mxu0 %v1451
      %v1462 = vpop.f32.mrf.mxu0
      %v1463 = vadd.f32 %v1436, %v1462
      %v1464 = vpop.f32.mrf.mxu0
      %1465 = vdwg.mxu0
      %v1466 = vmax.f32 %v1463, 0.0
      %v1467 = vpack.c.bf16 %v1466, %v1466
      %v1469 = vperm.slane %v1433, 0
      %v1479 = vunpack.c.l.b16 %v1425
      %v1480 = vunpack.c.l.b16 %v1426
      %v1481 = vunpack.c.l.b16 %v1427
      %v1482 = vunpack.c.l.b16 %v1428
      %v1483 = vunpack.c.l.b16 %v1429
      %v1484 = vunpack.c.l.b16 %v1430
      %v1485 = vunpack.c.l.b16 %v1431
      %v1486 = vunpack.c.l.b16 %v1432
      %v1487 = vpack.c.b16 %v1480, %v1479
      %v1488 = vpack.c.b16 %v1482, %v1481
      %v1489 = vpack.c.b16 %v1484, %v1483
      %v1490 = vpack.c.b16 %v1486, %v1485
      %v1496 = vsel %vm1011, %v1467, 0
      %1498 = vmatpush.bf16.msra.mxu0 0
      %1499 = vmatpush.bf16.msra.mxu0 0
      %1500 = vmatpush.bf16.msra.mxu0 0
      %1501 = vmatpush.bf16.msra.mxu0 0
      %1502 = vmatpush.bf16.msra.mxu0 %v1490
      %1503 = vmatpush.bf16.msra.mxu0 %v1489
      %1504 = vmatpush.bf16.msra.mxu0 %v1488
      %1505 = vmatpush.bf16.msra.mxu0 %v1487
      %1506 = vmatmul.bf16.gmra.mxu0 %v1496
      %v1507 = vpop.f32.mrf.mxu0
      %v1508 = vadd.f32 %v1469, %v1507
      %v1509 = vpop.f32.mrf.mxu0
      %1510 = vdwg.mxu0
      %v1511 = vadd.f32 %v1419, %v1508
      %v1512 = vsel %vm1072, %v1511, 0.0
      %1513 = vadd.xlane.f32.xlu0 %v1512
      %v1514 = vpop.xlane.xlu0 %1513
      %v1515 = vmul.f32 %v1514, %v1396
      %v1516 = vsub.f32 %v1511, %v1515
      %v1517 = vmul.f32 %v1516, %v1516
      %v1518 = vsel %vm1072, %v1517, 0.0
      %1519 = vadd.xlane.f32.xlu0 %v1518
      %v1520 = vpop.xlane.xlu0 %1519
      %v1521 = vmul.f32 %v1520, %v1396
      %v1522 = vadd.f32 %v1521, 1e-05
      %v1523 = vrsqrt.pop %v1522
      %v1524 = vmul.f32 %v1523, %v1522
      %v1525 = vmul.f32 %v1524, %v1523
      %v1526 = vmul.f32 0.5, %v1525
      %v1527 = vsub.f32 1.5, %v1526
      %v1528 = vmul.f32 %v1523, %v1527
      %vm1529 = vweird.f32 %v1522
      %vm1530 = vweird.f32 %v1523
      %vm1531 = vmor %vm1529, %vm1530
      %v1532 = vsel %vm1531, %v1523, %v1528
      %v1533 = vmul.f32 %v1516, %v1532
      %v1534 = vperm.slane %v1045, 2
      %v1535 = vmul.f32 %v1533, %v1534
      %v1536 = vperm.slane %v1045, 3
      %v1537 = vadd.f32 %v1535, %v1536
      %s1538 = scalar_lea.vmem %s47, 4
      %v1539 = vld [vmem:[%s1538] sm:$0xf]
      %s1540 = scalar_lea.vmem %s55, 16
      %v1541 = vld [vmem:[%s1540] sm:$0xf]
      %v1542 = vld [vmem:[%s1540 + $0x4] sm:$0xf]
      %v1543 = vld [vmem:[%s1540 + $0x8] sm:$0xf]
      %v1544 = vld [vmem:[%s1540 + $0xc] sm:$0xf]
      %s1545 = scalar_lea.vmem %s45, 1
      %v1546 = vld [vmem:[%s1545] sm:$0x1]
      %s1547 = scalar_lea.vmem %s53, 16
      %v1548 = vld [vmem:[%s1547] sm:$0xf]
      %v1549 = vld [vmem:[%s1547 + $0x4] sm:$0xf]
      %v1550 = vld [vmem:[%s1547 + $0x8] sm:$0xf]
      %v1551 = vld [vmem:[%s1547 + $0xc] sm:$0xf]
      %s1552 = scalar_lea.vmem %s43, 1
      %v1553 = vld [vmem:[%s1552] sm:$0x1]
      %v1554 = vpack.c.bf16 %v1537, %v1537
      %v1556 = vperm.slane %v1546, 0
      %v1562 = vunpack.c.l.b16 %v1541
      %v1563 = vunpack.c.l.b16 %v1542
      %v1564 = vunpack.c.l.b16 %v1543
      %v1565 = vunpack.c.l.b16 %v1544
      %v1566 = vpack.c.b16 %v1563, %v1562
      %v1567 = vpack.c.b16 %v1565, %v1564
      %v1571 = vsel %vm1072, %v1554, 0
      %1573 = vmatpush.bf16.msra.mxu0 0
      %1574 = vmatpush.bf16.msra.mxu0 0
      %1575 = vmatpush.bf16.msra.mxu0 0
      %1576 = vmatpush.bf16.msra.mxu0 0
      %1577 = vmatpush.bf16.msra.mxu0 0
      %1578 = vmatpush.bf16.msra.mxu0 0
      %1579 = vmatpush.bf16.msra.mxu0 %v1567
      %1580 = vmatpush.bf16.msra.mxu0 %v1566
      %1581 = vmatmul.bf16.gmra.mxu0 %v1571
      %v1582 = vpop.f32.mrf.mxu0
      %v1583 = vadd.f32 %v1556, %v1582
      %v1584 = vpop.f32.mrf.mxu0
      %1585 = vdwg.mxu0
      %1587 = vrot.lane.b32.xlu0 %v1583, 120
      %v1588 = vpop.permute.xlu0 %1587
      %1590 = vrot.lane.b32.xlu0 %v1583, 112
      %v1591 = vpop.permute.xlu0 %1590
      %1593 = vrot.lane.b32.xlu0 %v1583, 104
      %v1594 = vpop.permute.xlu0 %1593
      %v1596 = vpack.c.bf16 %v1583, %v1583
      %v1597 = vpack.c.bf16 %v1588, %v1588
      %v1598 = vpack.c.bf16 %v1591, %v1591
      %v1599 = vpack.c.bf16 %v1594, %v1594
      %v1601 = vunpack.c.l.b16 %v1596
      %v1602 = vpack.c.b16 %v1601, %v1601
      %1603 = vrot.lane.b32.xlu0 %v1602, 96
      %v1604 = vpop.permute.xlu0 %1603
      %v1606 = vsel %vm1108, %v1596, 0
      %v1609 = vsel %vm1108, %v1604, 0
      %1611 = vmatpush.bf16.xpose.msra.mxu0 0
      %1612 = vmatpush.bf16.xpose.msra.mxu0 0
      %1613 = vmatpush.bf16.xpose.msra.mxu0 0
      %1614 = vmatpush.bf16.xpose.msra.mxu0 0
      %1615 = vmatpush.bf16.xpose.msra.mxu0 0
      %1616 = vmatpush.bf16.xpose.msra.mxu0 0
      %1617 = vmatpush.bf16.xpose.msra.mxu0 0
      %1618 = vmatpush.bf16.xpose.msra.mxu0 %v1609
      %1619 = vmatmul.bf16.gmra.mxu0 %v1606
      %v1620 = vpop.f32.mrf.mxu0
      %v1621 = vadd.f32 0.0, %v1620
      %v1622 = vpop.f32.mrf.mxu0
      %1623 = vdwg.mxu0
      %v1625 = vunpack.c.l.b16 %v1597
      %v1626 = vpack.c.b16 %v1625, %v1625
      %1627 = vrot.lane.b32.xlu0 %v1626, 96
      %v1628 = vpop.permute.xlu0 %1627
      %v1630 = vsel %vm1108, %v1597, 0
      %v1633 = vsel %vm1108, %v1628, 0
      %1635 = vmatpush.bf16.xpose.msra.mxu0 0
      %1636 = vmatpush.bf16.xpose.msra.mxu0 0
      %1637 = vmatpush.bf16.xpose.msra.mxu0 0
      %1638 = vmatpush.bf16.xpose.msra.mxu0 0
      %1639 = vmatpush.bf16.xpose.msra.mxu0 0
      %1640 = vmatpush.bf16.xpose.msra.mxu0 0
      %1641 = vmatpush.bf16.xpose.msra.mxu0 0
      %1642 = vmatpush.bf16.xpose.msra.mxu0 %v1633
      %1643 = vmatmul.bf16.gmra.mxu0 %v1630
      %v1644 = vpop.f32.mrf.mxu0
      %v1645 = vadd.f32 0.0, %v1644
      %v1646 = vpop.f32.mrf.mxu0
      %1647 = vdwg.mxu0
      %v1649 = vunpack.c.l.b16 %v1598
      %v1650 = vpack.c.b16 %v1649, %v1649
      %1651 = vrot.lane.b32.xlu0 %v1650, 96
      %v1652 = vpop.permute.xlu0 %1651
      %v1654 = vsel %vm1108, %v1598, 0
      %v1657 = vsel %vm1108, %v1652, 0
      %1659 = vmatpush.bf16.xpose.msra.mxu0 0
      %1660 = vmatpush.bf16.xpose.msra.mxu0 0
      %1661 = vmatpush.bf16.xpose.msra.mxu0 0
      %1662 = vmatpush.bf16.xpose.msra.mxu0 0
      %1663 = vmatpush.bf16.xpose.msra.mxu0 0
      %1664 = vmatpush.bf16.xpose.msra.mxu0 0
      %1665 = vmatpush.bf16.xpose.msra.mxu0 0
      %1666 = vmatpush.bf16.xpose.msra.mxu0 %v1657
      %1667 = vmatmul.bf16.gmra.mxu0 %v1654
      %v1668 = vpop.f32.mrf.mxu0
      %v1669 = vadd.f32 0.0, %v1668
      %v1670 = vpop.f32.mrf.mxu0
      %1671 = vdwg.mxu0
      %v1673 = vunpack.c.l.b16 %v1599
      %v1674 = vpack.c.b16 %v1673, %v1673
      %1675 = vrot.lane.b32.xlu0 %v1674, 96
      %v1676 = vpop.permute.xlu0 %1675
      %v1678 = vsel %vm1108, %v1599, 0
      %v1681 = vsel %vm1108, %v1676, 0
      %1683 = vmatpush.bf16.xpose.msra.mxu0 0
      %1684 = vmatpush.bf16.xpose.msra.mxu0 0
      %1685 = vmatpush.bf16.xpose.msra.mxu0 0
      %1686 = vmatpush.bf16.xpose.msra.mxu0 0
      %1687 = vmatpush.bf16.xpose.msra.mxu0 0
      %1688 = vmatpush.bf16.xpose.msra.mxu0 0
      %1689 = vmatpush.bf16.xpose.msra.mxu0 0
      %1690 = vmatpush.bf16.xpose.msra.mxu0 %v1681
      %1691 = vmatmul.bf16.gmra.mxu0 %v1678
      %v1692 = vpop.f32.mrf.mxu0
      %v1693 = vadd.f32 0.0, %v1692
      %v1694 = vpop.f32.mrf.mxu0
      %1695 = vdwg.mxu0
      %v1696 = vmul.f32 %v1621, 0.35355338
      %v1697 = vmul.f32 %v1645, 0.35355338
      %v1698 = vmul.f32 %v1669, 0.35355338
      %v1699 = vmul.f32 %v1693, 0.35355338
      %v1700 = vsel %vm1108, %v1696, -inf
      %1701 = vmax.xlane.f32.xlu0 %v1700
      %v1702 = vpop.xlane.xlu0 %1701
      %v1703 = vsel %vm1108, %v1697, -inf
      %1704 = vmax.xlane.f32.xlu0 %v1703
      %v1705 = vpop.xlane.xlu0 %1704
      %v1706 = vsel %vm1108, %v1698, -inf
      %1707 = vmax.xlane.f32.xlu0 %v1706
      %v1708 = vpop.xlane.xlu0 %1707
      %v1709 = vsel %vm1108, %v1699, -inf
      %1710 = vmax.xlane.f32.xlu0 %v1709
      %v1711 = vpop.xlane.xlu0 %1710
      %v1712 = vsub.f32 %v1696, %v1702
      %v1713 = vsub.f32 %v1697, %v1705
      %v1714 = vsub.f32 %v1698, %v1708
      %v1715 = vsub.f32 %v1699, %v1711
      %v1716 = vmul.f32 %v1712, 1.442695
      %v1717 = vpow.pop %v1716
      %v1718 = vmul.f32 %v1713, 1.442695
      %v1719 = vpow.pop %v1718
      %v1720 = vmul.f32 %v1714, 1.442695
      %v1721 = vpow.pop %v1720
      %v1722 = vmul.f32 %v1715, 1.442695
      %v1723 = vpow.pop %v1722
      %v1724 = vsel %vm1108, %v1717, 0.0
      %1725 = vadd.xlane.f32.xlu0 %v1724
      %v1726 = vpop.xlane.xlu0 %1725
      %v1727 = vsel %vm1108, %v1719, 0.0
      %1728 = vadd.xlane.f32.xlu0 %v1727
      %v1729 = vpop.xlane.xlu0 %1728
      %v1730 = vsel %vm1108, %v1721, 0.0
      %1731 = vadd.xlane.f32.xlu0 %v1730
      %v1732 = vpop.xlane.xlu0 %1731
      %v1733 = vsel %vm1108, %v1723, 0.0
      %1734 = vadd.xlane.f32.xlu0 %v1733
      %v1735 = vpop.xlane.xlu0 %1734
      %v1736 = vrcp.pop %v1726
      %v1737 = vrcp.pop %v1729
      %v1738 = vrcp.pop %v1732
      %v1739 = vrcp.pop %v1735
      %v1740 = vmul.f32 %v1717, %v1736
      %v1741 = vmul.f32 %v1719, %v1737
      %v1742 = vmul.f32 %v1721, %v1738
      %v1743 = vmul.f32 %v1723, %v1739
      %v1744 = vpack.c.bf16 %v1740, %v1740
      %v1745 = vpack.c.bf16 %v1741, %v1741
      %v1746 = vpack.c.bf16 %v1742, %v1742
      %v1747 = vpack.c.bf16 %v1743, %v1743
      %1748 = vrot.lane.b32.xlu0 %v1602, 64
      %v1749 = vpop.permute.xlu0 %1748
      %v1751 = vsel %vm1108, %v1744, 0
      %v1754 = vsel %vm1257, %v1749, 0
      %1756 = vmatpush.bf16.msra.mxu0 0
      %1757 = vmatpush.bf16.msra.mxu0 0
      %1758 = vmatpush.bf16.msra.mxu0 0
      %1759 = vmatpush.bf16.msra.mxu0 0
      %1760 = vmatpush.bf16.msra.mxu0 0
      %1761 = vmatpush.bf16.msra.mxu0 0
      %1762 = vmatpush.bf16.msra.mxu0 0
      %1763 = vmatpush.bf16.msra.mxu0 %v1754
      %1764 = vmatmul.bf16.gmra.mxu0 %v1751
      %v1765 = vpop.f32.mrf.mxu0
      %v1766 = vadd.f32 0.0, %v1765
      %v1767 = vpop.f32.mrf.mxu0
      %1768 = vdwg.mxu0
      %1769 = vrot.lane.b32.xlu0 %v1626, 64
      %v1770 = vpop.permute.xlu0 %1769
      %v1772 = vsel %vm1108, %v1745, 0
      %v1775 = vsel %vm1257, %v1770, 0
      %1777 = vmatpush.bf16.msra.mxu0 0
      %1778 = vmatpush.bf16.msra.mxu0 0
      %1779 = vmatpush.bf16.msra.mxu0 0
      %1780 = vmatpush.bf16.msra.mxu0 0
      %1781 = vmatpush.bf16.msra.mxu0 0
      %1782 = vmatpush.bf16.msra.mxu0 0
      %1783 = vmatpush.bf16.msra.mxu0 0
      %1784 = vmatpush.bf16.msra.mxu0 %v1775
      %1785 = vmatmul.bf16.gmra.mxu0 %v1772
      %v1786 = vpop.f32.mrf.mxu0
      %v1787 = vadd.f32 0.0, %v1786
      %v1788 = vpop.f32.mrf.mxu0
      %1789 = vdwg.mxu0
      %1790 = vrot.lane.b32.xlu0 %v1650, 64
      %v1791 = vpop.permute.xlu0 %1790
      %v1793 = vsel %vm1108, %v1746, 0
      %v1796 = vsel %vm1257, %v1791, 0
      %1798 = vmatpush.bf16.msra.mxu0 0
      %1799 = vmatpush.bf16.msra.mxu0 0
      %1800 = vmatpush.bf16.msra.mxu0 0
      %1801 = vmatpush.bf16.msra.mxu0 0
      %1802 = vmatpush.bf16.msra.mxu0 0
      %1803 = vmatpush.bf16.msra.mxu0 0
      %1804 = vmatpush.bf16.msra.mxu0 0
      %1805 = vmatpush.bf16.msra.mxu0 %v1796
      %1806 = vmatmul.bf16.gmra.mxu0 %v1793
      %v1807 = vpop.f32.mrf.mxu0
      %v1808 = vadd.f32 0.0, %v1807
      %v1809 = vpop.f32.mrf.mxu0
      %1810 = vdwg.mxu0
      %1811 = vrot.lane.b32.xlu0 %v1674, 64
      %v1812 = vpop.permute.xlu0 %1811
      %v1814 = vsel %vm1108, %v1747, 0
      %v1817 = vsel %vm1257, %v1812, 0
      %1819 = vmatpush.bf16.msra.mxu0 0
      %1820 = vmatpush.bf16.msra.mxu0 0
      %1821 = vmatpush.bf16.msra.mxu0 0
      %1822 = vmatpush.bf16.msra.mxu0 0
      %1823 = vmatpush.bf16.msra.mxu0 0
      %1824 = vmatpush.bf16.msra.mxu0 0
      %1825 = vmatpush.bf16.msra.mxu0 0
      %1826 = vmatpush.bf16.msra.mxu0 %v1817
      %1827 = vmatmul.bf16.gmra.mxu0 %v1814
      %v1828 = vpop.f32.mrf.mxu0
      %v1829 = vadd.f32 0.0, %v1828
      %v1830 = vpop.f32.mrf.mxu0
      %1831 = vdwg.mxu0
      %1833 = vrot.lane.b32.xlu0 %v1787, 8
      %v1834 = vpop.permute.xlu0 %1833
      %1837 = vrot.lane.b32.xlu0 %v1808, 16
      %v1838 = vpop.permute.xlu0 %1837
      %1841 = vrot.lane.b32.xlu0 %v1829, 24
      %v1842 = vpop.permute.xlu0 %1841
      %v1844 = vsel %vm1108, %v1766, %v1834
      %v1845 = vsel %vm1350, %v1844, %v1838
      %v1846 = vsel %vm1352, %v1845, %v1842
      %v1847 = vpack.c.bf16 %v1846, %v1846
      %v1849 = vperm.slane %v1553, 0
      %v1855 = vunpack.c.l.b16 %v1548
      %v1856 = vunpack.c.l.b16 %v1549
      %v1857 = vunpack.c.l.b16 %v1550
      %v1858 = vunpack.c.l.b16 %v1551
      %v1859 = vpack.c.b16 %v1856, %v1855
      %v1860 = vpack.c.b16 %v1858, %v1857
      %v1864 = vsel %vm1072, %v1847, 0
      %1866 = vmatpush.bf16.msra.mxu0 0
      %1867 = vmatpush.bf16.msra.mxu0 0
      %1868 = vmatpush.bf16.msra.mxu0 0
      %1869 = vmatpush.bf16.msra.mxu0 0
      %1870 = vmatpush.bf16.msra.mxu0 0
      %1871 = vmatpush.bf16.msra.mxu0 0
      %1872 = vmatpush.bf16.msra.mxu0 %v1860
      %1873 = vmatpush.bf16.msra.mxu0 %v1859
      %1874 = vmatmul.bf16.gmra.mxu0 %v1864
      %v1875 = vpop.f32.mrf.mxu0
      %v1876 = vadd.f32 %v1849, %v1875
      %v1877 = vpop.f32.mrf.mxu0
      %1878 = vdwg.mxu0
      %v1879 = vadd.f32 %v1537, %v1876
      %v1880 = vsel %vm1072, %v1879, 0.0
      %1881 = vadd.xlane.f32.xlu0 %v1880
      %v1882 = vpop.xlane.xlu0 %1881
      %v1883 = vmul.f32 %v1882, %v1396
      %v1884 = vsub.f32 %v1879, %v1883
      %v1885 = vmul.f32 %v1884, %v1884
      %v1886 = vsel %vm1072, %v1885, 0.0
      %1887 = vadd.xlane.f32.xlu0 %v1886
      %v1888 = vpop.xlane.xlu0 %1887
      %v1889 = vmul.f32 %v1888, %v1396
      %v1890 = vadd.f32 %v1889, 1e-05
      %v1891 = vrsqrt.pop %v1890
      %v1892 = vmul.f32 %v1891, %v1890
      %v1893 = vmul.f32 %v1892, %v1891
      %v1894 = vmul.f32 0.5, %v1893
      %v1895 = vsub.f32 1.5, %v1894
      %v1896 = vmul.f32 %v1891, %v1895
      %vm1897 = vweird.f32 %v1890
      %vm1898 = vweird.f32 %v1891
      %vm1899 = vmor %vm1897, %vm1898
      %v1900 = vsel %vm1899, %v1891, %v1896
      %v1901 = vmul.f32 %v1884, %v1900
      %v1902 = vperm.slane %v1539, 0
      %v1903 = vmul.f32 %v1901, %v1902
      %v1904 = vperm.slane %v1539, 1
      %v1905 = vadd.f32 %v1903, %v1904
      %s1906 = scalar_lea.vmem %s49, 16
      %v1907 = vld [vmem:[%s1906] sm:$0xf]
      %v1908 = vld [vmem:[%s1906 + $0x4] sm:$0xf]
      %v1909 = vld [vmem:[%s1906 + $0x8] sm:$0xf]
      %v1910 = vld [vmem:[%s1906 + $0xc] sm:$0xf]
      %s1911 = scalar_lea.vmem %s39, 1
      %v1912 = vld [vmem:[%s1911] sm:$0x1]
      %s1913 = scalar_lea.vmem %s51, 32
      %v1914 = vld [vmem:[%s1913] sm:$0xf]
      %v1915 = vld [vmem:[%s1913 + $0x4] sm:$0xf]
      %v1916 = vld [vmem:[%s1913 + $0x8] sm:$0xf]
      %v1917 = vld [vmem:[%s1913 + $0xc] sm:$0xf]
      %v1918 = vld [vmem:[%s1913 + $0x10] sm:$0xf]
      %v1919 = vld [vmem:[%s1913 + $0x14] sm:$0xf]
      %v1920 = vld [vmem:[%s1913 + $0x18] sm:$0xf]
      %v1921 = vld [vmem:[%s1913 + $0x1c] sm:$0xf]
      %s1922 = scalar_lea.vmem %s41, 1
      %v1923 = vld [vmem:[%s1922] sm:$0x1]
      %v1924 = vpack.c.bf16 %v1905, %v1905
      %v1926 = vperm.slane %v1912, 0
      %v1932 = vunpack.c.l.b16 %v1907
      %v1933 = vunpack.c.l.b16 %v1908
      %v1934 = vunpack.c.l.b16 %v1909
      %v1935 = vunpack.c.l.b16 %v1910
      %v1936 = vpack.c.b16 %v1933, %v1932
      %v1937 = vpack.c.b16 %v1935, %v1934
      %v1941 = vsel %vm1072, %v1924, 0
      %1943 = vmatpush.bf16.msra.mxu0 0
      %1944 = vmatpush.bf16.msra.mxu0 0
      %1945 = vmatpush.bf16.msra.mxu0 0
      %1946 = vmatpush.bf16.msra.mxu0 0
      %1947 = vmatpush.bf16.msra.mxu0 0
      %1948 = vmatpush.bf16.msra.mxu0 0
      %1949 = vmatpush.bf16.msra.mxu0 %v1937
      %1950 = vmatpush.bf16.msra.mxu0 %v1936
      %1951 = vmatmul.bf16.gmra.mxu0 %v1941
      %v1952 = vpop.f32.mrf.mxu0
      %v1953 = vadd.f32 %v1926, %v1952
      %v1954 = vpop.f32.mrf.mxu0
      %1955 = vdwg.mxu0
      %v1956 = vmax.f32 %v1953, 0.0
      %v1957 = vpack.c.bf16 %v1956, %v1956
      %v1959 = vperm.slane %v1923, 0
      %v1969 = vunpack.c.l.b16 %v1914
      %v1970 = vunpack.c.l.b16 %v1915
      %v1971 = vunpack.c.l.b16 %v1916
      %v1972 = vunpack.c.l.b16 %v1917
      %v1973 = vunpack.c.l.b16 %v1918
      %v1974 = vunpack.c.l.b16 %v1919
      %v1975 = vunpack.c.l.b16 %v1920
      %v1976 = vunpack.c.l.b16 %v1921
      %v1977 = vpack.c.b16 %v1970, %v1969
      %v1978 = vpack.c.b16 %v1972, %v1971
      %v1979 = vpack.c.b16 %v1974, %v1973
      %v1980 = vpack.c.b16 %v1976, %v1975
      %v1986 = vsel %vm1011, %v1957, 0
      %1988 = vmatpush.bf16.msra.mxu0 0
      %1989 = vmatpush.bf16.msra.mxu0 0
      %1990 = vmatpush.bf16.msra.mxu0 0
      %1991 = vmatpush.bf16.msra.mxu0 0
      %1992 = vmatpush.bf16.msra.mxu0 %v1980
      %1993 = vmatpush.bf16.msra.mxu0 %v1979
      %1994 = vmatpush.bf16.msra.mxu0 %v1978
      %1995 = vmatpush.bf16.msra.mxu0 %v1977
      %1996 = vmatmul.bf16.gmra.mxu0 %v1986
      %v1997 = vpop.f32.mrf.mxu0
      %v1998 = vadd.f32 %v1959, %v1997
      %v1999 = vpop.f32.mrf.mxu0
      %2000 = vdwg.mxu0
      %v2001 = vadd.f32 %v1905, %v1998
      %v2002 = vsel %vm1072, %v2001, 0.0
      %2003 = vadd.xlane.f32.xlu0 %v2002
      %v2004 = vpop.xlane.xlu0 %2003
      %v2005 = vmul.f32 %v2004, %v1396
      %v2006 = vsub.f32 %v2001, %v2005
      %v2007 = vmul.f32 %v2006, %v2006
      %v2008 = vsel %vm1072, %v2007, 0.0
      %2009 = vadd.xlane.f32.xlu0 %v2008
      %v2010 = vpop.xlane.xlu0 %2009
      %v2011 = vmul.f32 %v2010, %v1396
      %v2012 = vadd.f32 %v2011, 1e-05
      %v2013 = vrsqrt.pop %v2012
      %v2014 = vmul.f32 %v2013, %v2012
      %v2015 = vmul.f32 %v2014, %v2013
      %v2016 = vmul.f32 0.5, %v2015
      %v2017 = vsub.f32 1.5, %v2016
      %v2018 = vmul.f32 %v2013, %v2017
      %vm2019 = vweird.f32 %v2012
      %vm2020 = vweird.f32 %v2013
      %vm2021 = vmor %vm2019, %vm2020
      %v2022 = vsel %vm2021, %v2013, %v2018
      %v2023 = vmul.f32 %v2006, %v2022
      %v2024 = vperm.slane %v1539, 2
      %v2025 = vmul.f32 %v2023, %v2024
      %v2026 = vperm.slane %v1539, 3
      %v2027 = vadd.f32 %v2025, %v2026
      %v2028 = vld [vmem:[%s61] sm:$0xf]
      %v2029 = vsel %vm1072, %v2027, 0.0
      %2030 = vadd.xlane.f32.xlu0 %v2029
      %v2031 = vpop.xlane.xlu0 %2030
      %v2032 = vmul.f32 %v2031, %v1396
      %v2033 = vsub.f32 %v2027, %v2032
      %v2034 = vmul.f32 %v2033, %v2033
      %v2035 = vsel %vm1072, %v2034, 0.0
      %2036 = vadd.xlane.f32.xlu0 %v2035
      %v2037 = vpop.xlane.xlu0 %2036
      %v2038 = vmul.f32 %v2037, %v1396
      %v2039 = vadd.f32 %v2038, 1e-05
      %v2040 = vrsqrt.pop %v2039
      %v2041 = vmul.f32 %v2040, %v2039
      %v2042 = vmul.f32 %v2041, %v2040
      %v2043 = vmul.f32 0.5, %v2042
      %v2044 = vsub.f32 1.5, %v2043
      %v2045 = vmul.f32 %v2040, %v2044
      %vm2046 = vweird.f32 %v2039
      %vm2047 = vweird.f32 %v2040
      %vm2048 = vmor %vm2046, %vm2047
      %v2049 = vsel %vm2048, %v2040, %v2045
      %v2050 = vmul.f32 %v2033, %v2049
      %v2051 = vperm.slane %v2028, 0
      %v2052 = vmul.f32 %v2050, %v2051
      %v2053 = vperm.slane %v2028, 1
      %v2054 = vadd.f32 %v2052, %v2053
      %v2055 = vld [vmem:[%s19] sm:$0x3f]
      %v2056 = vld [vmem:[%s33] sm:$0xf]
      %v2057 = vld [vmem:[%s33 + $0x4] sm:$0xf]
      %v2058 = vld [vmem:[%s33 + $0x8] sm:$0xf]
      %v2059 = vld [vmem:[%s33 + $0xc] sm:$0xf]
      %v2060 = vld [vmem:[%s17] sm:$0x1]
      %v2061 = vld [vmem:[%s29] sm:$0xf]
      %v2062 = vld [vmem:[%s29 + $0x4] sm:$0xf]
      %v2063 = vld [vmem:[%s29 + $0x8] sm:$0xf]
      %v2064 = vld [vmem:[%s29 + $0xc] sm:$0xf]
      %v2065 = vld [vmem:[%s13] sm:$0x1]
      %v2066 = vpack.c.bf16 %v1042, %v1042
      %v2068 = vperm.slane %v2060, 0
      %v2074 = vunpack.c.l.b16 %v2056
      %v2075 = vunpack.c.l.b16 %v2057
      %v2076 = vunpack.c.l.b16 %v2058
      %v2077 = vunpack.c.l.b16 %v2059
      %v2078 = vpack.c.b16 %v2075, %v2074
      %v2079 = vpack.c.b16 %v2077, %v2076
      %v2083 = vsel %vm1072, %v2066, 0
      %2085 = vmatpush.bf16.msra.mxu0 0
      %2086 = vmatpush.bf16.msra.mxu0 0
      %2087 = vmatpush.bf16.msra.mxu0 0
      %2088 = vmatpush.bf16.msra.mxu0 0
      %2089 = vmatpush.bf16.msra.mxu0 0
      %2090 = vmatpush.bf16.msra.mxu0 0
      %2091 = vmatpush.bf16.msra.mxu0 %v2079
      %2092 = vmatpush.bf16.msra.mxu0 %v2078
      %2093 = vmatmul.bf16.gmra.mxu0 %v2083
      %v2094 = vpop.f32.mrf.mxu0
      %v2095 = vadd.f32 %v2068, %v2094
      %v2096 = vpop.f32.mrf.mxu0
      %2097 = vdwg.mxu0
      %2099 = vrot.lane.b32.xlu0 %v2095, 120
      %v2100 = vpop.permute.xlu0 %2099
      %2102 = vrot.lane.b32.xlu0 %v2095, 112
      %v2103 = vpop.permute.xlu0 %2102
      %2105 = vrot.lane.b32.xlu0 %v2095, 104
      %v2106 = vpop.permute.xlu0 %2105
      %v2108 = vpack.c.bf16 %v2095, %v2095
      %v2109 = vpack.c.bf16 %v2100, %v2100
      %v2110 = vpack.c.bf16 %v2103, %v2103
      %v2111 = vpack.c.bf16 %v2106, %v2106
      %v2113 = vunpack.c.l.b16 %v2108
      %v2114 = vpack.c.b16 %v2113, %v2113
      %2115 = vrot.lane.b32.xlu0 %v2114, 96
      %v2116 = vpop.permute.xlu0 %2115
      %v2118 = vsel %vm1108, %v2108, 0
      %v2121 = vsel %vm1108, %v2116, 0
      %2123 = vmatpush.bf16.xpose.msra.mxu0 0
      %2124 = vmatpush.bf16.xpose.msra.mxu0 0
      %2125 = vmatpush.bf16.xpose.msra.mxu0 0
      %2126 = vmatpush.bf16.xpose.msra.mxu0 0
      %2127 = vmatpush.bf16.xpose.msra.mxu0 0
      %2128 = vmatpush.bf16.xpose.msra.mxu0 0
      %2129 = vmatpush.bf16.xpose.msra.mxu0 0
      %2130 = vmatpush.bf16.xpose.msra.mxu0 %v2121
      %2131 = vmatmul.bf16.gmra.mxu0 %v2118
      %v2132 = vpop.f32.mrf.mxu0
      %v2133 = vadd.f32 0.0, %v2132
      %v2134 = vpop.f32.mrf.mxu0
      %2135 = vdwg.mxu0
      %v2137 = vunpack.c.l.b16 %v2109
      %v2138 = vpack.c.b16 %v2137, %v2137
      %2139 = vrot.lane.b32.xlu0 %v2138, 96
      %v2140 = vpop.permute.xlu0 %2139
      %v2142 = vsel %vm1108, %v2109, 0
      %v2145 = vsel %vm1108, %v2140, 0
      %2147 = vmatpush.bf16.xpose.msra.mxu0 0
      %2148 = vmatpush.bf16.xpose.msra.mxu0 0
      %2149 = vmatpush.bf16.xpose.msra.mxu0 0
      %2150 = vmatpush.bf16.xpose.msra.mxu0 0
      %2151 = vmatpush.bf16.xpose.msra.mxu0 0
      %2152 = vmatpush.bf16.xpose.msra.mxu0 0
      %2153 = vmatpush.bf16.xpose.msra.mxu0 0
      %2154 = vmatpush.bf16.xpose.msra.mxu0 %v2145
      %2155 = vmatmul.bf16.gmra.mxu0 %v2142
      %v2156 = vpop.f32.mrf.mxu0
      %v2157 = vadd.f32 0.0, %v2156
      %v2158 = vpop.f32.mrf.mxu0
      %2159 = vdwg.mxu0
      %v2161 = vunpack.c.l.b16 %v2110
      %v2162 = vpack.c.b16 %v2161, %v2161
      %2163 = vrot.lane.b32.xlu0 %v2162, 96
      %v2164 = vpop.permute.xlu0 %2163
      %v2166 = vsel %vm1108, %v2110, 0
      %v2169 = vsel %vm1108, %v2164, 0
      %2171 = vmatpush.bf16.xpose.msra.mxu0 0
      %2172 = vmatpush.bf16.xpose.msra.mxu0 0
      %2173 = vmatpush.bf16.xpose.msra.mxu0 0
      %2174 = vmatpush.bf16.xpose.msra.mxu0 0
      %2175 = vmatpush.bf16.xpose.msra.mxu0 0
      %2176 = vmatpush.bf16.xpose.msra.mxu0 0
      %2177 = vmatpush.bf16.xpose.msra.mxu0 0
      %2178 = vmatpush.bf16.xpose.msra.mxu0 %v2169
      %2179 = vmatmul.bf16.gmra.mxu0 %v2166
      %v2180 = vpop.f32.mrf.mxu0
      %v2181 = vadd.f32 0.0, %v2180
      %v2182 = vpop.f32.mrf.mxu0
      %2183 = vdwg.mxu0
      %v2185 = vunpack.c.l.b16 %v2111
      %v2186 = vpack.c.b16 %v2185, %v2185
      %2187 = vrot.lane.b32.xlu0 %v2186, 96
      %v2188 = vpop.permute.xlu0 %2187
      %v2190 = vsel %vm1108, %v2111, 0
      %v2193 = vsel %vm1108, %v2188, 0
      %2195 = vmatpush.bf16.xpose.msra.mxu0 0
      %2196 = vmatpush.bf16.xpose.msra.mxu0 0
      %2197 = vmatpush.bf16.xpose.msra.mxu0 0
      %2198 = vmatpush.bf16.xpose.msra.mxu0 0
      %2199 = vmatpush.bf16.xpose.msra.mxu0 0
      %2200 = vmatpush.bf16.xpose.msra.mxu0 0
      %2201 = vmatpush.bf16.xpose.msra.mxu0 0
      %2202 = vmatpush.bf16.xpose.msra.mxu0 %v2193
      %2203 = vmatmul.bf16.gmra.mxu0 %v2190
      %v2204 = vpop.f32.mrf.mxu0
      %v2205 = vadd.f32 0.0, %v2204
      %v2206 = vpop.f32.mrf.mxu0
      %2207 = vdwg.mxu0
      %v2208 = vmul.f32 %v2133, 0.35355338
      %v2209 = vmul.f32 %v2157, 0.35355338
      %v2210 = vmul.f32 %v2181, 0.35355338
      %v2211 = vmul.f32 %v2205, 0.35355338
      %v2212 = vsel %vm1108, %v2208, -inf
      %2213 = vmax.xlane.f32.xlu0 %v2212
      %v2214 = vpop.xlane.xlu0 %2213
      %v2215 = vsel %vm1108, %v2209, -inf
      %2216 = vmax.xlane.f32.xlu0 %v2215
      %v2217 = vpop.xlane.xlu0 %2216
      %v2218 = vsel %vm1108, %v2210, -inf
      %2219 = vmax.xlane.f32.xlu0 %v2218
      %v2220 = vpop.xlane.xlu0 %2219
      %v2221 = vsel %vm1108, %v2211, -inf
      %2222 = vmax.xlane.f32.xlu0 %v2221
      %v2223 = vpop.xlane.xlu0 %2222
      %v2224 = vsub.f32 %v2208, %v2214
      %v2225 = vsub.f32 %v2209, %v2217
      %v2226 = vsub.f32 %v2210, %v2220
      %v2227 = vsub.f32 %v2211, %v2223
      %v2228 = vmul.f32 %v2224, 1.442695
      %v2229 = vpow.pop %v2228
      %v2230 = vmul.f32 %v2225, 1.442695
      %v2231 = vpow.pop %v2230
      %v2232 = vmul.f32 %v2226, 1.442695
      %v2233 = vpow.pop %v2232
      %v2234 = vmul.f32 %v2227, 1.442695
      %v2235 = vpow.pop %v2234
      %v2236 = vsel %vm1108, %v2229, 0.0
      %2237 = vadd.xlane.f32.xlu0 %v2236
      %v2238 = vpop.xlane.xlu0 %2237
      %v2239 = vsel %vm1108, %v2231, 0.0
      %2240 = vadd.xlane.f32.xlu0 %v2239
      %v2241 = vpop.xlane.xlu0 %2240
      %v2242 = vsel %vm1108, %v2233, 0.0
      %2243 = vadd.xlane.f32.xlu0 %v2242
      %v2244 = vpop.xlane.xlu0 %2243
      %v2245 = vsel %vm1108, %v2235, 0.0
      %2246 = vadd.xlane.f32.xlu0 %v2245
      %v2247 = vpop.xlane.xlu0 %2246
      %v2248 = vrcp.pop %v2238
      %v2249 = vrcp.pop %v2241
      %v2250 = vrcp.pop %v2244
      %v2251 = vrcp.pop %v2247
      %v2252 = vmul.f32 %v2229, %v2248
      %v2253 = vmul.f32 %v2231, %v2249
      %v2254 = vmul.f32 %v2233, %v2250
      %v2255 = vmul.f32 %v2235, %v2251
      %v2256 = vpack.c.bf16 %v2252, %v2252
      %v2257 = vpack.c.bf16 %v2253, %v2253
      %v2258 = vpack.c.bf16 %v2254, %v2254
      %v2259 = vpack.c.bf16 %v2255, %v2255
      %2260 = vrot.lane.b32.xlu0 %v2114, 64
      %v2261 = vpop.permute.xlu0 %2260
      %v2263 = vsel %vm1108, %v2256, 0
      %v2266 = vsel %vm1257, %v2261, 0
      %2268 = vmatpush.bf16.msra.mxu0 0
      %2269 = vmatpush.bf16.msra.mxu0 0
      %2270 = vmatpush.bf16.msra.mxu0 0
      %2271 = vmatpush.bf16.msra.mxu0 0
      %2272 = vmatpush.bf16.msra.mxu0 0
      %2273 = vmatpush.bf16.msra.mxu0 0
      %2274 = vmatpush.bf16.msra.mxu0 0
      %2275 = vmatpush.bf16.msra.mxu0 %v2266
      %2276 = vmatmul.bf16.gmra.mxu0 %v2263
      %v2277 = vpop.f32.mrf.mxu0
      %v2278 = vadd.f32 0.0, %v2277
      %v2279 = vpop.f32.mrf.mxu0
      %2280 = vdwg.mxu0
      %2281 = vrot.lane.b32.xlu0 %v2138, 64
      %v2282 = vpop.permute.xlu0 %2281
      %v2284 = vsel %vm1108, %v2257, 0
      %v2287 = vsel %vm1257, %v2282, 0
      %2289 = vmatpush.bf16.msra.mxu0 0
      %2290 = vmatpush.bf16.msra.mxu0 0
      %2291 = vmatpush.bf16.msra.mxu0 0
      %2292 = vmatpush.bf16.msra.mxu0 0
      %2293 = vmatpush.bf16.msra.mxu0 0
      %2294 = vmatpush.bf16.msra.mxu0 0
      %2295 = vmatpush.bf16.msra.mxu0 0
      %2296 = vmatpush.bf16.msra.mxu0 %v2287
      %2297 = vmatmul.bf16.gmra.mxu0 %v2284
      %v2298 = vpop.f32.mrf.mxu0
      %v2299 = vadd.f32 0.0, %v2298
      %v2300 = vpop.f32.mrf.mxu0
      %2301 = vdwg.mxu0
      %2302 = vrot.lane.b32.xlu0 %v2162, 64
      %v2303 = vpop.permute.xlu0 %2302
      %v2305 = vsel %vm1108, %v2258, 0
      %v2308 = vsel %vm1257, %v2303, 0
      %2310 = vmatpush.bf16.msra.mxu0 0
      %2311 = vmatpush.bf16.msra.mxu0 0
      %2312 = vmatpush.bf16.msra.mxu0 0
      %2313 = vmatpush.bf16.msra.mxu0 0
      %2314 = vmatpush.bf16.msra.mxu0 0
      %2315 = vmatpush.bf16.msra.mxu0 0
      %2316 = vmatpush.bf16.msra.mxu0 0
      %2317 = vmatpush.bf16.msra.mxu0 %v2308
      %2318 = vmatmul.bf16.gmra.mxu0 %v2305
      %v2319 = vpop.f32.mrf.mxu0
      %v2320 = vadd.f32 0.0, %v2319
      %v2321 = vpop.f32.mrf.mxu0
      %2322 = vdwg.mxu0
      %2323 = vrot.lane.b32.xlu0 %v2186, 64
      %v2324 = vpop.permute.xlu0 %2323
      %v2326 = vsel %vm1108, %v2259, 0
      %v2329 = vsel %vm1257, %v2324, 0
      %2331 = vmatpush.bf16.msra.mxu0 0
      %2332 = vmatpush.bf16.msra.mxu0 0
      %2333 = vmatpush.bf16.msra.mxu0 0
      %2334 = vmatpush.bf16.msra.mxu0 0
      %2335 = vmatpush.bf16.msra.mxu0 0
      %2336 = vmatpush.bf16.msra.mxu0 0
      %2337 = vmatpush.bf16.msra.mxu0 0
      %2338 = vmatpush.bf16.msra.mxu0 %v2329
      %2339 = vmatmul.bf16.gmra.mxu0 %v2326
      %v2340 = vpop.f32.mrf.mxu0
      %v2341 = vadd.f32 0.0, %v2340
      %v2342 = vpop.f32.mrf.mxu0
      %2343 = vdwg.mxu0
      %2345 = vrot.lane.b32.xlu0 %v2299, 8
      %v2346 = vpop.permute.xlu0 %2345
      %2349 = vrot.lane.b32.xlu0 %v2320, 16
      %v2350 = vpop.permute.xlu0 %2349
      %2353 = vrot.lane.b32.xlu0 %v2341, 24
      %v2354 = vpop.permute.xlu0 %2353
      %v2356 = vsel %vm1108, %v2278, %v2346
      %v2357 = vsel %vm1350, %v2356, %v2350
      %v2358 = vsel %vm1352, %v2357, %v2354
      %v2359 = vpack.c.bf16 %v2358, %v2358
      %v2361 = vperm.slane %v2065, 0
      %v2367 = vunpack.c.l.b16 %v2061
      %v2368 = vunpack.c.l.b16 %v2062
      %v2369 = vunpack.c.l.b16 %v2063
      %v2370 = vunpack.c.l.b16 %v2064
      %v2371 = vpack.c.b16 %v2368, %v2367
      %v2372 = vpack.c.b16 %v2370, %v2369
      %v2376 = vsel %vm1072, %v2359, 0
      %2378 = vmatpush.bf16.msra.mxu0 0
      %2379 = vmatpush.bf16.msra.mxu0 0
      %2380 = vmatpush.bf16.msra.mxu0 0
      %2381 = vmatpush.bf16.msra.mxu0 0
      %2382 = vmatpush.bf16.msra.mxu0 0
      %2383 = vmatpush.bf16.msra.mxu0 0
      %2384 = vmatpush.bf16.msra.mxu0 %v2372
      %2385 = vmatpush.bf16.msra.mxu0 %v2371
      %2386 = vmatmul.bf16.gmra.mxu0 %v2376
      %v2387 = vpop.f32.mrf.mxu0
      %v2388 = vadd.f32 %v2361, %v2387
      %v2389 = vpop.f32.mrf.mxu0
      %2390 = vdwg.mxu0
      %v2391 = vadd.f32 %v1042, %v2388
      %v2392 = vsel %vm1072, %v2391, 0.0
      %2393 = vadd.xlane.f32.xlu0 %v2392
      %v2394 = vpop.xlane.xlu0 %2393
      %v2395 = vmul.f32 %v2394, %v1396
      %v2396 = vsub.f32 %v2391, %v2395
      %v2397 = vmul.f32 %v2396, %v2396
      %v2398 = vsel %vm1072, %v2397, 0.0
      %2399 = vadd.xlane.f32.xlu0 %v2398
      %v2400 = vpop.xlane.xlu0 %2399
      %v2401 = vmul.f32 %v2400, %v1396
      %v2402 = vadd.f32 %v2401, 1e-05
      %v2403 = vrsqrt.pop %v2402
      %v2404 = vmul.f32 %v2403, %v2402
      %v2405 = vmul.f32 %v2404, %v2403
      %v2406 = vmul.f32 0.5, %v2405
      %v2407 = vsub.f32 1.5, %v2406
      %v2408 = vmul.f32 %v2403, %v2407
      %vm2409 = vweird.f32 %v2402
      %vm2410 = vweird.f32 %v2403
      %vm2411 = vmor %vm2409, %vm2410
      %v2412 = vsel %vm2411, %v2403, %v2408
      %v2413 = vmul.f32 %v2396, %v2412
      %v2414 = vperm.slane %v2055, 0
      %v2415 = vmul.f32 %v2413, %v2414
      %v2416 = vperm.slane %v2055, 1
      %v2417 = vadd.f32 %v2415, %v2416
      %v2418 = vld [vmem:[%s31] sm:$0xf]
      %v2419 = vld [vmem:[%s31 + $0x4] sm:$0xf]
      %v2420 = vld [vmem:[%s31 + $0x8] sm:$0xf]
      %v2421 = vld [vmem:[%s31 + $0xc] sm:$0xf]
      %v2422 = vld [vmem:[%s15] sm:$0x1]
      %v2423 = vld [vmem:[%s25] sm:$0xf]
      %v2424 = vld [vmem:[%s25 + $0x4] sm:$0xf]
      %v2425 = vld [vmem:[%s25 + $0x8] sm:$0xf]
      %v2426 = vld [vmem:[%s25 + $0xc] sm:$0xf]
      %v2427 = vld [vmem:[%s9] sm:$0x1]
      %v2428 = vld [vmem:[%s27] sm:$0xf]
      %v2429 = vld [vmem:[%s27 + $0x4] sm:$0xf]
      %v2430 = vld [vmem:[%s27 + $0x8] sm:$0xf]
      %v2431 = vld [vmem:[%s27 + $0xc] sm:$0xf]
      %v2432 = vld [vmem:[%s11] sm:$0x1]
      %v2433 = vpack.c.bf16 %v2417, %v2417
      %v2435 = vperm.slane %v2422, 0
      %v2441 = vunpack.c.l.b16 %v2418
      %v2442 = vunpack.c.l.b16 %v2419
      %v2443 = vunpack.c.l.b16 %v2420
      %v2444 = vunpack.c.l.b16 %v2421
      %v2445 = vpack.c.b16 %v2442, %v2441
      %v2446 = vpack.c.b16 %v2444, %v2443
      %v2450 = vsel %vm1072, %v2433, 0
      %2452 = vmatpush.bf16.msra.mxu0 0
      %2453 = vmatpush.bf16.msra.mxu0 0
      %2454 = vmatpush.bf16.msra.mxu0 0
      %2455 = vmatpush.bf16.msra.mxu0 0
      %2456 = vmatpush.bf16.msra.mxu0 0
      %2457 = vmatpush.bf16.msra.mxu0 0
      %2458 = vmatpush.bf16.msra.mxu0 %v2446
      %2459 = vmatpush.bf16.msra.mxu0 %v2445
      %2460 = vmatmul.bf16.gmra.mxu0 %v2450
      %v2461 = vpop.f32.mrf.mxu0
      %v2462 = vadd.f32 %v2435, %v2461
      %v2463 = vpop.f32.mrf.mxu0
      %2464 = vdwg.mxu0
      %v2465 = vpack.c.bf16 %v2054, %v2054
      %v2467 = vperm.slane %v2427, 0
      %v2473 = vunpack.c.l.b16 %v2423
      %v2474 = vunpack.c.l.b16 %v2424
      %v2475 = vunpack.c.l.b16 %v2425
      %v2476 = vunpack.c.l.b16 %v2426
      %v2477 = vpack.c.b16 %v2474, %v2473
      %v2478 = vpack.c.b16 %v2476, %v2475
      %v2482 = vsel %vm1072, %v2465, 0
      %2484 = vmatpush.bf16.msra.mxu0 0
      %2485 = vmatpush.bf16.msra.mxu0 0
      %2486 = vmatpush.bf16.msra.mxu0 0
      %2487 = vmatpush.bf16.msra.mxu0 0
      %2488 = vmatpush.bf16.msra.mxu0 0
      %2489 = vmatpush.bf16.msra.mxu0 0
      %2490 = vmatpush.bf16.msra.mxu0 %v2478
      %2491 = vmatpush.bf16.msra.mxu0 %v2477
      %2492 = vmatmul.bf16.gmra.mxu0 %v2482
      %v2493 = vpop.f32.mrf.mxu0
      %v2494 = vadd.f32 %v2467, %v2493
      %v2495 = vpop.f32.mrf.mxu0
      %2496 = vdwg.mxu0
      %2498 = vrot.lane.b32.xlu0 %v2462, 120
      %v2499 = vpop.permute.xlu0 %2498
      %2501 = vrot.lane.b32.xlu0 %v2462, 112
      %v2502 = vpop.permute.xlu0 %2501
      %2504 = vrot.lane.b32.xlu0 %v2462, 104
      %v2505 = vpop.permute.xlu0 %2504
      %2508 = vrot.lane.b32.xlu0 %v2494, 120
      %v2509 = vpop.permute.xlu0 %2508
      %2511 = vrot.lane.b32.xlu0 %v2494, 112
      %v2512 = vpop.permute.xlu0 %2511
      %2514 = vrot.lane.b32.xlu0 %v2494, 104
      %v2515 = vpop.permute.xlu0 %2514
      %v2517 = vpack.c.bf16 %v2462, %v2462
      %v2518 = vpack.c.bf16 %v2499, %v2499
      %v2519 = vpack.c.bf16 %v2502, %v2502
      %v2520 = vpack.c.bf16 %v2505, %v2505
      %v2521 = vpack.c.bf16 %v2494, %v2494
      %v2522 = vpack.c.bf16 %v2509, %v2509
      %v2523 = vpack.c.bf16 %v2512, %v2512
      %v2524 = vpack.c.bf16 %v2515, %v2515
      %v2526 = vsel %vm1108, %v2517, 0
      %v2529 = vsel %vm1108, %v2521, 0
      %2531 = vmatpush.bf16.xpose.msra.mxu0 0
      %2532 = vmatpush.bf16.xpose.msra.mxu0 0
      %2533 = vmatpush.bf16.xpose.msra.mxu0 0
      %2534 = vmatpush.bf16.xpose.msra.mxu0 0
      %2535 = vmatpush.bf16.xpose.msra.mxu0 0
      %2536 = vmatpush.bf16.xpose.msra.mxu0 0
      %2537 = vmatpush.bf16.xpose.msra.mxu0 0
      %2538 = vmatpush.bf16.xpose.msra.mxu0 %v2529
      %2539 = vmatmul.bf16.gmra.mxu0 %v2526
      %v2540 = vpop.f32.mrf.mxu0
      %v2541 = vadd.f32 0.0, %v2540
      %v2542 = vpop.f32.mrf.mxu0
      %2543 = vdwg.mxu0
      %v2545 = vsel %vm1108, %v2518, 0
      %v2548 = vsel %vm1108, %v2522, 0
      %2550 = vmatpush.bf16.xpose.msra.mxu0 0
      %2551 = vmatpush.bf16.xpose.msra.mxu0 0
      %2552 = vmatpush.bf16.xpose.msra.mxu0 0
      %2553 = vmatpush.bf16.xpose.msra.mxu0 0
      %2554 = vmatpush.bf16.xpose.msra.mxu0 0
      %2555 = vmatpush.bf16.xpose.msra.mxu0 0
      %2556 = vmatpush.bf16.xpose.msra.mxu0 0
      %2557 = vmatpush.bf16.xpose.msra.mxu0 %v2548
      %2558 = vmatmul.bf16.gmra.mxu0 %v2545
      %v2559 = vpop.f32.mrf.mxu0
      %v2560 = vadd.f32 0.0, %v2559
      %v2561 = vpop.f32.mrf.mxu0
      %2562 = vdwg.mxu0
      %v2564 = vsel %vm1108, %v2519, 0
      %v2567 = vsel %vm1108, %v2523, 0
      %2569 = vmatpush.bf16.xpose.msra.mxu0 0
      %2570 = vmatpush.bf16.xpose.msra.mxu0 0
      %2571 = vmatpush.bf16.xpose.msra.mxu0 0
      %2572 = vmatpush.bf16.xpose.msra.mxu0 0
      %2573 = vmatpush.bf16.xpose.msra.mxu0 0
      %2574 = vmatpush.bf16.xpose.msra.mxu0 0
      %2575 = vmatpush.bf16.xpose.msra.mxu0 0
      %2576 = vmatpush.bf16.xpose.msra.mxu0 %v2567
      %2577 = vmatmul.bf16.gmra.mxu0 %v2564
      %v2578 = vpop.f32.mrf.mxu0
      %v2579 = vadd.f32 0.0, %v2578
      %v2580 = vpop.f32.mrf.mxu0
      %2581 = vdwg.mxu0
      %v2583 = vsel %vm1108, %v2520, 0
      %v2586 = vsel %vm1108, %v2524, 0
      %2588 = vmatpush.bf16.xpose.msra.mxu0 0
      %2589 = vmatpush.bf16.xpose.msra.mxu0 0
      %2590 = vmatpush.bf16.xpose.msra.mxu0 0
      %2591 = vmatpush.bf16.xpose.msra.mxu0 0
      %2592 = vmatpush.bf16.xpose.msra.mxu0 0
      %2593 = vmatpush.bf16.xpose.msra.mxu0 0
      %2594 = vmatpush.bf16.xpose.msra.mxu0 0
      %2595 = vmatpush.bf16.xpose.msra.mxu0 %v2586
      %2596 = vmatmul.bf16.gmra.mxu0 %v2583
      %v2597 = vpop.f32.mrf.mxu0
      %v2598 = vadd.f32 0.0, %v2597
      %v2599 = vpop.f32.mrf.mxu0
      %2600 = vdwg.mxu0
      %v2601 = vmul.f32 %v2541, 0.35355338
      %v2602 = vmul.f32 %v2560, 0.35355338
      %v2603 = vmul.f32 %v2579, 0.35355338
      %v2604 = vmul.f32 %v2598, 0.35355338
      %v2605 = vsel %vm1108, %v2601, -inf
      %2606 = vmax.xlane.f32.xlu0 %v2605
      %v2607 = vpop.xlane.xlu0 %2606
      %v2608 = vsel %vm1108, %v2602, -inf
      %2609 = vmax.xlane.f32.xlu0 %v2608
      %v2610 = vpop.xlane.xlu0 %2609
      %v2611 = vsel %vm1108, %v2603, -inf
      %2612 = vmax.xlane.f32.xlu0 %v2611
      %v2613 = vpop.xlane.xlu0 %2612
      %v2614 = vsel %vm1108, %v2604, -inf
      %2615 = vmax.xlane.f32.xlu0 %v2614
      %v2616 = vpop.xlane.xlu0 %2615
      %v2617 = vsub.f32 %v2601, %v2607
      %v2618 = vsub.f32 %v2602, %v2610
      %v2619 = vsub.f32 %v2603, %v2613
      %v2620 = vsub.f32 %v2604, %v2616
      %v2621 = vmul.f32 %v2617, 1.442695
      %v2622 = vpow.pop %v2621
      %v2623 = vmul.f32 %v2618, 1.442695
      %v2624 = vpow.pop %v2623
      %v2625 = vmul.f32 %v2619, 1.442695
      %v2626 = vpow.pop %v2625
      %v2627 = vmul.f32 %v2620, 1.442695
      %v2628 = vpow.pop %v2627
      %v2629 = vsel %vm1108, %v2622, 0.0
      %2630 = vadd.xlane.f32.xlu0 %v2629
      %v2631 = vpop.xlane.xlu0 %2630
      %v2632 = vsel %vm1108, %v2624, 0.0
      %2633 = vadd.xlane.f32.xlu0 %v2632
      %v2634 = vpop.xlane.xlu0 %2633
      %v2635 = vsel %vm1108, %v2626, 0.0
      %2636 = vadd.xlane.f32.xlu0 %v2635
      %v2637 = vpop.xlane.xlu0 %2636
      %v2638 = vsel %vm1108, %v2628, 0.0
      %2639 = vadd.xlane.f32.xlu0 %v2638
      %v2640 = vpop.xlane.xlu0 %2639
      %v2641 = vrcp.pop %v2631
      %v2642 = vrcp.pop %v2634
      %v2643 = vrcp.pop %v2637
      %v2644 = vrcp.pop %v2640
      %v2645 = vmul.f32 %v2622, %v2641
      %v2646 = vmul.f32 %v2624, %v2642
      %v2647 = vmul.f32 %v2626, %v2643
      %v2648 = vmul.f32 %v2628, %v2644
      %v2649 = vpack.c.bf16 %v2645, %v2645
      %v2650 = vpack.c.bf16 %v2646, %v2646
      %v2651 = vpack.c.bf16 %v2647, %v2647
      %v2652 = vpack.c.bf16 %v2648, %v2648
      %v2654 = vunpack.c.l.b16 %v2521
      %v2655 = vpack.c.b16 %v2654, %v2654
      %2656 = vrot.lane.b32.xlu0 %v2655, 96
      %v2657 = vpop.permute.xlu0 %2656
      %v2659 = vsel %vm1108, %v2649, 0
      %v2662 = vsel %vm1257, %v2657, 0
      %2664 = vmatpush.bf16.msra.mxu0 0
      %2665 = vmatpush.bf16.msra.mxu0 0
      %2666 = vmatpush.bf16.msra.mxu0 0
      %2667 = vmatpush.bf16.msra.mxu0 0
      %2668 = vmatpush.bf16.msra.mxu0 0
      %2669 = vmatpush.bf16.msra.mxu0 0
      %2670 = vmatpush.bf16.msra.mxu0 0
      %2671 = vmatpush.bf16.msra.mxu0 %v2662
      %2672 = vmatmul.bf16.gmra.mxu0 %v2659
      %v2673 = vpop.f32.mrf.mxu0
      %v2674 = vadd.f32 0.0, %v2673
      %v2675 = vpop.f32.mrf.mxu0
      %2676 = vdwg.mxu0
      %v2678 = vunpack.c.l.b16 %v2522
      %v2679 = vpack.c.b16 %v2678, %v2678
      %2680 = vrot.lane.b32.xlu0 %v2679, 96
      %v2681 = vpop.permute.xlu0 %2680
      %v2683 = vsel %vm1108, %v2650, 0
      %v2686 = vsel %vm1257, %v2681, 0
      %2688 = vmatpush.bf16.msra.mxu0 0
      %2689 = vmatpush.bf16.msra.mxu0 0
      %2690 = vmatpush.bf16.msra.mxu0 0
      %2691 = vmatpush.bf16.msra.mxu0 0
      %2692 = vmatpush.bf16.msra.mxu0 0
      %2693 = vmatpush.bf16.msra.mxu0 0
      %2694 = vmatpush.bf16.msra.mxu0 0
      %2695 = vmatpush.bf16.msra.mxu0 %v2686
      %2696 = vmatmul.bf16.gmra.mxu0 %v2683
      %v2697 = vpop.f32.mrf.mxu0
      %v2698 = vadd.f32 0.0, %v2697
      %v2699 = vpop.f32.mrf.mxu0
      %2700 = vdwg.mxu0
      %v2702 = vunpack.c.l.b16 %v2523
      %v2703 = vpack.c.b16 %v2702, %v2702
      %2704 = vrot.lane.b32.xlu0 %v2703, 96
      %v2705 = vpop.permute.xlu0 %2704
      %v2707 = vsel %vm1108, %v2651, 0
      %v2710 = vsel %vm1257, %v2705, 0
      %2712 = vmatpush.bf16.msra.mxu0 0
      %2713 = vmatpush.bf16.msra.mxu0 0
      %2714 = vmatpush.bf16.msra.mxu0 0
      %2715 = vmatpush.bf16.msra.mxu0 0
      %2716 = vmatpush.bf16.msra.mxu0 0
      %2717 = vmatpush.bf16.msra.mxu0 0
      %2718 = vmatpush.bf16.msra.mxu0 0
      %2719 = vmatpush.bf16.msra.mxu0 %v2710
      %2720 = vmatmul.bf16.gmra.mxu0 %v2707
      %v2721 = vpop.f32.mrf.mxu0
      %v2722 = vadd.f32 0.0, %v2721
      %v2723 = vpop.f32.mrf.mxu0
      %2724 = vdwg.mxu0
      %v2726 = vunpack.c.l.b16 %v2524
      %v2727 = vpack.c.b16 %v2726, %v2726
      %2728 = vrot.lane.b32.xlu0 %v2727, 96
      %v2729 = vpop.permute.xlu0 %2728
      %v2731 = vsel %vm1108, %v2652, 0
      %v2734 = vsel %vm1257, %v2729, 0
      %2736 = vmatpush.bf16.msra.mxu0 0
      %2737 = vmatpush.bf16.msra.mxu0 0
      %2738 = vmatpush.bf16.msra.mxu0 0
      %2739 = vmatpush.bf16.msra.mxu0 0
      %2740 = vmatpush.bf16.msra.mxu0 0
      %2741 = vmatpush.bf16.msra.mxu0 0
      %2742 = vmatpush.bf16.msra.mxu0 0
      %2743 = vmatpush.bf16.msra.mxu0 %v2734
      %2744 = vmatmul.bf16.gmra.mxu0 %v2731
      %v2745 = vpop.f32.mrf.mxu0
      %v2746 = vadd.f32 0.0, %v2745
      %v2747 = vpop.f32.mrf.mxu0
      %2748 = vdwg.mxu0
      %2750 = vrot.lane.b32.xlu0 %v2698, 8
      %v2751 = vpop.permute.xlu0 %2750
      %2754 = vrot.lane.b32.xlu0 %v2722, 16
      %v2755 = vpop.permute.xlu0 %2754
      %2758 = vrot.lane.b32.xlu0 %v2746, 24
      %v2759 = vpop.permute.xlu0 %2758
      %v2761 = vsel %vm1108, %v2674, %v2751
      %v2762 = vsel %vm1350, %v2761, %v2755
      %v2763 = vsel %vm1352, %v2762, %v2759
      %v2764 = vpack.c.bf16 %v2763, %v2763
      %v2766 = vperm.slane %v2432, 0
      %v2772 = vunpack.c.l.b16 %v2428
      %v2773 = vunpack.c.l.b16 %v2429
      %v2774 = vunpack.c.l.b16 %v2430
      %v2775 = vunpack.c.l.b16 %v2431
      %v2776 = vpack.c.b16 %v2773, %v2772
      %v2777 = vpack.c.b16 %v2775, %v2774
      %v2781 = vsel %vm1072, %v2764, 0
      %2783 = vmatpush.bf16.msra.mxu0 0
      %2784 = vmatpush.bf16.msra.mxu0 0
      %2785 = vmatpush.bf16.msra.mxu0 0
      %2786 = vmatpush.bf16.msra.mxu0 0
      %2787 = vmatpush.bf16.msra.mxu0 0
      %2788 = vmatpush.bf16.msra.mxu0 0
      %2789 = vmatpush.bf16.msra.mxu0 %v2777
      %2790 = vmatpush.bf16.msra.mxu0 %v2776
      %2791 = vmatmul.bf16.gmra.mxu0 %v2781
      %v2792 = vpop.f32.mrf.mxu0
      %v2793 = vadd.f32 %v2766, %v2792
      %v2794 = vpop.f32.mrf.mxu0
      %2795 = vdwg.mxu0
      %v2796 = vadd.f32 %v2417, %v2793
      %v2797 = vsel %vm1072, %v2796, 0.0
      %2798 = vadd.xlane.f32.xlu0 %v2797
      %v2799 = vpop.xlane.xlu0 %2798
      %v2800 = vmul.f32 %v2799, %v1396
      %v2801 = vsub.f32 %v2796, %v2800
      %v2802 = vmul.f32 %v2801, %v2801
      %v2803 = vsel %vm1072, %v2802, 0.0
      %2804 = vadd.xlane.f32.xlu0 %v2803
      %v2805 = vpop.xlane.xlu0 %2804
      %v2806 = vmul.f32 %v2805, %v1396
      %v2807 = vadd.f32 %v2806, 1e-05
      %v2808 = vrsqrt.pop %v2807
      %v2809 = vmul.f32 %v2808, %v2807
      %v2810 = vmul.f32 %v2809, %v2808
      %v2811 = vmul.f32 0.5, %v2810
      %v2812 = vsub.f32 1.5, %v2811
      %v2813 = vmul.f32 %v2808, %v2812
      %vm2814 = vweird.f32 %v2807
      %vm2815 = vweird.f32 %v2808
      %vm2816 = vmor %vm2814, %vm2815
      %v2817 = vsel %vm2816, %v2808, %v2813
      %v2818 = vmul.f32 %v2801, %v2817
      %v2819 = vperm.slane %v2055, 2
      %v2820 = vmul.f32 %v2818, %v2819
      %v2821 = vperm.slane %v2055, 3
      %v2822 = vadd.f32 %v2820, %v2821
      %v2823 = vld [vmem:[%s21] sm:$0xf]
      %v2824 = vld [vmem:[%s21 + $0x4] sm:$0xf]
      %v2825 = vld [vmem:[%s21 + $0x8] sm:$0xf]
      %v2826 = vld [vmem:[%s21 + $0xc] sm:$0xf]
      %v2827 = vld [vmem:[%s5] sm:$0x1]
      %v2828 = vld [vmem:[%s23] sm:$0xf]
      %v2829 = vld [vmem:[%s23 + $0x4] sm:$0xf]
      %v2830 = vld [vmem:[%s23 + $0x8] sm:$0xf]
      %v2831 = vld [vmem:[%s23 + $0xc] sm:$0xf]
      %v2832 = vld [vmem:[%s23 + $0x10] sm:$0xf]
      %v2833 = vld [vmem:[%s23 + $0x14] sm:$0xf]
      %v2834 = vld [vmem:[%s23 + $0x18] sm:$0xf]
      %v2835 = vld [vmem:[%s23 + $0x1c] sm:$0xf]
      %v2836 = vld [vmem:[%s7] sm:$0x1]
      %v2837 = vpack.c.bf16 %v2822, %v2822
      %v2839 = vperm.slane %v2827, 0
      %v2845 = vunpack.c.l.b16 %v2823
      %v2846 = vunpack.c.l.b16 %v2824
      %v2847 = vunpack.c.l.b16 %v2825
      %v2848 = vunpack.c.l.b16 %v2826
      %v2849 = vpack.c.b16 %v2846, %v2845
      %v2850 = vpack.c.b16 %v2848, %v2847
      %v2854 = vsel %vm1072, %v2837, 0
      %2856 = vmatpush.bf16.msra.mxu0 0
      %2857 = vmatpush.bf16.msra.mxu0 0
      %2858 = vmatpush.bf16.msra.mxu0 0
      %2859 = vmatpush.bf16.msra.mxu0 0
      %2860 = vmatpush.bf16.msra.mxu0 0
      %2861 = vmatpush.bf16.msra.mxu0 0
      %2862 = vmatpush.bf16.msra.mxu0 %v2850
      %2863 = vmatpush.bf16.msra.mxu0 %v2849
      %2864 = vmatmul.bf16.gmra.mxu0 %v2854
      %v2865 = vpop.f32.mrf.mxu0
      %v2866 = vadd.f32 %v2839, %v2865
      %v2867 = vpop.f32.mrf.mxu0
      %2868 = vdwg.mxu0
      %v2869 = vmax.f32 %v2866, 0.0
      %v2870 = vpack.c.bf16 %v2869, %v2869
      %v2872 = vperm.slane %v2836, 0
      %v2882 = vunpack.c.l.b16 %v2828
      %v2883 = vunpack.c.l.b16 %v2829
      %v2884 = vunpack.c.l.b16 %v2830
      %v2885 = vunpack.c.l.b16 %v2831
      %v2886 = vunpack.c.l.b16 %v2832
      %v2887 = vunpack.c.l.b16 %v2833
      %v2888 = vunpack.c.l.b16 %v2834
      %v2889 = vunpack.c.l.b16 %v2835
      %v2890 = vpack.c.b16 %v2883, %v2882
      %v2891 = vpack.c.b16 %v2885, %v2884
      %v2892 = vpack.c.b16 %v2887, %v2886
      %v2893 = vpack.c.b16 %v2889, %v2888
      %v2899 = vsel %vm1011, %v2870, 0
      %2901 = vmatpush.bf16.msra.mxu0 0
      %2902 = vmatpush.bf16.msra.mxu0 0
      %2903 = vmatpush.bf16.msra.mxu0 0
      %2904 = vmatpush.bf16.msra.mxu0 0
      %2905 = vmatpush.bf16.msra.mxu0 %v2893
      %2906 = vmatpush.bf16.msra.mxu0 %v2892
      %2907 = vmatpush.bf16.msra.mxu0 %v2891
      %2908 = vmatpush.bf16.msra.mxu0 %v2890
      %2909 = vmatmul.bf16.gmra.mxu0 %v2899
      %v2910 = vpop.f32.mrf.mxu0
      %v2911 = vadd.f32 %v2872, %v2910
      %v2912 = vpop.f32.mrf.mxu0
      %2913 = vdwg.mxu0
      %v2914 = vadd.f32 %v2822, %v2911
      %v2915 = vsel %vm1072, %v2914, 0.0
      %2916 = vadd.xlane.f32.xlu0 %v2915
      %v2917 = vpop.xlane.xlu0 %2916
      %v2918 = vmul.f32 %v2917, %v1396
      %v2919 = vsub.f32 %v2914, %v2918
      %v2920 = vmul.f32 %v2919, %v2919
      %v2921 = vsel %vm1072, %v2920, 0.0
      %2922 = vadd.xlane.f32.xlu0 %v2921
      %v2923 = vpop.xlane.xlu0 %2922
      %v2924 = vmul.f32 %v2923, %v1396
      %v2925 = vadd.f32 %v2924, 1e-05
      %v2926 = vrsqrt.pop %v2925
      %v2927 = vmul.f32 %v2926, %v2925
      %v2928 = vmul.f32 %v2927, %v2926
      %v2929 = vmul.f32 0.5, %v2928
      %v2930 = vsub.f32 1.5, %v2929
      %v2931 = vmul.f32 %v2926, %v2930
      %vm2932 = vweird.f32 %v2925
      %vm2933 = vweird.f32 %v2926
      %vm2934 = vmor %vm2932, %vm2933
      %v2935 = vsel %vm2934, %v2926, %v2931
      %v2936 = vmul.f32 %v2919, %v2935
      %v2937 = vperm.slane %v2055, 4
      %v2938 = vmul.f32 %v2936, %v2937
      %v2939 = vperm.slane %v2055, 5
      %v2940 = vadd.f32 %v2938, %v2939
      %s2941 = scalar_lea.vmem %s19, 8
      %v2942 = vld [vmem:[%s2941] sm:$0x3f]
      %s2943 = scalar_lea.vmem %s33, 16
      %v2944 = vld [vmem:[%s2943] sm:$0xf]
      %v2945 = vld [vmem:[%s2943 + $0x4] sm:$0xf]
      %v2946 = vld [vmem:[%s2943 + $0x8] sm:$0xf]
      %v2947 = vld [vmem:[%s2943 + $0xc] sm:$0xf]
      %s2948 = scalar_lea.vmem %s17, 1
      %v2949 = vld [vmem:[%s2948] sm:$0x1]
      %s2950 = scalar_lea.vmem %s29, 16
      %v2951 = vld [vmem:[%s2950] sm:$0xf]
      %v2952 = vld [vmem:[%s2950 + $0x4] sm:$0xf]
      %v2953 = vld [vmem:[%s2950 + $0x8] sm:$0xf]
      %v2954 = vld [vmem:[%s2950 + $0xc] sm:$0xf]
      %s2955 = scalar_lea.vmem %s13, 1
      %v2956 = vld [vmem:[%s2955] sm:$0x1]
      %v2957 = vpack.c.bf16 %v2940, %v2940
      %v2959 = vperm.slane %v2949, 0
      %v2965 = vunpack.c.l.b16 %v2944
      %v2966 = vunpack.c.l.b16 %v2945
      %v2967 = vunpack.c.l.b16 %v2946
      %v2968 = vunpack.c.l.b16 %v2947
      %v2969 = vpack.c.b16 %v2966, %v2965
      %v2970 = vpack.c.b16 %v2968, %v2967
      %v2974 = vsel %vm1072, %v2957, 0
      %2976 = vmatpush.bf16.msra.mxu0 0
      %2977 = vmatpush.bf16.msra.mxu0 0
      %2978 = vmatpush.bf16.msra.mxu0 0
      %2979 = vmatpush.bf16.msra.mxu0 0
      %2980 = vmatpush.bf16.msra.mxu0 0
      %2981 = vmatpush.bf16.msra.mxu0 0
      %2982 = vmatpush.bf16.msra.mxu0 %v2970
      %2983 = vmatpush.bf16.msra.mxu0 %v2969
      %2984 = vmatmul.bf16.gmra.mxu0 %v2974
      %v2985 = vpop.f32.mrf.mxu0
      %v2986 = vadd.f32 %v2959, %v2985
      %v2987 = vpop.f32.mrf.mxu0
      %2988 = vdwg.mxu0
      %2990 = vrot.lane.b32.xlu0 %v2986, 120
      %v2991 = vpop.permute.xlu0 %2990
      %2993 = vrot.lane.b32.xlu0 %v2986, 112
      %v2994 = vpop.permute.xlu0 %2993
      %2996 = vrot.lane.b32.xlu0 %v2986, 104
      %v2997 = vpop.permute.xlu0 %2996
      %v2999 = vpack.c.bf16 %v2986, %v2986
      %v3000 = vpack.c.bf16 %v2991, %v2991
      %v3001 = vpack.c.bf16 %v2994, %v2994
      %v3002 = vpack.c.bf16 %v2997, %v2997
      %v3004 = vunpack.c.l.b16 %v2999
      %v3005 = vpack.c.b16 %v3004, %v3004
      %3006 = vrot.lane.b32.xlu0 %v3005, 96
      %v3007 = vpop.permute.xlu0 %3006
      %v3009 = vsel %vm1108, %v2999, 0
      %v3012 = vsel %vm1108, %v3007, 0
      %3014 = vmatpush.bf16.xpose.msra.mxu0 0
      %3015 = vmatpush.bf16.xpose.msra.mxu0 0
      %3016 = vmatpush.bf16.xpose.msra.mxu0 0
      %3017 = vmatpush.bf16.xpose.msra.mxu0 0
      %3018 = vmatpush.bf16.xpose.msra.mxu0 0
      %3019 = vmatpush.bf16.xpose.msra.mxu0 0
      %3020 = vmatpush.bf16.xpose.msra.mxu0 0
      %3021 = vmatpush.bf16.xpose.msra.mxu0 %v3012
      %3022 = vmatmul.bf16.gmra.mxu0 %v3009
      %v3023 = vpop.f32.mrf.mxu0
      %v3024 = vadd.f32 0.0, %v3023
      %v3025 = vpop.f32.mrf.mxu0
      %3026 = vdwg.mxu0
      %v3028 = vunpack.c.l.b16 %v3000
      %v3029 = vpack.c.b16 %v3028, %v3028
      %3030 = vrot.lane.b32.xlu0 %v3029, 96
      %v3031 = vpop.permute.xlu0 %3030
      %v3033 = vsel %vm1108, %v3000, 0
      %v3036 = vsel %vm1108, %v3031, 0
      %3038 = vmatpush.bf16.xpose.msra.mxu0 0
      %3039 = vmatpush.bf16.xpose.msra.mxu0 0
      %3040 = vmatpush.bf16.xpose.msra.mxu0 0
      %3041 = vmatpush.bf16.xpose.msra.mxu0 0
      %3042 = vmatpush.bf16.xpose.msra.mxu0 0
      %3043 = vmatpush.bf16.xpose.msra.mxu0 0
      %3044 = vmatpush.bf16.xpose.msra.mxu0 0
      %3045 = vmatpush.bf16.xpose.msra.mxu0 %v3036
      %3046 = vmatmul.bf16.gmra.mxu0 %v3033
      %v3047 = vpop.f32.mrf.mxu0
      %v3048 = vadd.f32 0.0, %v3047
      %v3049 = vpop.f32.mrf.mxu0
      %3050 = vdwg.mxu0
      %v3052 = vunpack.c.l.b16 %v3001
      %v3053 = vpack.c.b16 %v3052, %v3052
      %3054 = vrot.lane.b32.xlu0 %v3053, 96
      %v3055 = vpop.permute.xlu0 %3054
      %v3057 = vsel %vm1108, %v3001, 0
      %v3060 = vsel %vm1108, %v3055, 0
      %3062 = vmatpush.bf16.xpose.msra.mxu0 0
      %3063 = vmatpush.bf16.xpose.msra.mxu0 0
      %3064 = vmatpush.bf16.xpose.msra.mxu0 0
      %3065 = vmatpush.bf16.xpose.msra.mxu0 0
      %3066 = vmatpush.bf16.xpose.msra.mxu0 0
      %3067 = vmatpush.bf16.xpose.msra.mxu0 0
      %3068 = vmatpush.bf16.xpose.msra.mxu0 0
      %3069 = vmatpush.bf16.xpose.msra.mxu0 %v3060
      %3070 = vmatmul.bf16.gmra.mxu0 %v3057
      %v3071 = vpop.f32.mrf.mxu0
      %v3072 = vadd.f32 0.0, %v3071
      %v3073 = vpop.f32.mrf.mxu0
      %3074 = vdwg.mxu0
      %v3076 = vunpack.c.l.b16 %v3002
      %v3077 = vpack.c.b16 %v3076, %v3076
      %3078 = vrot.lane.b32.xlu0 %v3077, 96
      %v3079 = vpop.permute.xlu0 %3078
      %v3081 = vsel %vm1108, %v3002, 0
      %v3084 = vsel %vm1108, %v3079, 0
      %3086 = vmatpush.bf16.xpose.msra.mxu0 0
      %3087 = vmatpush.bf16.xpose.msra.mxu0 0
      %3088 = vmatpush.bf16.xpose.msra.mxu0 0
      %3089 = vmatpush.bf16.xpose.msra.mxu0 0
      %3090 = vmatpush.bf16.xpose.msra.mxu0 0
      %3091 = vmatpush.bf16.xpose.msra.mxu0 0
      %3092 = vmatpush.bf16.xpose.msra.mxu0 0
      %3093 = vmatpush.bf16.xpose.msra.mxu0 %v3084
      %3094 = vmatmul.bf16.gmra.mxu0 %v3081
      %v3095 = vpop.f32.mrf.mxu0
      %v3096 = vadd.f32 0.0, %v3095
      %v3097 = vpop.f32.mrf.mxu0
      %3098 = vdwg.mxu0
      %v3099 = vmul.f32 %v3024, 0.35355338
      %v3100 = vmul.f32 %v3048, 0.35355338
      %v3101 = vmul.f32 %v3072, 0.35355338
      %v3102 = vmul.f32 %v3096, 0.35355338
      %v3103 = vsel %vm1108, %v3099, -inf
      %3104 = vmax.xlane.f32.xlu0 %v3103
      %v3105 = vpop.xlane.xlu0 %3104
      %v3106 = vsel %vm1108, %v3100, -inf
      %3107 = vmax.xlane.f32.xlu0 %v3106
      %v3108 = vpop.xlane.xlu0 %3107
      %v3109 = vsel %vm1108, %v3101, -inf
      %3110 = vmax.xlane.f32.xlu0 %v3109
      %v3111 = vpop.xlane.xlu0 %3110
      %v3112 = vsel %vm1108, %v3102, -inf
      %3113 = vmax.xlane.f32.xlu0 %v3112
      %v3114 = vpop.xlane.xlu0 %3113
      %v3115 = vsub.f32 %v3099, %v3105
      %v3116 = vsub.f32 %v3100, %v3108
      %v3117 = vsub.f32 %v3101, %v3111
      %v3118 = vsub.f32 %v3102, %v3114
      %v3119 = vmul.f32 %v3115, 1.442695
      %v3120 = vpow.pop %v3119
      %v3121 = vmul.f32 %v3116, 1.442695
      %v3122 = vpow.pop %v3121
      %v3123 = vmul.f32 %v3117, 1.442695
      %v3124 = vpow.pop %v3123
      %v3125 = vmul.f32 %v3118, 1.442695
      %v3126 = vpow.pop %v3125
      %v3127 = vsel %vm1108, %v3120, 0.0
      %3128 = vadd.xlane.f32.xlu0 %v3127
      %v3129 = vpop.xlane.xlu0 %3128
      %v3130 = vsel %vm1108, %v3122, 0.0
      %3131 = vadd.xlane.f32.xlu0 %v3130
      %v3132 = vpop.xlane.xlu0 %3131
      %v3133 = vsel %vm1108, %v3124, 0.0
      %3134 = vadd.xlane.f32.xlu0 %v3133
      %v3135 = vpop.xlane.xlu0 %3134
      %v3136 = vsel %vm1108, %v3126, 0.0
      %3137 = vadd.xlane.f32.xlu0 %v3136
      %v3138 = vpop.xlane.xlu0 %3137
      %v3139 = vrcp.pop %v3129
      %v3140 = vrcp.pop %v3132
      %v3141 = vrcp.pop %v3135
      %v3142 = vrcp.pop %v3138
      %v3143 = vmul.f32 %v3120, %v3139
      %v3144 = vmul.f32 %v3122, %v3140
      %v3145 = vmul.f32 %v3124, %v3141
      %v3146 = vmul.f32 %v3126, %v3142
      %v3147 = vpack.c.bf16 %v3143, %v3143
      %v3148 = vpack.c.bf16 %v3144, %v3144
      %v3149 = vpack.c.bf16 %v3145, %v3145
      %v3150 = vpack.c.bf16 %v3146, %v3146
      %3151 = vrot.lane.b32.xlu0 %v3005, 64
      %v3152 = vpop.permute.xlu0 %3151
      %v3154 = vsel %vm1108, %v3147, 0
      %v3157 = vsel %vm1257, %v3152, 0
      %3159 = vmatpush.bf16.msra.mxu0 0
      %3160 = vmatpush.bf16.msra.mxu0 0
      %3161 = vmatpush.bf16.msra.mxu0 0
      %3162 = vmatpush.bf16.msra.mxu0 0
      %3163 = vmatpush.bf16.msra.mxu0 0
      %3164 = vmatpush.bf16.msra.mxu0 0
      %3165 = vmatpush.bf16.msra.mxu0 0
      %3166 = vmatpush.bf16.msra.mxu0 %v3157
      %3167 = vmatmul.bf16.gmra.mxu0 %v3154
      %v3168 = vpop.f32.mrf.mxu0
      %v3169 = vadd.f32 0.0, %v3168
      %v3170 = vpop.f32.mrf.mxu0
      %3171 = vdwg.mxu0
      %3172 = vrot.lane.b32.xlu0 %v3029, 64
      %v3173 = vpop.permute.xlu0 %3172
      %v3175 = vsel %vm1108, %v3148, 0
      %v3178 = vsel %vm1257, %v3173, 0
      %3180 = vmatpush.bf16.msra.mxu0 0
      %3181 = vmatpush.bf16.msra.mxu0 0
      %3182 = vmatpush.bf16.msra.mxu0 0
      %3183 = vmatpush.bf16.msra.mxu0 0
      %3184 = vmatpush.bf16.msra.mxu0 0
      %3185 = vmatpush.bf16.msra.mxu0 0
      %3186 = vmatpush.bf16.msra.mxu0 0
      %3187 = vmatpush.bf16.msra.mxu0 %v3178
      %3188 = vmatmul.bf16.gmra.mxu0 %v3175
      %v3189 = vpop.f32.mrf.mxu0
      %v3190 = vadd.f32 0.0, %v3189
      %v3191 = vpop.f32.mrf.mxu0
      %3192 = vdwg.mxu0
      %3193 = vrot.lane.b32.xlu0 %v3053, 64
      %v3194 = vpop.permute.xlu0 %3193
      %v3196 = vsel %vm1108, %v3149, 0
      %v3199 = vsel %vm1257, %v3194, 0
      %3201 = vmatpush.bf16.msra.mxu0 0
      %3202 = vmatpush.bf16.msra.mxu0 0
      %3203 = vmatpush.bf16.msra.mxu0 0
      %3204 = vmatpush.bf16.msra.mxu0 0
      %3205 = vmatpush.bf16.msra.mxu0 0
      %3206 = vmatpush.bf16.msra.mxu0 0
      %3207 = vmatpush.bf16.msra.mxu0 0
      %3208 = vmatpush.bf16.msra.mxu0 %v3199
      %3209 = vmatmul.bf16.gmra.mxu0 %v3196
      %v3210 = vpop.f32.mrf.mxu0
      %v3211 = vadd.f32 0.0, %v3210
      %v3212 = vpop.f32.mrf.mxu0
      %3213 = vdwg.mxu0
      %3214 = vrot.lane.b32.xlu0 %v3077, 64
      %v3215 = vpop.permute.xlu0 %3214
      %v3217 = vsel %vm1108, %v3150, 0
      %v3220 = vsel %vm1257, %v3215, 0
      %3222 = vmatpush.bf16.msra.mxu0 0
      %3223 = vmatpush.bf16.msra.mxu0 0
      %3224 = vmatpush.bf16.msra.mxu0 0
      %3225 = vmatpush.bf16.msra.mxu0 0
      %3226 = vmatpush.bf16.msra.mxu0 0
      %3227 = vmatpush.bf16.msra.mxu0 0
      %3228 = vmatpush.bf16.msra.mxu0 0
      %3229 = vmatpush.bf16.msra.mxu0 %v3220
      %3230 = vmatmul.bf16.gmra.mxu0 %v3217
      %v3231 = vpop.f32.mrf.mxu0
      %v3232 = vadd.f32 0.0, %v3231
      %v3233 = vpop.f32.mrf.mxu0
      %3234 = vdwg.mxu0
      %3236 = vrot.lane.b32.xlu0 %v3190, 8
      %v3237 = vpop.permute.xlu0 %3236
      %3240 = vrot.lane.b32.xlu0 %v3211, 16
      %v3241 = vpop.permute.xlu0 %3240
      %3244 = vrot.lane.b32.xlu0 %v3232, 24
      %v3245 = vpop.permute.xlu0 %3244
      %v3247 = vsel %vm1108, %v3169, %v3237
      %v3248 = vsel %vm1350, %v3247, %v3241
      %v3249 = vsel %vm1352, %v3248, %v3245
      %v3250 = vpack.c.bf16 %v3249, %v3249
      %v3252 = vperm.slane %v2956, 0
      %v3258 = vunpack.c.l.b16 %v2951
      %v3259 = vunpack.c.l.b16 %v2952
      %v3260 = vunpack.c.l.b16 %v2953
      %v3261 = vunpack.c.l.b16 %v2954
      %v3262 = vpack.c.b16 %v3259, %v3258
      %v3263 = vpack.c.b16 %v3261, %v3260
      %v3267 = vsel %vm1072, %v3250, 0
      %3269 = vmatpush.bf16.msra.mxu0 0
      %3270 = vmatpush.bf16.msra.mxu0 0
      %3271 = vmatpush.bf16.msra.mxu0 0
      %3272 = vmatpush.bf16.msra.mxu0 0
      %3273 = vmatpush.bf16.msra.mxu0 0
      %3274 = vmatpush.bf16.msra.mxu0 0
      %3275 = vmatpush.bf16.msra.mxu0 %v3263
      %3276 = vmatpush.bf16.msra.mxu0 %v3262
      %3277 = vmatmul.bf16.gmra.mxu0 %v3267
      %v3278 = vpop.f32.mrf.mxu0
      %v3279 = vadd.f32 %v3252, %v3278
      %v3280 = vpop.f32.mrf.mxu0
      %3281 = vdwg.mxu0
      %v3282 = vadd.f32 %v2940, %v3279
      %v3283 = vsel %vm1072, %v3282, 0.0
      %3284 = vadd.xlane.f32.xlu0 %v3283
      %v3285 = vpop.xlane.xlu0 %3284
      %v3286 = vmul.f32 %v3285, %v1396
      %v3287 = vsub.f32 %v3282, %v3286
      %v3288 = vmul.f32 %v3287, %v3287
      %v3289 = vsel %vm1072, %v3288, 0.0
      %3290 = vadd.xlane.f32.xlu0 %v3289
      %v3291 = vpop.xlane.xlu0 %3290
      %v3292 = vmul.f32 %v3291, %v1396
      %v3293 = vadd.f32 %v3292, 1e-05
      %v3294 = vrsqrt.pop %v3293
      %v3295 = vmul.f32 %v3294, %v3293
      %v3296 = vmul.f32 %v3295, %v3294
      %v3297 = vmul.f32 0.5, %v3296
      %v3298 = vsub.f32 1.5, %v3297
      %v3299 = vmul.f32 %v3294, %v3298
      %vm3300 = vweird.f32 %v3293
      %vm3301 = vweird.f32 %v3294
      %vm3302 = vmor %vm3300, %vm3301
      %v3303 = vsel %vm3302, %v3294, %v3299
      %v3304 = vmul.f32 %v3287, %v3303
      %v3305 = vperm.slane %v2942, 0
      %v3306 = vmul.f32 %v3304, %v3305
      %v3307 = vperm.slane %v2942, 1
      %v3308 = vadd.f32 %v3306, %v3307
      %s3309 = scalar_lea.vmem %s31, 16
      %v3310 = vld [vmem:[%s3309] sm:$0xf]
      %v3311 = vld [vmem:[%s3309 + $0x4] sm:$0xf]
      %v3312 = vld [vmem:[%s3309 + $0x8] sm:$0xf]
      %v3313 = vld [vmem:[%s3309 + $0xc] sm:$0xf]
      %s3314 = scalar_lea.vmem %s15, 1
      %v3315 = vld [vmem:[%s3314] sm:$0x1]
      %s3316 = scalar_lea.vmem %s25, 16
      %v3317 = vld [vmem:[%s3316] sm:$0xf]
      %v3318 = vld [vmem:[%s3316 + $0x4] sm:$0xf]
      %v3319 = vld [vmem:[%s3316 + $0x8] sm:$0xf]
      %v3320 = vld [vmem:[%s3316 + $0xc] sm:$0xf]
      %s3321 = scalar_lea.vmem %s9, 1
      %v3322 = vld [vmem:[%s3321] sm:$0x1]
      %s3323 = scalar_lea.vmem %s27, 16
      %v3324 = vld [vmem:[%s3323] sm:$0xf]
      %v3325 = vld [vmem:[%s3323 + $0x4] sm:$0xf]
      %v3326 = vld [vmem:[%s3323 + $0x8] sm:$0xf]
      %v3327 = vld [vmem:[%s3323 + $0xc] sm:$0xf]
      %s3328 = scalar_lea.vmem %s11, 1
      %v3329 = vld [vmem:[%s3328] sm:$0x1]
      %v3330 = vpack.c.bf16 %v3308, %v3308
      %v3332 = vperm.slane %v3315, 0
      %v3338 = vunpack.c.l.b16 %v3310
      %v3339 = vunpack.c.l.b16 %v3311
      %v3340 = vunpack.c.l.b16 %v3312
      %v3341 = vunpack.c.l.b16 %v3313
      %v3342 = vpack.c.b16 %v3339, %v3338
      %v3343 = vpack.c.b16 %v3341, %v3340
      %v3347 = vsel %vm1072, %v3330, 0
      %3349 = vmatpush.bf16.msra.mxu0 0
      %3350 = vmatpush.bf16.msra.mxu0 0
      %3351 = vmatpush.bf16.msra.mxu0 0
      %3352 = vmatpush.bf16.msra.mxu0 0
      %3353 = vmatpush.bf16.msra.mxu0 0
      %3354 = vmatpush.bf16.msra.mxu0 0
      %3355 = vmatpush.bf16.msra.mxu0 %v3343
      %3356 = vmatpush.bf16.msra.mxu0 %v3342
      %3357 = vmatmul.bf16.gmra.mxu0 %v3347
      %v3358 = vpop.f32.mrf.mxu0
      %v3359 = vadd.f32 %v3332, %v3358
      %v3360 = vpop.f32.mrf.mxu0
      %3361 = vdwg.mxu0
      %v3363 = vperm.slane %v3322, 0
      %v3369 = vunpack.c.l.b16 %v3317
      %v3370 = vunpack.c.l.b16 %v3318
      %v3371 = vunpack.c.l.b16 %v3319
      %v3372 = vunpack.c.l.b16 %v3320
      %v3373 = vpack.c.b16 %v3370, %v3369
      %v3374 = vpack.c.b16 %v3372, %v3371
      %3377 = vmatpush.bf16.msra.mxu0 0
      %3378 = vmatpush.bf16.msra.mxu0 0
      %3379 = vmatpush.bf16.msra.mxu0 0
      %3380 = vmatpush.bf16.msra.mxu0 0
      %3381 = vmatpush.bf16.msra.mxu0 0
      %3382 = vmatpush.bf16.msra.mxu0 0
      %3383 = vmatpush.bf16.msra.mxu0 %v3374
      %3384 = vmatpush.bf16.msra.mxu0 %v3373
      %3385 = vmatmul.bf16.gmra.mxu0 %v2482
      %v3386 = vpop.f32.mrf.mxu0
      %v3387 = vadd.f32 %v3363, %v3386
      %v3388 = vpop.f32.mrf.mxu0
      %3389 = vdwg.mxu0
      %3391 = vrot.lane.b32.xlu0 %v3359, 120
      %v3392 = vpop.permute.xlu0 %3391
      %3394 = vrot.lane.b32.xlu0 %v3359, 112
      %v3395 = vpop.permute.xlu0 %3394
      %3397 = vrot.lane.b32.xlu0 %v3359, 104
      %v3398 = vpop.permute.xlu0 %3397
      %3401 = vrot.lane.b32.xlu0 %v3387, 120
      %v3402 = vpop.permute.xlu0 %3401
      %3404 = vrot.lane.b32.xlu0 %v3387, 112
      %v3405 = vpop.permute.xlu0 %3404
      %3407 = vrot.lane.b32.xlu0 %v3387, 104
      %v3408 = vpop.permute.xlu0 %3407
      %v3410 = vpack.c.bf16 %v3359, %v3359
      %v3411 = vpack.c.bf16 %v3392, %v3392
      %v3412 = vpack.c.bf16 %v3395, %v3395
      %v3413 = vpack.c.bf16 %v3398, %v3398
      %v3414 = vpack.c.bf16 %v3387, %v3387
      %v3415 = vpack.c.bf16 %v3402, %v3402
      %v3416 = vpack.c.bf16 %v3405, %v3405
      %v3417 = vpack.c.bf16 %v3408, %v3408
      %v3419 = vsel %vm1108, %v3410, 0
      %v3422 = vsel %vm1108, %v3414, 0
      %3424 = vmatpush.bf16.xpose.msra.mxu0 0
      %3425 = vmatpush.bf16.xpose.msra.mxu0 0
      %3426 = vmatpush.bf16.xpose.msra.mxu0 0
      %3427 = vmatpush.bf16.xpose.msra.mxu0 0
      %3428 = vmatpush.bf16.xpose.msra.mxu0 0
      %3429 = vmatpush.bf16.xpose.msra.mxu0 0
      %3430 = vmatpush.bf16.xpose.msra.mxu0 0
      %3431 = vmatpush.bf16.xpose.msra.mxu0 %v3422
      %3432 = vmatmul.bf16.gmra.mxu0 %v3419
      %v3433 = vpop.f32.mrf.mxu0
      %v3434 = vadd.f32 0.0, %v3433
      %v3435 = vpop.f32.mrf.mxu0
      %3436 = vdwg.mxu0
      %v3438 = vsel %vm1108, %v3411, 0
      %v3441 = vsel %vm1108, %v3415, 0
      %3443 = vmatpush.bf16.xpose.msra.mxu0 0
      %3444 = vmatpush.bf16.xpose.msra.mxu0 0
      %3445 = vmatpush.bf16.xpose.msra.mxu0 0
      %3446 = vmatpush.bf16.xpose.msra.mxu0 0
      %3447 = vmatpush.bf16.xpose.msra.mxu0 0
      %3448 = vmatpush.bf16.xpose.msra.mxu0 0
      %3449 = vmatpush.bf16.xpose.msra.mxu0 0
      %3450 = vmatpush.bf16.xpose.msra.mxu0 %v3441
      %3451 = vmatmul.bf16.gmra.mxu0 %v3438
      %v3452 = vpop.f32.mrf.mxu0
      %v3453 = vadd.f32 0.0, %v3452
      %v3454 = vpop.f32.mrf.mxu0
      %3455 = vdwg.mxu0
      %v3457 = vsel %vm1108, %v3412, 0
      %v3460 = vsel %vm1108, %v3416, 0
      %3462 = vmatpush.bf16.xpose.msra.mxu0 0
      %3463 = vmatpush.bf16.xpose.msra.mxu0 0
      %3464 = vmatpush.bf16.xpose.msra.mxu0 0
      %3465 = vmatpush.bf16.xpose.msra.mxu0 0
      %3466 = vmatpush.bf16.xpose.msra.mxu0 0
      %3467 = vmatpush.bf16.xpose.msra.mxu0 0
      %3468 = vmatpush.bf16.xpose.msra.mxu0 0
      %3469 = vmatpush.bf16.xpose.msra.mxu0 %v3460
      %3470 = vmatmul.bf16.gmra.mxu0 %v3457
      %v3471 = vpop.f32.mrf.mxu0
      %v3472 = vadd.f32 0.0, %v3471
      %v3473 = vpop.f32.mrf.mxu0
      %3474 = vdwg.mxu0
      %v3476 = vsel %vm1108, %v3413, 0
      %v3479 = vsel %vm1108, %v3417, 0
      %3481 = vmatpush.bf16.xpose.msra.mxu0 0
      %3482 = vmatpush.bf16.xpose.msra.mxu0 0
      %3483 = vmatpush.bf16.xpose.msra.mxu0 0
      %3484 = vmatpush.bf16.xpose.msra.mxu0 0
      %3485 = vmatpush.bf16.xpose.msra.mxu0 0
      %3486 = vmatpush.bf16.xpose.msra.mxu0 0
      %3487 = vmatpush.bf16.xpose.msra.mxu0 0
      %3488 = vmatpush.bf16.xpose.msra.mxu0 %v3479
      %3489 = vmatmul.bf16.gmra.mxu0 %v3476
      %v3490 = vpop.f32.mrf.mxu0
      %v3491 = vadd.f32 0.0, %v3490
      %v3492 = vpop.f32.mrf.mxu0
      %3493 = vdwg.mxu0
      %v3494 = vmul.f32 %v3434, 0.35355338
      %v3495 = vmul.f32 %v3453, 0.35355338
      %v3496 = vmul.f32 %v3472, 0.35355338
      %v3497 = vmul.f32 %v3491, 0.35355338
      %v3498 = vsel %vm1108, %v3494, -inf
      %3499 = vmax.xlane.f32.xlu0 %v3498
      %v3500 = vpop.xlane.xlu0 %3499
      %v3501 = vsel %vm1108, %v3495, -inf
      %3502 = vmax.xlane.f32.xlu0 %v3501
      %v3503 = vpop.xlane.xlu0 %3502
      %v3504 = vsel %vm1108, %v3496, -inf
      %3505 = vmax.xlane.f32.xlu0 %v3504
      %v3506 = vpop.xlane.xlu0 %3505
      %v3507 = vsel %vm1108, %v3497, -inf
      %3508 = vmax.xlane.f32.xlu0 %v3507
      %v3509 = vpop.xlane.xlu0 %3508
      %v3510 = vsub.f32 %v3494, %v3500
      %v3511 = vsub.f32 %v3495, %v3503
      %v3512 = vsub.f32 %v3496, %v3506
      %v3513 = vsub.f32 %v3497, %v3509
      %v3514 = vmul.f32 %v3510, 1.442695
      %v3515 = vpow.pop %v3514
      %v3516 = vmul.f32 %v3511, 1.442695
      %v3517 = vpow.pop %v3516
      %v3518 = vmul.f32 %v3512, 1.442695
      %v3519 = vpow.pop %v3518
      %v3520 = vmul.f32 %v3513, 1.442695
      %v3521 = vpow.pop %v3520
      %v3522 = vsel %vm1108, %v3515, 0.0
      %3523 = vadd.xlane.f32.xlu0 %v3522
      %v3524 = vpop.xlane.xlu0 %3523
      %v3525 = vsel %vm1108, %v3517, 0.0
      %3526 = vadd.xlane.f32.xlu0 %v3525
      %v3527 = vpop.xlane.xlu0 %3526
      %v3528 = vsel %vm1108, %v3519, 0.0
      %3529 = vadd.xlane.f32.xlu0 %v3528
      %v3530 = vpop.xlane.xlu0 %3529
      %v3531 = vsel %vm1108, %v3521, 0.0
      %3532 = vadd.xlane.f32.xlu0 %v3531
      %v3533 = vpop.xlane.xlu0 %3532
      %v3534 = vrcp.pop %v3524
      %v3535 = vrcp.pop %v3527
      %v3536 = vrcp.pop %v3530
      %v3537 = vrcp.pop %v3533
      %v3538 = vmul.f32 %v3515, %v3534
      %v3539 = vmul.f32 %v3517, %v3535
      %v3540 = vmul.f32 %v3519, %v3536
      %v3541 = vmul.f32 %v3521, %v3537
      %v3542 = vpack.c.bf16 %v3538, %v3538
      %v3543 = vpack.c.bf16 %v3539, %v3539
      %v3544 = vpack.c.bf16 %v3540, %v3540
      %v3545 = vpack.c.bf16 %v3541, %v3541
      %v3547 = vunpack.c.l.b16 %v3414
      %v3548 = vpack.c.b16 %v3547, %v3547
      %3549 = vrot.lane.b32.xlu0 %v3548, 96
      %v3550 = vpop.permute.xlu0 %3549
      %v3552 = vsel %vm1108, %v3542, 0
      %v3555 = vsel %vm1257, %v3550, 0
      %3557 = vmatpush.bf16.msra.mxu0 0
      %3558 = vmatpush.bf16.msra.mxu0 0
      %3559 = vmatpush.bf16.msra.mxu0 0
      %3560 = vmatpush.bf16.msra.mxu0 0
      %3561 = vmatpush.bf16.msra.mxu0 0
      %3562 = vmatpush.bf16.msra.mxu0 0
      %3563 = vmatpush.bf16.msra.mxu0 0
      %3564 = vmatpush.bf16.msra.mxu0 %v3555
      %3565 = vmatmul.bf16.gmra.mxu0 %v3552
      %v3566 = vpop.f32.mrf.mxu0
      %v3567 = vadd.f32 0.0, %v3566
      %v3568 = vpop.f32.mrf.mxu0
      %3569 = vdwg.mxu0
      %v3571 = vunpack.c.l.b16 %v3415
      %v3572 = vpack.c.b16 %v3571, %v3571
      %3573 = vrot.lane.b32.xlu0 %v3572, 96
      %v3574 = vpop.permute.xlu0 %3573
      %v3576 = vsel %vm1108, %v3543, 0
      %v3579 = vsel %vm1257, %v3574, 0
      %3581 = vmatpush.bf16.msra.mxu0 0
      %3582 = vmatpush.bf16.msra.mxu0 0
      %3583 = vmatpush.bf16.msra.mxu0 0
      %3584 = vmatpush.bf16.msra.mxu0 0
      %3585 = vmatpush.bf16.msra.mxu0 0
      %3586 = vmatpush.bf16.msra.mxu0 0
      %3587 = vmatpush.bf16.msra.mxu0 0
      %3588 = vmatpush.bf16.msra.mxu0 %v3579
      %3589 = vmatmul.bf16.gmra.mxu0 %v3576
      %v3590 = vpop.f32.mrf.mxu0
      %v3591 = vadd.f32 0.0, %v3590
      %v3592 = vpop.f32.mrf.mxu0
      %3593 = vdwg.mxu0
      %v3595 = vunpack.c.l.b16 %v3416
      %v3596 = vpack.c.b16 %v3595, %v3595
      %3597 = vrot.lane.b32.xlu0 %v3596, 96
      %v3598 = vpop.permute.xlu0 %3597
      %v3600 = vsel %vm1108, %v3544, 0
      %v3603 = vsel %vm1257, %v3598, 0
      %3605 = vmatpush.bf16.msra.mxu0 0
      %3606 = vmatpush.bf16.msra.mxu0 0
      %3607 = vmatpush.bf16.msra.mxu0 0
      %3608 = vmatpush.bf16.msra.mxu0 0
      %3609 = vmatpush.bf16.msra.mxu0 0
      %3610 = vmatpush.bf16.msra.mxu0 0
      %3611 = vmatpush.bf16.msra.mxu0 0
      %3612 = vmatpush.bf16.msra.mxu0 %v3603
      %3613 = vmatmul.bf16.gmra.mxu0 %v3600
      %v3614 = vpop.f32.mrf.mxu0
      %v3615 = vadd.f32 0.0, %v3614
      %v3616 = vpop.f32.mrf.mxu0
      %3617 = vdwg.mxu0
      %v3619 = vunpack.c.l.b16 %v3417
      %v3620 = vpack.c.b16 %v3619, %v3619
      %3621 = vrot.lane.b32.xlu0 %v3620, 96
      %v3622 = vpop.permute.xlu0 %3621
      %v3624 = vsel %vm1108, %v3545, 0
      %v3627 = vsel %vm1257, %v3622, 0
      %3629 = vmatpush.bf16.msra.mxu0 0
      %3630 = vmatpush.bf16.msra.mxu0 0
      %3631 = vmatpush.bf16.msra.mxu0 0
      %3632 = vmatpush.bf16.msra.mxu0 0
      %3633 = vmatpush.bf16.msra.mxu0 0
      %3634 = vmatpush.bf16.msra.mxu0 0
      %3635 = vmatpush.bf16.msra.mxu0 0
      %3636 = vmatpush.bf16.msra.mxu0 %v3627
      %3637 = vmatmul.bf16.gmra.mxu0 %v3624
      %v3638 = vpop.f32.mrf.mxu0
      %v3639 = vadd.f32 0.0, %v3638
      %v3640 = vpop.f32.mrf.mxu0
      %3641 = vdwg.mxu0
      %3643 = vrot.lane.b32.xlu0 %v3591, 8
      %v3644 = vpop.permute.xlu0 %3643
      %3647 = vrot.lane.b32.xlu0 %v3615, 16
      %v3648 = vpop.permute.xlu0 %3647
      %3651 = vrot.lane.b32.xlu0 %v3639, 24
      %v3652 = vpop.permute.xlu0 %3651
      %v3654 = vsel %vm1108, %v3567, %v3644
      %v3655 = vsel %vm1350, %v3654, %v3648
      %v3656 = vsel %vm1352, %v3655, %v3652
      %v3657 = vpack.c.bf16 %v3656, %v3656
      %v3659 = vperm.slane %v3329, 0
      %v3665 = vunpack.c.l.b16 %v3324
      %v3666 = vunpack.c.l.b16 %v3325
      %v3667 = vunpack.c.l.b16 %v3326
      %v3668 = vunpack.c.l.b16 %v3327
      %v3669 = vpack.c.b16 %v3666, %v3665
      %v3670 = vpack.c.b16 %v3668, %v3667
      %v3674 = vsel %vm1072, %v3657, 0
      %3676 = vmatpush.bf16.msra.mxu0 0
      %3677 = vmatpush.bf16.msra.mxu0 0
      %3678 = vmatpush.bf16.msra.mxu0 0
      %3679 = vmatpush.bf16.msra.mxu0 0
      %3680 = vmatpush.bf16.msra.mxu0 0
      %3681 = vmatpush.bf16.msra.mxu0 0
      %3682 = vmatpush.bf16.msra.mxu0 %v3670
      %3683 = vmatpush.bf16.msra.mxu0 %v3669
      %3684 = vmatmul.bf16.gmra.mxu0 %v3674
      %v3685 = vpop.f32.mrf.mxu0
      %v3686 = vadd.f32 %v3659, %v3685
      %v3687 = vpop.f32.mrf.mxu0
      %3688 = vdwg.mxu0
      %v3689 = vadd.f32 %v3308, %v3686
      %v3690 = vsel %vm1072, %v3689, 0.0
      %3691 = vadd.xlane.f32.xlu0 %v3690
      %v3692 = vpop.xlane.xlu0 %3691
      %v3693 = vmul.f32 %v3692, %v1396
      %v3694 = vsub.f32 %v3689, %v3693
      %v3695 = vmul.f32 %v3694, %v3694
      %v3696 = vsel %vm1072, %v3695, 0.0
      %3697 = vadd.xlane.f32.xlu0 %v3696
      %v3698 = vpop.xlane.xlu0 %3697
      %v3699 = vmul.f32 %v3698, %v1396
      %v3700 = vadd.f32 %v3699, 1e-05
      %v3701 = vrsqrt.pop %v3700
      %v3702 = vmul.f32 %v3701, %v3700
      %v3703 = vmul.f32 %v3702, %v3701
      %v3704 = vmul.f32 0.5, %v3703
      %v3705 = vsub.f32 1.5, %v3704
      %v3706 = vmul.f32 %v3701, %v3705
      %vm3707 = vweird.f32 %v3700
      %vm3708 = vweird.f32 %v3701
      %vm3709 = vmor %vm3707, %vm3708
      %v3710 = vsel %vm3709, %v3701, %v3706
      %v3711 = vmul.f32 %v3694, %v3710
      %v3712 = vperm.slane %v2942, 2
      %v3713 = vmul.f32 %v3711, %v3712
      %v3714 = vperm.slane %v2942, 3
      %v3715 = vadd.f32 %v3713, %v3714
      %s3716 = scalar_lea.vmem %s21, 16
      %v3717 = vld [vmem:[%s3716] sm:$0xf]
      %v3718 = vld [vmem:[%s3716 + $0x4] sm:$0xf]
      %v3719 = vld [vmem:[%s3716 + $0x8] sm:$0xf]
      %v3720 = vld [vmem:[%s3716 + $0xc] sm:$0xf]
      %s3721 = scalar_lea.vmem %s5, 1
      %v3722 = vld [vmem:[%s3721] sm:$0x1]
      %s3723 = scalar_lea.vmem %s23, 32
      %v3724 = vld [vmem:[%s3723] sm:$0xf]
      %v3725 = vld [vmem:[%s3723 + $0x4] sm:$0xf]
      %v3726 = vld [vmem:[%s3723 + $0x8] sm:$0xf]
      %v3727 = vld [vmem:[%s3723 + $0xc] sm:$0xf]
      %v3728 = vld [vmem:[%s3723 + $0x10] sm:$0xf]
      %v3729 = vld [vmem:[%s3723 + $0x14] sm:$0xf]
      %v3730 = vld [vmem:[%s3723 + $0x18] sm:$0xf]
      %v3731 = vld [vmem:[%s3723 + $0x1c] sm:$0xf]
      %s3732 = scalar_lea.vmem %s7, 1
      %v3733 = vld [vmem:[%s3732] sm:$0x1]
      %v3734 = vpack.c.bf16 %v3715, %v3715
      %v3736 = vperm.slane %v3722, 0
      %v3742 = vunpack.c.l.b16 %v3717
      %v3743 = vunpack.c.l.b16 %v3718
      %v3744 = vunpack.c.l.b16 %v3719
      %v3745 = vunpack.c.l.b16 %v3720
      %v3746 = vpack.c.b16 %v3743, %v3742
      %v3747 = vpack.c.b16 %v3745, %v3744
      %v3751 = vsel %vm1072, %v3734, 0
      %3753 = vmatpush.bf16.msra.mxu0 0
      %3754 = vmatpush.bf16.msra.mxu0 0
      %3755 = vmatpush.bf16.msra.mxu0 0
      %3756 = vmatpush.bf16.msra.mxu0 0
      %3757 = vmatpush.bf16.msra.mxu0 0
      %3758 = vmatpush.bf16.msra.mxu0 0
      %3759 = vmatpush.bf16.msra.mxu0 %v3747
      %3760 = vmatpush.bf16.msra.mxu0 %v3746
      %3761 = vmatmul.bf16.gmra.mxu0 %v3751
      %v3762 = vpop.f32.mrf.mxu0
      %v3763 = vadd.f32 %v3736, %v3762
      %v3764 = vpop.f32.mrf.mxu0
      %3765 = vdwg.mxu0
      %v3766 = vmax.f32 %v3763, 0.0
      %v3767 = vpack.c.bf16 %v3766, %v3766
      %v3769 = vperm.slane %v3733, 0
      %v3779 = vunpack.c.l.b16 %v3724
      %v3780 = vunpack.c.l.b16 %v3725
      %v3781 = vunpack.c.l.b16 %v3726
      %v3782 = vunpack.c.l.b16 %v3727
      %v3783 = vunpack.c.l.b16 %v3728
      %v3784 = vunpack.c.l.b16 %v3729
      %v3785 = vunpack.c.l.b16 %v3730
      %v3786 = vunpack.c.l.b16 %v3731
      %v3787 = vpack.c.b16 %v3780, %v3779
      %v3788 = vpack.c.b16 %v3782, %v3781
      %v3789 = vpack.c.b16 %v3784, %v3783
      %v3790 = vpack.c.b16 %v3786, %v3785
      %v3796 = vsel %vm1011, %v3767, 0
      %3798 = vmatpush.bf16.msra.mxu0 0
      %3799 = vmatpush.bf16.msra.mxu0 0
      %3800 = vmatpush.bf16.msra.mxu0 0
      %3801 = vmatpush.bf16.msra.mxu0 0
      %3802 = vmatpush.bf16.msra.mxu0 %v3790
      %3803 = vmatpush.bf16.msra.mxu0 %v3789
      %3804 = vmatpush.bf16.msra.mxu0 %v3788
      %3805 = vmatpush.bf16.msra.mxu0 %v3787
      %3806 = vmatmul.bf16.gmra.mxu0 %v3796
      %v3807 = vpop.f32.mrf.mxu0
      %v3808 = vadd.f32 %v3769, %v3807
      %v3809 = vpop.f32.mrf.mxu0
      %3810 = vdwg.mxu0
      %v3811 = vadd.f32 %v3715, %v3808
      %v3812 = vsel %vm1072, %v3811, 0.0
      %3813 = vadd.xlane.f32.xlu0 %v3812
      %v3814 = vpop.xlane.xlu0 %3813
      %v3815 = vmul.f32 %v3814, %v1396
      %v3816 = vsub.f32 %v3811, %v3815
      %v3817 = vmul.f32 %v3816, %v3816
      %v3818 = vsel %vm1072, %v3817, 0.0
      %3819 = vadd.xlane.f32.xlu0 %v3818
      %v3820 = vpop.xlane.xlu0 %3819
      %v3821 = vmul.f32 %v3820, %v1396
      %v3822 = vadd.f32 %v3821, 1e-05
      %v3823 = vrsqrt.pop %v3822
      %v3824 = vmul.f32 %v3823, %v3822
      %v3825 = vmul.f32 %v3824, %v3823
      %v3826 = vmul.f32 0.5, %v3825
      %v3827 = vsub.f32 1.5, %v3826
      %v3828 = vmul.f32 %v3823, %v3827
      %vm3829 = vweird.f32 %v3822
      %vm3830 = vweird.f32 %v3823
      %vm3831 = vmor %vm3829, %vm3830
      %v3832 = vsel %vm3831, %v3823, %v3828
      %v3833 = vmul.f32 %v3816, %v3832
      %v3834 = vperm.slane %v2942, 4
      %v3835 = vmul.f32 %v3833, %v3834
      %v3836 = vperm.slane %v2942, 5
      %v3837 = vadd.f32 %v3835, %v3836
      %v3838 = vsel %vm1072, %v3837, 0.0
      %3839 = vadd.xlane.f32.xlu0 %v3838
      %v3840 = vpop.xlane.xlu0 %3839
      %v3841 = vmul.f32 %v3840, %v1396
      %v3842 = vsub.f32 %v3837, %v3841
      %v3843 = vmul.f32 %v3842, %v3842
      %v3844 = vsel %vm1072, %v3843, 0.0
      %3845 = vadd.xlane.f32.xlu0 %v3844
      %v3846 = vpop.xlane.xlu0 %3845
      %v3847 = vmul.f32 %v3846, %v1396
      %v3848 = vadd.f32 %v3847, 1e-05
      %v3849 = vrsqrt.pop %v3848
      %v3850 = vmul.f32 %v3849, %v3848
      %v3851 = vmul.f32 %v3850, %v3849
      %v3852 = vmul.f32 0.5, %v3851
      %v3853 = vsub.f32 1.5, %v3852
      %v3854 = vmul.f32 %v3849, %v3853
      %vm3855 = vweird.f32 %v3848
      %vm3856 = vweird.f32 %v3849
      %vm3857 = vmor %vm3855, %vm3856
      %v3858 = vsel %vm3857, %v3849, %v3854
      %v3859 = vmul.f32 %v3842, %v3858
      %v3860 = vperm.slane %v2028, 2
      %v3861 = vmul.f32 %v3859, %v3860
      %v3862 = vperm.slane %v2028, 3
      %v3863 = vadd.f32 %v3861, %v3862
      %v3864 = vld [vmem:[%s59] sm:$0xf]
      %v3865 = vld [vmem:[%s59 + $0x4] sm:$0xf]
      %v3866 = vld [vmem:[%s59 + $0x8] sm:$0xf]
      %v3867 = vld [vmem:[%s59 + $0xc] sm:$0xf]
      %v3868 = vpack.c.bf16 %v3863, %v3863
      %v3869 = vld [vmem:[%s57] sm:$0x1]
      %v3871 = vperm.slane %v3869, 0
      %v3877 = vunpack.c.l.b16 %v3864
      %v3878 = vunpack.c.l.b16 %v3865
      %v3879 = vunpack.c.l.b16 %v3866
      %v3880 = vunpack.c.l.b16 %v3867
      %v3881 = vpack.c.b16 %v3878, %v3877
      %v3882 = vpack.c.b16 %v3880, %v3879
      %v3886 = vsel %vm1072, %v3868, 0
      %3888 = vmatpush.bf16.msra.mxu0 0
      %3889 = vmatpush.bf16.msra.mxu0 0
      %3890 = vmatpush.bf16.msra.mxu0 0
      %3891 = vmatpush.bf16.msra.mxu0 0
      %3892 = vmatpush.bf16.msra.mxu0 0
      %3893 = vmatpush.bf16.msra.mxu0 0
      %3894 = vmatpush.bf16.msra.mxu0 %v3882
      %3895 = vmatpush.bf16.msra.mxu0 %v3881
      %3896 = vmatmul.bf16.gmra.mxu0 %v3886
      %v3897 = vpop.f32.mrf.mxu0
      %v3898 = vadd.f32 %v3871, %v3897
      %v3899 = vpop.f32.mrf.mxu0
      %3900 = vdwg.mxu0
      %v3902 = vrot.slane %v3898, 1
      %3903 = vrot.lane.b32.xlu0 %v3902, 64
      %v3904 = vpop.permute.xlu0 %3903
      %v3906 = vrot.slane %v3898, 2
      %v3908 = vrot.slane %v3898, 3
      %3909 = vrot.lane.b32.xlu0 %v3908, 64
      %v3910 = vpop.permute.xlu0 %3909
      %v3912 = vrot.slane %v3898, 4
      %v3914 = vrot.slane %v3898, 5
      %3915 = vrot.lane.b32.xlu0 %v3914, 64
      %v3916 = vpop.permute.xlu0 %3915
      %v3918 = vrot.slane %v3898, 6
      %v3920 = vrot.slane %v3898, 7
      %3921 = vrot.lane.b32.xlu0 %v3920, 64
      %v3922 = vpop.permute.xlu0 %3921
      %v3924 = vsel %vm1011, %v3898, %v3904
      %v3925 = vsel %vm1011, %v3906, %v3910
      %v3926 = vsel %vm1011, %v3912, %v3916
      %v3927 = vsel %vm1011, %v3918, %v3922
      %v3932 = vrot.slane %v3925, 7
      %v3933 = vrot.slane %v3926, 6
      %v3934 = vrot.slane %v3927, 5
      %vm3935 = vcmask 1040384
      %v3936 = vsel %vm3935, %v3924, %v3932
      %vm3937 = vcmask 1042434
      %v3938 = vsel %vm3937, %v3933, %v3934
      %vm3939 = vcmask 1041408
      %v3940 = vsel %vm3939, %v3936, %v3938
      %v3942 = vlaneseq
      %vm3943 = vcmp.ge.s32.totalorder %v3942, 0
      %vm3944 = vcmp.lt.s32.totalorder %v3942, 512
      %vm3945 = vmand %vm3943, %vm3944
      %3946 = vst.msk [vmem:[%s970] sm:$0xf] %vm3945, %v3940
      %p3947 = scmp.lt.s32.totalorder %s74, 1
      %s3948 = scalar_select %p3947, %s74, 1
      %s3949 = smul.addr %s3948, 4
      %s3950 = scalar_lea.vmem %s63, %s3949
      // Predicated region
      $region145: #{transformer_forecasting.1} parent=143 // pred_check
        %p3951 = pneg %p753
      $region146: #{transformer_forecasting.1} parent=143 // pred_check_branch
        %3953 = sbr.rel (%p3951) target = $region148
      $region147: #{transformer_forecasting.1} parent=143 // pred_region
        _
      $region148: #{transformer_forecasting.1} parent=143 // pred_fallthru
        _
    $region144: #{transformer_forecasting.1} parent=5 // pred_fallthru
      _
    %p3954 = scmp.le.s32.totalorder 2, %s69
    // Predicated region
    $region149: #{transformer_forecasting.1} parent=5 // pred_check
      %p3955 = pneg %p3954
    $region150: #{transformer_forecasting.1} parent=5 // pred_check_branch
      %3957 = sbr.rel (%p3955) target = $region152
    $region151: #{transformer_forecasting.1} parent=5 // pred_region
      %s3958 = ssub.s32 %s69, 2
      // Predicated region
      $region153: #{transformer_forecasting.1} parent=151 // pred_check
        %p3959 = pneg %p759
      $region154: #{transformer_forecasting.1} parent=151 // pred_check_branch
        %3961 = sbr.rel (%p3959) target = $region156
      $region155: #{transformer_forecasting.1} parent=151 // pred_region
        %p3962 = scmp.lt.s32.totalorder %s75, 1
        %s3963 = scalar_select %p3962, %s75, 1
        %s3964 = smul.addr %s3963, 4
        %s3965 = scalar_lea.vmem %s63, %s3964
      $region156: #{transformer_forecasting.1} parent=151 // pred_fallthru
        _
    $region152: #{transformer_forecasting.1} parent=5 // pred_fallthru
      _
  $region6: #{transformer_forecasting.1} parent=0 // loop_footer
    %s73 = sadd.s32 1, %s69
  $region7: #{transformer_forecasting.1} parent=0 // loop_footer_branch
    %68 = sbr.rel target = $region3
  $region8: #{transformer_forecasting.1} parent=0 // loop_exit
    _

</llo_original>
